<compile_context>
chip_gen: v7x
topology: tpu7x:2x2x1
jax: 0.10.0
libtpu: 0.0.40
codegen_flags: <defaults>
</compile_context>

<pallas_src>
import functools
import math

import numpy as np
import jax
import jax.numpy as jnp
from jax.experimental import pallas as pl
from jax.experimental.pallas import tpu as pltpu  # noqa: F401  (TPU backend)

# ---- "DENOISE" config (small synthetic sizes) --------------------------------
DIM = 32            # DENOISE.dim
NHEAD = 4           # DENOISE.nhead
NUM_DECODER = 2     # DENOISE.num_decoder
MINI_POINT = 16     # DENOISE.mini_point (== N: query_embed + feature requires it)
BATCH = 2
N_POINTS = MINI_POINT
FFN = 4 * DIM
LN_EPS = 1e-5       # PyTorch nn.LayerNorm default

# ---- packed-slab layout (plain Python ints shared by packer and kernel) ------
# W32 slab: (DIM, W32_COLS), per decoder layer 12*D columns, coord_w1 at the tail.
COLS_PER_LAYER = 12 * DIM
C_SELF_WQK = 0              # width 2D : [wq*scale | wk]
C_SELF_WV = 2 * DIM         # width D
C_SELF_WO = 3 * DIM         # width D
C_CROSS_WQ = 4 * DIM        # width D   (wq*scale)
C_CROSS_WKV = 5 * DIM       # width 2D : [wk | wv]
C_CROSS_WO = 7 * DIM        # width D
C_FFN_W1 = 8 * DIM          # width 4D
COL_COORD_W1 = NUM_DECODER * COLS_PER_LAYER
W32_COLS = COL_COORD_W1 + 64

W64_COLS = 128 + 3                    # [enc_w2 (64,128) | coord_w2 (64,3)]
W128_COLS = DIM * (1 + NUM_DECODER)   # [enc_w3 (128,32) | ffn_w2 L0 | ffn_w2 L1]

# bias/vector slab: (B_ROWS, 128), one vector per row (left aligned, zero padded)
ROW_ENC_B1 = 0
ROW_ENC_B2 = 1
ROW_ENC_B3 = 2
ROW_ENC_W1 = 3                        # 3 rows  (enc_w1 is (3,64))
ROW_NOISE = ROW_ENC_W1 + 3            # MINI_POINT rows (extra_noise (16,32))
ROW_LAYER0 = ROW_NOISE + MINI_POINT
ROWS_PER_LAYER = 14
R_SELF_BQK, R_SELF_BV, R_SELF_BO = 0, 1, 2
R_CROSS_BQ, R_CROSS_BKV, R_CROSS_BO = 3, 4, 5
R_FFN_B1, R_FFN_B2 = 6, 7
R_NORM1_G, R_NORM1_B = 8, 9
R_NORM2_G, R_NORM2_B = 10, 11
R_NORM3_G, R_NORM3_B = 12, 13
ROW_DEC_NORM_G = ROW_LAYER0 + NUM_DECODER * ROWS_PER_LAYER
ROW_DEC_NORM_B = ROW_DEC_NORM_G + 1
ROW_COORD_B1 = ROW_DEC_NORM_B + 1
ROW_COORD_B2 = ROW_COORD_B1 + 1
B_ROWS = ((ROW_COORD_B2 + 1 + 7) // 8) * 8


# ============================ fused forward kernel ============================

def _fused_kernel(x_ref, w32_ref, w64_ref, w128_ref, b_ref, out_ref, *,
                  B, N, D, H, FF, L):
    f32 = jnp.float32
    bf16 = jnp.bfloat16
    Dh = D // H
    BN = B * N

    def brow(r, w=None):                     # (1, w) bias / norm-param row
        w = D if w is None else w
        return b_ref[r:r + 1, 0:w]

    def mm(x, w):                            # bf16-operand MXU matmul, f32 accumulate
        return jnp.dot(x.astype(bf16), w.astype(bf16), preferred_element_type=f32)

    def ln(x, g, b):                         # LayerNorm, f32 elementwise
        mu = jnp.mean(x, axis=-1, keepdims=True)
        xc = x - mu
        var = jnp.mean(xc * xc, axis=-1, keepdims=True)
        return xc * jax.lax.rsqrt(var + LN_EPS) * g + b

    # Per-head lane masks, computed ONCE and reused by every attention block.
    lane = jax.lax.broadcasted_iota(jnp.int32, (1, D), 1)
    head_mask = [((lane >= h * Dh) & (lane < (h + 1) * Dh)).astype(f32)
                 for h in range(H)]

    def attention(q2, k2, v2, wo, bo):
        # q2/k2/v2: (BN, D); 1/sqrt(Dh) already folded into the q projection.
        q3 = q2.reshape(B, N, D)
        k3 = k2.reshape(B, N, D)
        v3 = v2.reshape(B, N, D)
        # Per-head masked K/V concatenated along the key axis -> ONE matmul
        # computes every head's scores / context; heads stay in their contiguous
        # lane slices, so no per-head matmuls and no 4-D transposes.
        kcat = jnp.concatenate([k3 * m for m in head_mask], axis=1)     # (B, H*N, D)
        vcat = jnp.concatenate([v3 * m for m in head_mask], axis=1)     # (B, H*N, D)
        s = jnp.einsum('bqd,bkd->bqk', q3.astype(bf16), kcat.astype(bf16),
                       preferred_element_type=f32)                      # (B, N, H*N)
        # Global max shift is a valid (stable) shift for every head segment.
        s = s - jnp.max(s, axis=-1, keepdims=True)
        p = jnp.exp(s)
        # Per-head denominators broadcast onto that head's output lanes.
        inv = jnp.concatenate(
            [jnp.broadcast_to(
                pl.reciprocal(jnp.sum(p[:, :, h * N:(h + 1) * N], axis=-1,
                                      keepdims=True), approx=True),
                (B, N, Dh))
             for h in range(H)], axis=-1)                               # (B, N, D)
        o = jnp.einsum('bqk,bkd->bqd', p.astype(bf16), vcat.astype(bf16),
                       preferred_element_type=f32)                      # (B, N, D)
        o = (o * inv).reshape(BN, D)
        return mm(o, wo) + bo                                           # one out-proj

    # ---- pts_encoder (PointNetEncoder_0): shared per-point MLP 3 -> 64 -> 128 -> D
    # TODO(synk): exact PointNetEncoder_0 architecture (BN / global pooling) is not
    # defined in the snippet; approximated as a 3-layer shared point-wise MLP.
    x = x_ref[...]                                                      # (BN, 3)
    h = jnp.maximum(mm(x, b_ref[ROW_ENC_W1:ROW_ENC_W1 + 3, 0:64])
                    + brow(ROW_ENC_B1, 64), 0.0)
    h = jnp.maximum(mm(h, w64_ref[:, 0:128]) + brow(ROW_ENC_B2, 128), 0.0)
    feat = mm(h, w128_ref[:, 0:D]) + brow(ROW_ENC_B3, D)                # (BN, D)

    # query_pos = extra_noise (broadcast over batch) + encoder feature
    noise = b_ref[ROW_NOISE:ROW_NOISE + N, 0:D]                         # (N, D)
    qpos = (feat.reshape(B, N, D) + noise[None, :, :]).reshape(BN, D)

    mem = feat
    tgt = feat
    for li in range(L):
        c = li * COLS_PER_LAYER
        r = ROW_LAYER0 + li * ROWS_PER_LAYER

        # ---- self-attention (pre-norm): q = k = norm1(tgt)+qpos, v = norm1(tgt)
        t2 = ln(tgt, brow(r + R_NORM1_G), brow(r + R_NORM1_B))
        xqk = t2 + qpos
        qk = mm(xqk, w32_ref[:, c + C_SELF_WQK:c + C_SELF_WQK + 2 * D]) \
            + brow(r + R_SELF_BQK, 2 * D)
        v = mm(t2, w32_ref[:, c + C_SELF_WV:c + C_SELF_WV + D]) + brow(r + R_SELF_BV, D)
        tgt = tgt + attention(qk[:, :D], qk[:, D:], v,
                              w32_ref[:, c + C_SELF_WO:c + C_SELF_WO + D],
                              brow(r + R_SELF_BO, D))

        # ---- cross-attention: q = norm2(tgt)+qpos, k = v = memory (pos=None)
        t2 = ln(tgt, brow(r + R_NORM2_G), brow(r + R_NORM2_B))
        q = mm(t2 + qpos, w32_ref[:, c + C_CROSS_WQ:c + C_CROSS_WQ + D]) \
            + brow(r + R_CROSS_BQ, D)
        kv = mm(mem, w32_ref[:, c + C_CROSS_WKV:c + C_CROSS_WKV + 2 * D]) \
            + brow(r + R_CROSS_BKV, 2 * D)
        tgt = tgt + attention(q, kv[:, :D], kv[:, D:],
                              w32_ref[:, c + C_CROSS_WO:c + C_CROSS_WO + D],
                              brow(r + R_CROSS_BO, D))

        # ---- feed-forward (relu)
        t2 = ln(tgt, brow(r + R_NORM3_G), brow(r + R_NORM3_B))
        hf = jnp.maximum(mm(t2, w32_ref[:, c + C_FFN_W1:c + C_FFN_W1 + FF])
                         + brow(r + R_FFN_B1, FF), 0.0)
        hf = mm(hf, w128_ref[:, D + li * D:2 * D + li * D]) + brow(r + R_FFN_B2, D)
        tgt = tgt + hf

    # decoder_norm applied to the last decoder output (features[-1])
    fo = ln(tgt, brow(ROW_DEC_NORM_G), brow(ROW_DEC_NORM_B))

    # coord_layer: Conv1d(D,64,1) + ReLU + Conv1d(64,3,1)  (pointwise conv == linear)
    ch = jnp.maximum(mm(fo, w32_ref[:, COL_COORD_W1:COL_COORD_W1 + 64])
                     + brow(ROW_COORD_B1, 64), 0.0)
    coord = mm(ch, w64_ref[:, 128:131]) + brow(ROW_COORD_B2, 3)         # (BN, 3)

    # TODO(synk): training branch (gt / edge losses, distance_point2edge_tensor)
    # is not implemented; this reproduces the gt=None inference path.
    out_ref[...] = coord.astype(out_ref.dtype)


def point_denoising_forward(xyz, packed):
    """xyz: (B, 3, N) float32 (PyTorch NCW).  Returns coord: (B, 3, N)."""
    w32, w64, w128, bsl = packed
    B, C, N = xyz.shape
    x2d = xyz.transpose(0, 2, 1).reshape(B * N, C)      # lane-dense per-point rows
    coord2d = pl.pallas_call(
        functools.partial(_fused_kernel, B=B, N=N, D=DIM, H=NHEAD, FF=FFN,
                          L=NUM_DECODER),
        out_shape=jax.ShapeDtypeStruct((B * N, 3), jnp.float32),
    )(x2d, w32, w64, w128, bsl)
    return coord2d.reshape(B, N, 3).transpose(0, 2, 1)  # back to (B, 3, N) NCW


# ============================ Parameter init / packing ========================

def _xavier(key, shape):
    fan_in, fan_out = shape
    bound = math.sqrt(6.0 / (fan_in + fan_out))
    return jax.random.uniform(key, shape, jnp.float32, -bound, bound)


def init_params(key):
    """Structured params (PyTorch-like).  Note: weights stored as (in, out);
    PyTorch MHA in_proj is (3D, D) applied as x @ W.T -> transpose when importing
    real checkpoints."""
    D, FF = DIM, FFN
    keys = iter(jax.random.split(key, 40))
    p = {}
    p['enc_w1'] = _xavier(next(keys), (3, 64));    p['enc_b1'] = jnp.zeros((64,), jnp.float32)
    p['enc_w2'] = _xavier(next(keys), (64, 128));  p['enc_b2'] = jnp.zeros((128,), jnp.float32)
    p['enc_w3'] = _xavier(next(keys), (128, D));   p['enc_b3'] = jnp.zeros((D,), jnp.float32)
    p['extra_noise'] = 0.1 * jax.random.normal(next(keys), (MINI_POINT, D), jnp.float32)

    layers = []
    for _ in range(NUM_DECODER):
        lp = {}
        for nm in ('self', 'cross'):
            for w in ('wq', 'wk', 'wv', 'wo'):
                lp[f'{nm}_{w}'] = _xavier(next(keys), (D, D))
            for b in ('bq', 'bk', 'bv', 'bo'):
                lp[f'{nm}_{b}'] = jnp.zeros((D,), jnp.float32)
        lp['ffn_w1'] = _xavier(next(keys), (D, FF)); lp['ffn_b1'] = jnp.zeros((FF,), jnp.float32)
        lp['ffn_w2'] = _xavier(next(keys), (FF, D)); lp['ffn_b2'] = jnp.zeros((D,), jnp.float32)
        for i in (1, 2, 3):
            lp[f'norm{i}_g'] = jnp.ones((D,), jnp.float32)
            lp[f'norm{i}_b'] = jnp.zeros((D,), jnp.float32)
        layers.append(lp)
    p['decoder_layers'] = layers

    p['decoder_norm_g'] = jnp.ones((D,), jnp.float32)
    p['decoder_norm_b'] = jnp.zeros((D,), jnp.float32)
    p['coord_w1'] = _xavier(next(keys), (D, 64)); p['coord_b1'] = jnp.zeros((64,), jnp.float32)
    p['coord_w2'] = _xavier(next(keys), (64, 3)); p['coord_b2'] = jnp.zeros((3,), jnp.float32)
    return p


def pack_params(p):
    """Pack all parameters into 4 lane-dense f32 slabs (one DMA each).
    The 1/sqrt(Dh) softmax scale is folded into every q projection here."""
    D, FF = DIM, FFN
    scale = 1.0 / math.sqrt(D // NHEAD)

    w32 = np.zeros((D, W32_COLS), np.float32)
    w64 = np.zeros((64, W64_COLS), np.float32)
    w128 = np.zeros((128, W128_COLS), np.float32)
    bsl = np.zeros((B_ROWS, 128), np.float32)

    def setrow(r, vec):
        v = np.asarray(vec, np.float32).reshape(-1)
        bsl[r, :v.size] = v

    # encoder / head / globals
    w64[:, 0:128] = np.asarray(p['enc_w2'])
    w64[:, 128:131] = np.asarray(p['coord_w2'])
    w128[:, 0:D] = np.asarray(p['enc_w3'])
    w32[:, COL_COORD_W1:COL_COORD_W1 + 64] = np.asarray(p['coord_w1'])
    setrow(ROW_ENC_B1, p['enc_b1']); setrow(ROW_ENC_B2, p['enc_b2']); setrow(ROW_ENC_B3, p['enc_b3'])
    bsl[ROW_ENC_W1:ROW_ENC_W1 + 3, 0:64] = np.asarray(p['enc_w1'])
    bsl[ROW_NOISE:ROW_NOISE + MINI_POINT, 0:D] = np.asarray(p['extra_noise'])
    setrow(ROW_DEC_NORM_G, p['decoder_norm_g']); setrow(ROW_DEC_NORM_B, p['decoder_norm_b'])
    setrow(ROW_COORD_B1, p['coord_b1']); setrow(ROW_COORD_B2, p['coord_b2'])

    # decoder layers
    for li, lp in enumerate(p['decoder_layers']):
        c = li * COLS_PER_LAYER
        r = ROW_LAYER0 + li * ROWS_PER_LAYER
        w32[:, c + C_SELF_WQK:c + C_SELF_WQK + D] = np.asarray(lp['self_wq']) * scale
        w32[:, c + C_SELF_WQK + D:c + C_SELF_WQK + 2 * D] = np.asarray(lp['self_wk'])
        w32[:, c + C_SELF_WV:c + C_SELF_WV + D] = np.asarray(lp['self_wv'])
        w32[:, c + C_SELF_WO:c + C_SELF_WO + D] = np.asarray(lp['self_wo'])
        w32[:, c + C_CROSS_WQ:c + C_CROSS_WQ + D] = np.asarray(lp['cross_wq']) * scale
        w32[:, c + C_CROSS_WKV:c + C_CROSS_WKV + D] = np.asarray(lp['cross_wk'])
        w32[:, c + C_CROSS_WKV + D:c + C_CROSS_WKV + 2 * D] = np.asarray(lp['cross_wv'])
        w32[:, c + C_CROSS_WO:c + C_CROSS_WO + D] = np.asarray(lp['cross_wo'])
        w32[:, c + C_FFN_W1:c + C_FFN_W1 + FF] = np.asarray(lp['ffn_w1'])
        w128[:, D + li * D:2 * D + li * D] = np.asarray(lp['ffn_w2'])

        setrow(r + R_SELF_BQK, np.concatenate([np.asarray(lp['self_bq']) * scale,
                                               np.asarray(lp['self_bk'])]))
        setrow(r + R_SELF_BV, lp['self_bv']); setrow(r + R_SELF_BO, lp['self_bo'])
        setrow(r + R_CROSS_BQ, np.asarray(lp['cross_bq']) * scale)
        setrow(r + R_CROSS_BKV, np.concatenate([np.asarray(lp['cross_bk']),
                                                np.asarray(lp['cross_bv'])]))
        setrow(r + R_CROSS_BO, lp['cross_bo'])
        setrow(r + R_FFN_B1, lp['ffn_b1']); setrow(r + R_FFN_B2, lp['ffn_b2'])
        setrow(r + R_NORM1_G, lp['norm1_g']); setrow(r + R_NORM1_B, lp['norm1_b'])
        setrow(r + R_NORM2_G, lp['norm2_g']); setrow(r + R_NORM2_B, lp['norm2_b'])
        setrow(r + R_NORM3_G, lp['norm3_g']); setrow(r + R_NORM3_B, lp['norm3_b'])

    return (jnp.asarray(w32), jnp.asarray(w64), jnp.asarray(w128), jnp.asarray(bsl))


# ================================== main ======================================

if __name__ == "__main__":
    key = jax.random.PRNGKey(0)
    k_param, k_input = jax.random.split(key)
    params = init_params(k_param)
    packed = pack_params(params)
    xyz = jax.random.normal(k_input, (BATCH, 3, N_POINTS), jnp.float32)

    coord = jax.jit(point_denoising_forward)(xyz, packed)
    coord = jax.block_until_ready(coord)

    assert coord.shape == (BATCH, 3, N_POINTS), coord.shape
    assert bool(jnp.all(jnp.isfinite(coord)))
    print("KERNEL_OK")
</pallas_src>

<mosaic_0001>
module attributes {stable_mosaic.version = 11 : i64} {
  func.func @_fused_kernel(%arg0: memref<32x3xf32, #tpu.memory_space<vmem>>, %arg1: memref<32x832xf32, #tpu.memory_space<vmem>>, %arg2: memref<64x131xf32, #tpu.memory_space<vmem>>, %arg3: memref<128x96xf32, #tpu.memory_space<vmem>>, %arg4: memref<56x128xf32, #tpu.memory_space<vmem>>, %arg5: memref<32x3xf32, #tpu.memory_space<vmem>>) attributes {dimension_semantics = [], scalar_prefetch = 0 : i64, scratch_operands = 0 : i64, tpu.core_type = #tpu.core_type<tc>} {
    %0 = tpu.iota {dimensions = array<i32: 1>} : vector<1x32xi32>
    %c0_i32 = arith.constant 0 : i32
    %1 = vector.broadcast %c0_i32 : i32 to vector<1x32xi32>
    %2 = arith.cmpi sge, %0, %1 : vector<1x32xi32>
    %c8_i32 = arith.constant 8 : i32
    %3 = vector.broadcast %c8_i32 : i32 to vector<1x32xi32>
    %4 = arith.cmpi slt, %0, %3 : vector<1x32xi32>
    %5 = arith.andi %2, %4 : vector<1x32xi1>
    %6 = arith.extui %5 : vector<1x32xi1> to vector<1x32xi32>
    %7 = arith.sitofp %6 : vector<1x32xi32> to vector<1x32xf32>
    %c8_i32_0 = arith.constant 8 : i32
    %8 = vector.broadcast %c8_i32_0 : i32 to vector<1x32xi32>
    %9 = arith.cmpi sge, %0, %8 : vector<1x32xi32>
    %c16_i32 = arith.constant 16 : i32
    %10 = vector.broadcast %c16_i32 : i32 to vector<1x32xi32>
    %11 = arith.cmpi slt, %0, %10 : vector<1x32xi32>
    %12 = arith.andi %9, %11 : vector<1x32xi1>
    %13 = arith.extui %12 : vector<1x32xi1> to vector<1x32xi32>
    %14 = arith.sitofp %13 : vector<1x32xi32> to vector<1x32xf32>
    %c16_i32_1 = arith.constant 16 : i32
    %15 = vector.broadcast %c16_i32_1 : i32 to vector<1x32xi32>
    %16 = arith.cmpi sge, %0, %15 : vector<1x32xi32>
    %c24_i32 = arith.constant 24 : i32
    %17 = vector.broadcast %c24_i32 : i32 to vector<1x32xi32>
    %18 = arith.cmpi slt, %0, %17 : vector<1x32xi32>
    %19 = arith.andi %16, %18 : vector<1x32xi1>
    %20 = arith.extui %19 : vector<1x32xi1> to vector<1x32xi32>
    %21 = arith.sitofp %20 : vector<1x32xi32> to vector<1x32xf32>
    %c24_i32_2 = arith.constant 24 : i32
    %22 = vector.broadcast %c24_i32_2 : i32 to vector<1x32xi32>
    %23 = arith.cmpi sge, %0, %22 : vector<1x32xi32>
    %c32_i32 = arith.constant 32 : i32
    %24 = vector.broadcast %c32_i32 : i32 to vector<1x32xi32>
    %25 = arith.cmpi slt, %0, %24 : vector<1x32xi32>
    %26 = arith.andi %23, %25 : vector<1x32xi1>
    %27 = arith.extui %26 : vector<1x32xi1> to vector<1x32xi32>
    %28 = arith.sitofp %27 : vector<1x32xi32> to vector<1x32xf32>
    %c0 = arith.constant 0 : index
    %c0_3 = arith.constant 0 : index
    %29 = vector.load %arg0[%c0, %c0_3] : memref<32x3xf32, #tpu.memory_space<vmem>>, vector<32x3xf32>
    %c3 = arith.constant 3 : index
    %c0_4 = arith.constant 0 : index
    %30 = vector.load %arg4[%c3, %c0_4] : memref<56x128xf32, #tpu.memory_space<vmem>>, vector<3x64xf32>
    %31 = arith.truncf %29 : vector<32x3xf32> to vector<32x3xbf16>
    %32 = arith.truncf %30 : vector<3x64xf32> to vector<3x64xbf16>
    %cst = arith.constant dense<0.000000e+00> : vector<32x64xf32>
    %33 = tpu.matmul %31, %32, %cst {dimension_numbers = #tpu.dot_dimension_numbers<[1], [0], [0], [1], [0, 0, 1, 1], [], []>} : vector<32x3xbf16>, vector<3x64xbf16>, vector<32x64xf32> -> vector<32x64xf32>
    %c0_5 = arith.constant 0 : index
    %c0_6 = arith.constant 0 : index
    %34 = vector.load %arg4[%c0_5, %c0_6] : memref<56x128xf32, #tpu.memory_space<vmem>>, vector<1x64xf32>
    %35 = vector.broadcast %34 : vector<1x64xf32> to vector<32x64xf32>
    %36 = arith.addf %33, %35 : vector<32x64xf32>
    %cst_7 = arith.constant 0.000000e+00 : f32
    %37 = vector.broadcast %cst_7 : f32 to vector<32x64xf32>
    %38 = arith.maximumf %36, %37 : vector<32x64xf32>
    %c0_8 = arith.constant 0 : index
    %c0_9 = arith.constant 0 : index
    %39 = vector.load %arg2[%c0_8, %c0_9] : memref<64x131xf32, #tpu.memory_space<vmem>>, vector<64x128xf32>
    %40 = arith.truncf %38 : vector<32x64xf32> to vector<32x64xbf16>
    %41 = arith.truncf %39 : vector<64x128xf32> to vector<64x128xbf16>
    %cst_10 = arith.constant dense<0.000000e+00> : vector<32x128xf32>
    %42 = tpu.matmul %40, %41, %cst_10 {dimension_numbers = #tpu.dot_dimension_numbers<[1], [0], [0], [1], [0, 0, 1, 1], [], []>} : vector<32x64xbf16>, vector<64x128xbf16>, vector<32x128xf32> -> vector<32x128xf32>
    %c1 = arith.constant 1 : index
    %c0_11 = arith.constant 0 : index
    %43 = vector.load %arg4[%c1, %c0_11] : memref<56x128xf32, #tpu.memory_space<vmem>>, vector<1x128xf32>
    %44 = vector.broadcast %43 : vector<1x128xf32> to vector<32x128xf32>
    %45 = arith.addf %42, %44 : vector<32x128xf32>
    %cst_12 = arith.constant 0.000000e+00 : f32
    %46 = vector.broadcast %cst_12 : f32 to vector<32x128xf32>
    %47 = arith.maximumf %45, %46 : vector<32x128xf32>
    %c0_13 = arith.constant 0 : index
    %c0_14 = arith.constant 0 : index
    %48 = vector.load %arg3[%c0_13, %c0_14] : memref<128x96xf32, #tpu.memory_space<vmem>>, vector<128x32xf32>
    %49 = arith.truncf %47 : vector<32x128xf32> to vector<32x128xbf16>
    %50 = arith.truncf %48 : vector<128x32xf32> to vector<128x32xbf16>
    %cst_15 = arith.constant dense<0.000000e+00> : vector<32x32xf32>
    %51 = tpu.matmul %49, %50, %cst_15 {dimension_numbers = #tpu.dot_dimension_numbers<[1], [0], [0], [1], [0, 0, 1, 1], [], []>} : vector<32x128xbf16>, vector<128x32xbf16>, vector<32x32xf32> -> vector<32x32xf32>
    %c2 = arith.constant 2 : index
    %c0_16 = arith.constant 0 : index
    %52 = vector.load %arg4[%c2, %c0_16] : memref<56x128xf32, #tpu.memory_space<vmem>>, vector<1x32xf32>
    %53 = vector.broadcast %52 : vector<1x32xf32> to vector<32x32xf32>
    %54 = arith.addf %51, %53 : vector<32x32xf32>
    %c6 = arith.constant 6 : index
    %c0_17 = arith.constant 0 : index
    %55 = vector.load %arg4[%c6, %c0_17] : memref<56x128xf32, #tpu.memory_space<vmem>>, vector<16x32xf32>
    %56 = vector.shape_cast %54 : vector<32x32xf32> to vector<2x16x32xf32>
    %57 = vector.shape_cast %55 : vector<16x32xf32> to vector<1x16x32xf32>
    %58 = vector.broadcast %57 : vector<1x16x32xf32> to vector<2x16x32xf32>
    %59 = arith.addf %56, %58 : vector<2x16x32xf32>
    %60 = vector.shape_cast %59 : vector<2x16x32xf32> to vector<32x32xf32>
    %c30 = arith.constant 30 : index
    %c0_18 = arith.constant 0 : index
    %61 = vector.load %arg4[%c30, %c0_18] : memref<56x128xf32, #tpu.memory_space<vmem>>, vector<1x32xf32>
    %c31 = arith.constant 31 : index
    %c0_19 = arith.constant 0 : index
    %62 = vector.load %arg4[%c31, %c0_19] : memref<56x128xf32, #tpu.memory_space<vmem>>, vector<1x32xf32>
    %cst_20 = arith.constant dense<0.000000e+00> : vector<32xf32>
    %63 = vector.multi_reduction <add>, %54, %cst_20 [1] : vector<32x32xf32> to vector<32xf32>
    %64 = vector.shape_cast %63 : vector<32xf32> to vector<32x1xf32>
    %cst_21 = arith.constant 3.200000e+01 : f32
    %65 = vector.broadcast %cst_21 : f32 to vector<32x1xf32>
    %66 = arith.divf %64, %65 : vector<32x1xf32>
    %67 = vector.broadcast %66 : vector<32x1xf32> to vector<32x32xf32>
    %68 = arith.subf %54, %67 : vector<32x32xf32>
    %69 = arith.mulf %68, %68 : vector<32x32xf32>
    %cst_22 = arith.constant dense<0.000000e+00> : vector<32xf32>
    %70 = vector.multi_reduction <add>, %69, %cst_22 [1] : vector<32x32xf32> to vector<32xf32>
    %71 = vector.shape_cast %70 : vector<32xf32> to vector<32x1xf32>
    %cst_23 = arith.constant 3.200000e+01 : f32
    %72 = vector.broadcast %cst_23 : f32 to vector<32x1xf32>
    %73 = arith.divf %71, %72 : vector<32x1xf32>
    %cst_24 = arith.constant 9.99999974E-6 : f32
    %74 = vector.broadcast %cst_24 : f32 to vector<32x1xf32>
    %75 = arith.addf %73, %74 : vector<32x1xf32>
    %76 = math.rsqrt %75 : vector<32x1xf32>
    %77 = vector.broadcast %76 : vector<32x1xf32> to vector<32x32xf32>
    %78 = arith.mulf %68, %77 : vector<32x32xf32>
    %79 = vector.broadcast %61 : vector<1x32xf32> to vector<32x32xf32>
    %80 = arith.mulf %78, %79 : vector<32x32xf32>
    %81 = vector.broadcast %62 : vector<1x32xf32> to vector<32x32xf32>
    %82 = arith.addf %80, %81 : vector<32x32xf32>
    %83 = arith.addf %82, %60 : vector<32x32xf32>
    %c0_25 = arith.constant 0 : index
    %c0_26 = arith.constant 0 : index
    %84 = vector.load %arg1[%c0_25, %c0_26] : memref<32x832xf32, #tpu.memory_space<vmem>>, vector<32x64xf32>
    %85 = arith.truncf %83 : vector<32x32xf32> to vector<32x32xbf16>
    %86 = arith.truncf %84 : vector<32x64xf32> to vector<32x64xbf16>
    %cst_27 = arith.constant dense<0.000000e+00> : vector<32x64xf32>
    %87 = tpu.matmul %85, %86, %cst_27 {dimension_numbers = #tpu.dot_dimension_numbers<[1], [0], [0], [1], [0, 0, 1, 1], [], []>} : vector<32x32xbf16>, vector<32x64xbf16>, vector<32x64xf32> -> vector<32x64xf32>
    %c22 = arith.constant 22 : index
    %c0_28 = arith.constant 0 : index
    %88 = vector.load %arg4[%c22, %c0_28] : memref<56x128xf32, #tpu.memory_space<vmem>>, vector<1x64xf32>
    %89 = vector.broadcast %88 : vector<1x64xf32> to vector<32x64xf32>
    %90 = arith.addf %87, %89 : vector<32x64xf32>
    %c0_29 = arith.constant 0 : index
    %c64 = arith.constant 64 : index
    %91 = vector.load %arg1[%c0_29, %c64] : memref<32x832xf32, #tpu.memory_space<vmem>>, vector<32x32xf32>
    %92 = arith.truncf %82 : vector<32x32xf32> to vector<32x32xbf16>
    %93 = arith.truncf %91 : vector<32x32xf32> to vector<32x32xbf16>
    %cst_30 = arith.constant dense<0.000000e+00> : vector<32x32xf32>
    %94 = tpu.matmul %92, %93, %cst_30 {dimension_numbers = #tpu.dot_dimension_numbers<[1], [0], [0], [1], [0, 0, 1, 1], [], []>} : vector<32x32xbf16>, vector<32x32xbf16>, vector<32x32xf32> -> vector<32x32xf32>
    %c23 = arith.constant 23 : index
    %c0_31 = arith.constant 0 : index
    %95 = vector.load %arg4[%c23, %c0_31] : memref<56x128xf32, #tpu.memory_space<vmem>>, vector<1x32xf32>
    %96 = vector.broadcast %95 : vector<1x32xf32> to vector<32x32xf32>
    %97 = arith.addf %94, %96 : vector<32x32xf32>
    %98 = vector.extract_strided_slice %90 {offsets = [0, 0], sizes = [32, 32], strides = [1, 1]} : vector<32x64xf32> to vector<32x32xf32>
    %99 = vector.extract_strided_slice %90 {offsets = [0, 32], sizes = [32, 32], strides = [1, 1]} : vector<32x64xf32> to vector<32x32xf32>
    %c0_32 = arith.constant 0 : index
    %c96 = arith.constant 96 : index
    %100 = vector.load %arg1[%c0_32, %c96] : memref<32x832xf32, #tpu.memory_space<vmem>>, vector<32x32xf32>
    %c24 = arith.constant 24 : index
    %c0_33 = arith.constant 0 : index
    %101 = vector.load %arg4[%c24, %c0_33] : memref<56x128xf32, #tpu.memory_space<vmem>>, vector<1x32xf32>
    %102 = vector.shape_cast %98 : vector<32x32xf32> to vector<2x16x32xf32>
    %103 = vector.shape_cast %99 : vector<32x32xf32> to vector<2x16x32xf32>
    %104 = vector.shape_cast %97 : vector<32x32xf32> to vector<2x16x32xf32>
    %105 = vector.shape_cast %7 : vector<1x32xf32> to vector<1x1x32xf32>
    %106 = vector.broadcast %105 : vector<1x1x32xf32> to vector<2x16x32xf32>
    %107 = arith.mulf %103, %106 : vector<2x16x32xf32>
    %108 = vector.shape_cast %14 : vector<1x32xf32> to vector<1x1x32xf32>
    %109 = vector.broadcast %108 : vector<1x1x32xf32> to vector<2x16x32xf32>
    %110 = arith.mulf %103, %109 : vector<2x16x32xf32>
    %111 = vector.shape_cast %21 : vector<1x32xf32> to vector<1x1x32xf32>
    %112 = vector.broadcast %111 : vector<1x1x32xf32> to vector<2x16x32xf32>
    %113 = arith.mulf %103, %112 : vector<2x16x32xf32>
    %114 = vector.shape_cast %28 : vector<1x32xf32> to vector<1x1x32xf32>
    %115 = vector.broadcast %114 : vector<1x1x32xf32> to vector<2x16x32xf32>
    %116 = arith.mulf %103, %115 : vector<2x16x32xf32>
    %117 = tpu.concatenate %107, %110, %113, %116 in 1 : vector<2x16x32xf32>, vector<2x16x32xf32>, vector<2x16x32xf32>, vector<2x16x32xf32> -> vector<2x64x32xf32>
    %118 = vector.shape_cast %7 : vector<1x32xf32> to vector<1x1x32xf32>
    %119 = vector.broadcast %118 : vector<1x1x32xf32> to vector<2x16x32xf32>
    %120 = arith.mulf %104, %119 : vector<2x16x32xf32>
    %121 = vector.shape_cast %14 : vector<1x32xf32> to vector<1x1x32xf32>
    %122 = vector.broadcast %121 : vector<1x1x32xf32> to vector<2x16x32xf32>
    %123 = arith.mulf %104, %122 : vector<2x16x32xf32>
    %124 = vector.shape_cast %21 : vector<1x32xf32> to vector<1x1x32xf32>
    %125 = vector.broadcast %124 : vector<1x1x32xf32> to vector<2x16x32xf32>
    %126 = arith.mulf %104, %125 : vector<2x16x32xf32>
    %127 = vector.shape_cast %28 : vector<1x32xf32> to vector<1x1x32xf32>
    %128 = vector.broadcast %127 : vector<1x1x32xf32> to vector<2x16x32xf32>
    %129 = arith.mulf %104, %128 : vector<2x16x32xf32>
    %130 = tpu.concatenate %120, %123, %126, %129 in 1 : vector<2x16x32xf32>, vector<2x16x32xf32>, vector<2x16x32xf32>, vector<2x16x32xf32> -> vector<2x64x32xf32>
    %131 = arith.truncf %102 : vector<2x16x32xf32> to vector<2x16x32xbf16>
    %132 = arith.truncf %117 : vector<2x64x32xf32> to vector<2x64x32xbf16>
    "tpu.trace_start"() <{level = 10 : i32, message = "bqd,bkd->bqk"}> : () -> ()
    %cst_34 = arith.constant dense<0.000000e+00> : vector<2x16x64xf32>
    %133 = tpu.matmul %131, %132, %cst_34 {dimension_numbers = #tpu.dot_dimension_numbers<[2], [2], [1], [1], [0, 0, 0, 1, 1, 1], [0], [0]>} : vector<2x16x32xbf16>, vector<2x64x32xbf16>, vector<2x16x64xf32> -> vector<2x16x64xf32>
    "tpu.trace_stop"() : () -> ()
    %cst_35 = arith.constant dense<0xFF800000> : vector<2x16xf32>
    %134 = vector.multi_reduction <maximumf>, %133, %cst_35 [2] : vector<2x16x64xf32> to vector<2x16xf32>
    %135 = vector.shape_cast %134 : vector<2x16xf32> to vector<2x16x1xf32>
    %136 = vector.broadcast %135 : vector<2x16x1xf32> to vector<2x16x64xf32>
    %137 = arith.subf %133, %136 : vector<2x16x64xf32>
    %138 = math.exp %137 : vector<2x16x64xf32>
    %139 = vector.extract_strided_slice %138 {offsets = [0, 0, 0], sizes = [2, 16, 16], strides = [1, 1, 1]} : vector<2x16x64xf32> to vector<2x16x16xf32>
    %cst_36 = arith.constant dense<0.000000e+00> : vector<2x16xf32>
    %140 = vector.multi_reduction <add>, %139, %cst_36 [2] : vector<2x16x16xf32> to vector<2x16xf32>
    %141 = vector.shape_cast %140 : vector<2x16xf32> to vector<2x16x1xf32>
    %142 = tpu.reciprocal %141 {approx = true} : vector<2x16x1xf32> -> vector<2x16x1xf32>
    %143 = vector.shape_cast %142 : vector<2x16x1xf32> to vector<2x16x1xf32>
    %144 = vector.broadcast %143 : vector<2x16x1xf32> to vector<2x16x8xf32>
    %145 = vector.extract_strided_slice %138 {offsets = [0, 0, 16], sizes = [2, 16, 16], strides = [1, 1, 1]} : vector<2x16x64xf32> to vector<2x16x16xf32>
    %cst_37 = arith.constant dense<0.000000e+00> : vector<2x16xf32>
    %146 = vector.multi_reduction <add>, %145, %cst_37 [2] : vector<2x16x16xf32> to vector<2x16xf32>
    %147 = vector.shape_cast %146 : vector<2x16xf32> to vector<2x16x1xf32>
    %148 = tpu.reciprocal %147 {approx = true} : vector<2x16x1xf32> -> vector<2x16x1xf32>
    %149 = vector.shape_cast %148 : vector<2x16x1xf32> to vector<2x16x1xf32>
    %150 = vector.broadcast %149 : vector<2x16x1xf32> to vector<2x16x8xf32>
    %151 = vector.extract_strided_slice %138 {offsets = [0, 0, 32], sizes = [2, 16, 16], strides = [1, 1, 1]} : vector<2x16x64xf32> to vector<2x16x16xf32>
    %cst_38 = arith.constant dense<0.000000e+00> : vector<2x16xf32>
    %152 = vector.multi_reduction <add>, %151, %cst_38 [2] : vector<2x16x16xf32> to vector<2x16xf32>
    %153 = vector.shape_cast %152 : vector<2x16xf32> to vector<2x16x1xf32>
    %154 = tpu.reciprocal %153 {approx = true} : vector<2x16x1xf32> -> vector<2x16x1xf32>
    %155 = vector.shape_cast %154 : vector<2x16x1xf32> to vector<2x16x1xf32>
    %156 = vector.broadcast %155 : vector<2x16x1xf32> to vector<2x16x8xf32>
    %157 = vector.extract_strided_slice %138 {offsets = [0, 0, 48], sizes = [2, 16, 16], strides = [1, 1, 1]} : vector<2x16x64xf32> to vector<2x16x16xf32>
    %cst_39 = arith.constant dense<0.000000e+00> : vector<2x16xf32>
    %158 = vector.multi_reduction <add>, %157, %cst_39 [2] : vector<2x16x16xf32> to vector<2x16xf32>
    %159 = vector.shape_cast %158 : vector<2x16xf32> to vector<2x16x1xf32>
    %160 = tpu.reciprocal %159 {approx = true} : vector<2x16x1xf32> -> vector<2x16x1xf32>
    %161 = vector.shape_cast %160 : vector<2x16x1xf32> to vector<2x16x1xf32>
    %162 = vector.broadcast %161 : vector<2x16x1xf32> to vector<2x16x8xf32>
    %163 = tpu.concatenate %144, %150, %156, %162 in 2 : vector<2x16x8xf32>, vector<2x16x8xf32>, vector<2x16x8xf32>, vector<2x16x8xf32> -> vector<2x16x32xf32>
    %164 = arith.truncf %138 : vector<2x16x64xf32> to vector<2x16x64xbf16>
    %165 = arith.truncf %130 : vector<2x64x32xf32> to vector<2x64x32xbf16>
    "tpu.trace_start"() <{level = 10 : i32, message = "bqk,bkd->bqd"}> : () -> ()
    %cst_40 = arith.constant dense<0.000000e+00> : vector<2x16x32xf32>
    %166 = tpu.matmul %164, %165, %cst_40 {dimension_numbers = #tpu.dot_dimension_numbers<[2], [1], [1], [2], [0, 0, 0, 1, 1, 2], [0], [0]>} : vector<2x16x64xbf16>, vector<2x64x32xbf16>, vector<2x16x32xf32> -> vector<2x16x32xf32>
    "tpu.trace_stop"() : () -> ()
    %167 = arith.mulf %166, %163 : vector<2x16x32xf32>
    %168 = vector.shape_cast %167 : vector<2x16x32xf32> to vector<32x32xf32>
    %169 = arith.truncf %168 : vector<32x32xf32> to vector<32x32xbf16>
    %170 = arith.truncf %100 : vector<32x32xf32> to vector<32x32xbf16>
    %cst_41 = arith.constant dense<0.000000e+00> : vector<32x32xf32>
    %171 = tpu.matmul %169, %170, %cst_41 {dimension_numbers = #tpu.dot_dimension_numbers<[1], [0], [0], [1], [0, 0, 1, 1], [], []>} : vector<32x32xbf16>, vector<32x32xbf16>, vector<32x32xf32> -> vector<32x32xf32>
    %172 = vector.broadcast %101 : vector<1x32xf32> to vector<32x32xf32>
    %173 = arith.addf %171, %172 : vector<32x32xf32>
    %174 = arith.addf %54, %173 : vector<32x32xf32>
    %c32 = arith.constant 32 : index
    %c0_42 = arith.constant 0 : index
    %175 = vector.load %arg4[%c32, %c0_42] : memref<56x128xf32, #tpu.memory_space<vmem>>, vector<1x32xf32>
    %c33 = arith.constant 33 : index
    %c0_43 = arith.constant 0 : index
    %176 = vector.load %arg4[%c33, %c0_43] : memref<56x128xf32, #tpu.memory_space<vmem>>, vector<1x32xf32>
    %cst_44 = arith.constant dense<0.000000e+00> : vector<32xf32>
    %177 = vector.multi_reduction <add>, %174, %cst_44 [1] : vector<32x32xf32> to vector<32xf32>
    %178 = vector.shape_cast %177 : vector<32xf32> to vector<32x1xf32>
    %cst_45 = arith.constant 3.200000e+01 : f32
    %179 = vector.broadcast %cst_45 : f32 to vector<32x1xf32>
    %180 = arith.divf %178, %179 : vector<32x1xf32>
    %181 = vector.broadcast %180 : vector<32x1xf32> to vector<32x32xf32>
    %182 = arith.subf %174, %181 : vector<32x32xf32>
    %183 = arith.mulf %182, %182 : vector<32x32xf32>
    %cst_46 = arith.constant dense<0.000000e+00> : vector<32xf32>
    %184 = vector.multi_reduction <add>, %183, %cst_46 [1] : vector<32x32xf32> to vector<32xf32>
    %185 = vector.shape_cast %184 : vector<32xf32> to vector<32x1xf32>
    %cst_47 = arith.constant 3.200000e+01 : f32
    %186 = vector.broadcast %cst_47 : f32 to vector<32x1xf32>
    %187 = arith.divf %185, %186 : vector<32x1xf32>
    %cst_48 = arith.constant 9.99999974E-6 : f32
    %188 = vector.broadcast %cst_48 : f32 to vector<32x1xf32>
    %189 = arith.addf %187, %188 : vector<32x1xf32>
    %190 = math.rsqrt %189 : vector<32x1xf32>
    %191 = vector.broadcast %190 : vector<32x1xf32> to vector<32x32xf32>
    %192 = arith.mulf %182, %191 : vector<32x32xf32>
    %193 = vector.broadcast %175 : vector<1x32xf32> to vector<32x32xf32>
    %194 = arith.mulf %192, %193 : vector<32x32xf32>
    %195 = vector.broadcast %176 : vector<1x32xf32> to vector<32x32xf32>
    %196 = arith.addf %194, %195 : vector<32x32xf32>
    %197 = arith.addf %196, %60 : vector<32x32xf32>
    %c0_49 = arith.constant 0 : index
    %c128 = arith.constant 128 : index
    %198 = vector.load %arg1[%c0_49, %c128] : memref<32x832xf32, #tpu.memory_space<vmem>>, vector<32x32xf32>
    %199 = arith.truncf %197 : vector<32x32xf32> to vector<32x32xbf16>
    %200 = arith.truncf %198 : vector<32x32xf32> to vector<32x32xbf16>
    %cst_50 = arith.constant dense<0.000000e+00> : vector<32x32xf32>
    %201 = tpu.matmul %199, %200, %cst_50 {dimension_numbers = #tpu.dot_dimension_numbers<[1], [0], [0], [1], [0, 0, 1, 1], [], []>} : vector<32x32xbf16>, vector<32x32xbf16>, vector<32x32xf32> -> vector<32x32xf32>
    %c25 = arith.constant 25 : index
    %c0_51 = arith.constant 0 : index
    %202 = vector.load %arg4[%c25, %c0_51] : memref<56x128xf32, #tpu.memory_space<vmem>>, vector<1x32xf32>
    %203 = vector.broadcast %202 : vector<1x32xf32> to vector<32x32xf32>
    %204 = arith.addf %201, %203 : vector<32x32xf32>
    %c0_52 = arith.constant 0 : index
    %c160 = arith.constant 160 : index
    %205 = vector.load %arg1[%c0_52, %c160] : memref<32x832xf32, #tpu.memory_space<vmem>>, vector<32x64xf32>
    %206 = arith.truncf %54 : vector<32x32xf32> to vector<32x32xbf16>
    %207 = arith.truncf %205 : vector<32x64xf32> to vector<32x64xbf16>
    %cst_53 = arith.constant dense<0.000000e+00> : vector<32x64xf32>
    %208 = tpu.matmul %206, %207, %cst_53 {dimension_numbers = #tpu.dot_dimension_numbers<[1], [0], [0], [1], [0, 0, 1, 1], [], []>} : vector<32x32xbf16>, vector<32x64xbf16>, vector<32x64xf32> -> vector<32x64xf32>
    %c26 = arith.constant 26 : index
    %c0_54 = arith.constant 0 : index
    %209 = vector.load %arg4[%c26, %c0_54] : memref<56x128xf32, #tpu.memory_space<vmem>>, vector<1x64xf32>
    %210 = vector.broadcast %209 : vector<1x64xf32> to vector<32x64xf32>
    %211 = arith.addf %208, %210 : vector<32x64xf32>
    %212 = vector.extract_strided_slice %211 {offsets = [0, 0], sizes = [32, 32], strides = [1, 1]} : vector<32x64xf32> to vector<32x32xf32>
    %213 = vector.extract_strided_slice %211 {offsets = [0, 32], sizes = [32, 32], strides = [1, 1]} : vector<32x64xf32> to vector<32x32xf32>
    %c0_55 = arith.constant 0 : index
    %c224 = arith.constant 224 : index
    %214 = vector.load %arg1[%c0_55, %c224] : memref<32x832xf32, #tpu.memory_space<vmem>>, vector<32x32xf32>
    %c27 = arith.constant 27 : index
    %c0_56 = arith.constant 0 : index
    %215 = vector.load %arg4[%c27, %c0_56] : memref<56x128xf32, #tpu.memory_space<vmem>>, vector<1x32xf32>
    %216 = vector.shape_cast %204 : vector<32x32xf32> to vector<2x16x32xf32>
    %217 = vector.shape_cast %212 : vector<32x32xf32> to vector<2x16x32xf32>
    %218 = vector.shape_cast %213 : vector<32x32xf32> to vector<2x16x32xf32>
    %219 = vector.shape_cast %7 : vector<1x32xf32> to vector<1x1x32xf32>
    %220 = vector.broadcast %219 : vector<1x1x32xf32> to vector<2x16x32xf32>
    %221 = arith.mulf %217, %220 : vector<2x16x32xf32>
    %222 = vector.shape_cast %14 : vector<1x32xf32> to vector<1x1x32xf32>
    %223 = vector.broadcast %222 : vector<1x1x32xf32> to vector<2x16x32xf32>
    %224 = arith.mulf %217, %223 : vector<2x16x32xf32>
    %225 = vector.shape_cast %21 : vector<1x32xf32> to vector<1x1x32xf32>
    %226 = vector.broadcast %225 : vector<1x1x32xf32> to vector<2x16x32xf32>
    %227 = arith.mulf %217, %226 : vector<2x16x32xf32>
    %228 = vector.shape_cast %28 : vector<1x32xf32> to vector<1x1x32xf32>
    %229 = vector.broadcast %228 : vector<1x1x32xf32> to vector<2x16x32xf32>
    %230 = arith.mulf %217, %229 : vector<2x16x32xf32>
    %231 = tpu.concatenate %221, %224, %227, %230 in 1 : vector<2x16x32xf32>, vector<2x16x32xf32>, vector<2x16x32xf32>, vector<2x16x32xf32> -> vector<2x64x32xf32>
    %232 = vector.shape_cast %7 : vector<1x32xf32> to vector<1x1x32xf32>
    %233 = vector.broadcast %232 : vector<1x1x32xf32> to vector<2x16x32xf32>
    %234 = arith.mulf %218, %233 : vector<2x16x32xf32>
    %235 = vector.shape_cast %14 : vector<1x32xf32> to vector<1x1x32xf32>
    %236 = vector.broadcast %235 : vector<1x1x32xf32> to vector<2x16x32xf32>
    %237 = arith.mulf %218, %236 : vector<2x16x32xf32>
    %238 = vector.shape_cast %21 : vector<1x32xf32> to vector<1x1x32xf32>
    %239 = vector.broadcast %238 : vector<1x1x32xf32> to vector<2x16x32xf32>
    %240 = arith.mulf %218, %239 : vector<2x16x32xf32>
    %241 = vector.shape_cast %28 : vector<1x32xf32> to vector<1x1x32xf32>
    %242 = vector.broadcast %241 : vector<1x1x32xf32> to vector<2x16x32xf32>
    %243 = arith.mulf %218, %242 : vector<2x16x32xf32>
    %244 = tpu.concatenate %234, %237, %240, %243 in 1 : vector<2x16x32xf32>, vector<2x16x32xf32>, vector<2x16x32xf32>, vector<2x16x32xf32> -> vector<2x64x32xf32>
    %245 = arith.truncf %216 : vector<2x16x32xf32> to vector<2x16x32xbf16>
    %246 = arith.truncf %231 : vector<2x64x32xf32> to vector<2x64x32xbf16>
    "tpu.trace_start"() <{level = 10 : i32, message = "bqd,bkd->bqk"}> : () -> ()
    %cst_57 = arith.constant dense<0.000000e+00> : vector<2x16x64xf32>
    %247 = tpu.matmul %245, %246, %cst_57 {dimension_numbers = #tpu.dot_dimension_numbers<[2], [2], [1], [1], [0, 0, 0, 1, 1, 1], [0], [0]>} : vector<2x16x32xbf16>, vector<2x64x32xbf16>, vector<2x16x64xf32> -> vector<2x16x64xf32>
    "tpu.trace_stop"() : () -> ()
    %cst_58 = arith.constant dense<0xFF800000> : vector<2x16xf32>
    %248 = vector.multi_reduction <maximumf>, %247, %cst_58 [2] : vector<2x16x64xf32> to vector<2x16xf32>
    %249 = vector.shape_cast %248 : vector<2x16xf32> to vector<2x16x1xf32>
    %250 = vector.broadcast %249 : vector<2x16x1xf32> to vector<2x16x64xf32>
    %251 = arith.subf %247, %250 : vector<2x16x64xf32>
    %252 = math.exp %251 : vector<2x16x64xf32>
    %253 = vector.extract_strided_slice %252 {offsets = [0, 0, 0], sizes = [2, 16, 16], strides = [1, 1, 1]} : vector<2x16x64xf32> to vector<2x16x16xf32>
    %cst_59 = arith.constant dense<0.000000e+00> : vector<2x16xf32>
    %254 = vector.multi_reduction <add>, %253, %cst_59 [2] : vector<2x16x16xf32> to vector<2x16xf32>
    %255 = vector.shape_cast %254 : vector<2x16xf32> to vector<2x16x1xf32>
    %256 = tpu.reciprocal %255 {approx = true} : vector<2x16x1xf32> -> vector<2x16x1xf32>
    %257 = vector.shape_cast %256 : vector<2x16x1xf32> to vector<2x16x1xf32>
    %258 = vector.broadcast %257 : vector<2x16x1xf32> to vector<2x16x8xf32>
    %259 = vector.extract_strided_slice %252 {offsets = [0, 0, 16], sizes = [2, 16, 16], strides = [1, 1, 1]} : vector<2x16x64xf32> to vector<2x16x16xf32>
    %cst_60 = arith.constant dense<0.000000e+00> : vector<2x16xf32>
    %260 = vector.multi_reduction <add>, %259, %cst_60 [2] : vector<2x16x16xf32> to vector<2x16xf32>
    %261 = vector.shape_cast %260 : vector<2x16xf32> to vector<2x16x1xf32>
    %262 = tpu.reciprocal %261 {approx = true} : vector<2x16x1xf32> -> vector<2x16x1xf32>
    %263 = vector.shape_cast %262 : vector<2x16x1xf32> to vector<2x16x1xf32>
    %264 = vector.broadcast %263 : vector<2x16x1xf32> to vector<2x16x8xf32>
    %265 = vector.extract_strided_slice %252 {offsets = [0, 0, 32], sizes = [2, 16, 16], strides = [1, 1, 1]} : vector<2x16x64xf32> to vector<2x16x16xf32>
    %cst_61 = arith.constant dense<0.000000e+00> : vector<2x16xf32>
    %266 = vector.multi_reduction <add>, %265, %cst_61 [2] : vector<2x16x16xf32> to vector<2x16xf32>
    %267 = vector.shape_cast %266 : vector<2x16xf32> to vector<2x16x1xf32>
    %268 = tpu.reciprocal %267 {approx = true} : vector<2x16x1xf32> -> vector<2x16x1xf32>
    %269 = vector.shape_cast %268 : vector<2x16x1xf32> to vector<2x16x1xf32>
    %270 = vector.broadcast %269 : vector<2x16x1xf32> to vector<2x16x8xf32>
    %271 = vector.extract_strided_slice %252 {offsets = [0, 0, 48], sizes = [2, 16, 16], strides = [1, 1, 1]} : vector<2x16x64xf32> to vector<2x16x16xf32>
    %cst_62 = arith.constant dense<0.000000e+00> : vector<2x16xf32>
    %272 = vector.multi_reduction <add>, %271, %cst_62 [2] : vector<2x16x16xf32> to vector<2x16xf32>
    %273 = vector.shape_cast %272 : vector<2x16xf32> to vector<2x16x1xf32>
    %274 = tpu.reciprocal %273 {approx = true} : vector<2x16x1xf32> -> vector<2x16x1xf32>
    %275 = vector.shape_cast %274 : vector<2x16x1xf32> to vector<2x16x1xf32>
    %276 = vector.broadcast %275 : vector<2x16x1xf32> to vector<2x16x8xf32>
    %277 = tpu.concatenate %258, %264, %270, %276 in 2 : vector<2x16x8xf32>, vector<2x16x8xf32>, vector<2x16x8xf32>, vector<2x16x8xf32> -> vector<2x16x32xf32>
    %278 = arith.truncf %252 : vector<2x16x64xf32> to vector<2x16x64xbf16>
    %279 = arith.truncf %244 : vector<2x64x32xf32> to vector<2x64x32xbf16>
    "tpu.trace_start"() <{level = 10 : i32, message = "bqk,bkd->bqd"}> : () -> ()
    %cst_63 = arith.constant dense<0.000000e+00> : vector<2x16x32xf32>
    %280 = tpu.matmul %278, %279, %cst_63 {dimension_numbers = #tpu.dot_dimension_numbers<[2], [1], [1], [2], [0, 0, 0, 1, 1, 2], [0], [0]>} : vector<2x16x64xbf16>, vector<2x64x32xbf16>, vector<2x16x32xf32> -> vector<2x16x32xf32>
    "tpu.trace_stop"() : () -> ()
    %281 = arith.mulf %280, %277 : vector<2x16x32xf32>
    %282 = vector.shape_cast %281 : vector<2x16x32xf32> to vector<32x32xf32>
    %283 = arith.truncf %282 : vector<32x32xf32> to vector<32x32xbf16>
    %284 = arith.truncf %214 : vector<32x32xf32> to vector<32x32xbf16>
    %cst_64 = arith.constant dense<0.000000e+00> : vector<32x32xf32>
    %285 = tpu.matmul %283, %284, %cst_64 {dimension_numbers = #tpu.dot_dimension_numbers<[1], [0], [0], [1], [0, 0, 1, 1], [], []>} : vector<32x32xbf16>, vector<32x32xbf16>, vector<32x32xf32> -> vector<32x32xf32>
    %286 = vector.broadcast %215 : vector<1x32xf32> to vector<32x32xf32>
    %287 = arith.addf %285, %286 : vector<32x32xf32>
    %288 = arith.addf %174, %287 : vector<32x32xf32>
    %c34 = arith.constant 34 : index
    %c0_65 = arith.constant 0 : index
    %289 = vector.load %arg4[%c34, %c0_65] : memref<56x128xf32, #tpu.memory_space<vmem>>, vector<1x32xf32>
    %c35 = arith.constant 35 : index
    %c0_66 = arith.constant 0 : index
    %290 = vector.load %arg4[%c35, %c0_66] : memref<56x128xf32, #tpu.memory_space<vmem>>, vector<1x32xf32>
    %cst_67 = arith.constant dense<0.000000e+00> : vector<32xf32>
    %291 = vector.multi_reduction <add>, %288, %cst_67 [1] : vector<32x32xf32> to vector<32xf32>
    %292 = vector.shape_cast %291 : vector<32xf32> to vector<32x1xf32>
    %cst_68 = arith.constant 3.200000e+01 : f32
    %293 = vector.broadcast %cst_68 : f32 to vector<32x1xf32>
    %294 = arith.divf %292, %293 : vector<32x1xf32>
    %295 = vector.broadcast %294 : vector<32x1xf32> to vector<32x32xf32>
    %296 = arith.subf %288, %295 : vector<32x32xf32>
    %297 = arith.mulf %296, %296 : vector<32x32xf32>
    %cst_69 = arith.constant dense<0.000000e+00> : vector<32xf32>
    %298 = vector.multi_reduction <add>, %297, %cst_69 [1] : vector<32x32xf32> to vector<32xf32>
    %299 = vector.shape_cast %298 : vector<32xf32> to vector<32x1xf32>
    %cst_70 = arith.constant 3.200000e+01 : f32
    %300 = vector.broadcast %cst_70 : f32 to vector<32x1xf32>
    %301 = arith.divf %299, %300 : vector<32x1xf32>
    %cst_71 = arith.constant 9.99999974E-6 : f32
    %302 = vector.broadcast %cst_71 : f32 to vector<32x1xf32>
    %303 = arith.addf %301, %302 : vector<32x1xf32>
    %304 = math.rsqrt %303 : vector<32x1xf32>
    %305 = vector.broadcast %304 : vector<32x1xf32> to vector<32x32xf32>
    %306 = arith.mulf %296, %305 : vector<32x32xf32>
    %307 = vector.broadcast %289 : vector<1x32xf32> to vector<32x32xf32>
    %308 = arith.mulf %306, %307 : vector<32x32xf32>
    %309 = vector.broadcast %290 : vector<1x32xf32> to vector<32x32xf32>
    %310 = arith.addf %308, %309 : vector<32x32xf32>
    %c0_72 = arith.constant 0 : index
    %c256 = arith.constant 256 : index
    %311 = vector.load %arg1[%c0_72, %c256] : memref<32x832xf32, #tpu.memory_space<vmem>>, vector<32x128xf32>
    %312 = arith.truncf %310 : vector<32x32xf32> to vector<32x32xbf16>
    %313 = arith.truncf %311 : vector<32x128xf32> to vector<32x128xbf16>
    %cst_73 = arith.constant dense<0.000000e+00> : vector<32x128xf32>
    %314 = tpu.matmul %312, %313, %cst_73 {dimension_numbers = #tpu.dot_dimension_numbers<[1], [0], [0], [1], [0, 0, 1, 1], [], []>} : vector<32x32xbf16>, vector<32x128xbf16>, vector<32x128xf32> -> vector<32x128xf32>
    %c28 = arith.constant 28 : index
    %c0_74 = arith.constant 0 : index
    %315 = vector.load %arg4[%c28, %c0_74] : memref<56x128xf32, #tpu.memory_space<vmem>>, vector<1x128xf32>
    %316 = vector.broadcast %315 : vector<1x128xf32> to vector<32x128xf32>
    %317 = arith.addf %314, %316 : vector<32x128xf32>
    %cst_75 = arith.constant 0.000000e+00 : f32
    %318 = vector.broadcast %cst_75 : f32 to vector<32x128xf32>
    %319 = arith.maximumf %317, %318 : vector<32x128xf32>
    %c0_76 = arith.constant 0 : index
    %c32_77 = arith.constant 32 : index
    %320 = vector.load %arg3[%c0_76, %c32_77] : memref<128x96xf32, #tpu.memory_space<vmem>>, vector<128x32xf32>
    %321 = arith.truncf %319 : vector<32x128xf32> to vector<32x128xbf16>
    %322 = arith.truncf %320 : vector<128x32xf32> to vector<128x32xbf16>
    %cst_78 = arith.constant dense<0.000000e+00> : vector<32x32xf32>
    %323 = tpu.matmul %321, %322, %cst_78 {dimension_numbers = #tpu.dot_dimension_numbers<[1], [0], [0], [1], [0, 0, 1, 1], [], []>} : vector<32x128xbf16>, vector<128x32xbf16>, vector<32x32xf32> -> vector<32x32xf32>
    %c29 = arith.constant 29 : index
    %c0_79 = arith.constant 0 : index
    %324 = vector.load %arg4[%c29, %c0_79] : memref<56x128xf32, #tpu.memory_space<vmem>>, vector<1x32xf32>
    %325 = vector.broadcast %324 : vector<1x32xf32> to vector<32x32xf32>
    %326 = arith.addf %323, %325 : vector<32x32xf32>
    %327 = arith.addf %288, %326 : vector<32x32xf32>
    %c44 = arith.constant 44 : index
    %c0_80 = arith.constant 0 : index
    %328 = vector.load %arg4[%c44, %c0_80] : memref<56x128xf32, #tpu.memory_space<vmem>>, vector<1x32xf32>
    %c45 = arith.constant 45 : index
    %c0_81 = arith.constant 0 : index
    %329 = vector.load %arg4[%c45, %c0_81] : memref<56x128xf32, #tpu.memory_space<vmem>>, vector<1x32xf32>
    %cst_82 = arith.constant dense<0.000000e+00> : vector<32xf32>
    %330 = vector.multi_reduction <add>, %327, %cst_82 [1] : vector<32x32xf32> to vector<32xf32>
    %331 = vector.shape_cast %330 : vector<32xf32> to vector<32x1xf32>
    %cst_83 = arith.constant 3.200000e+01 : f32
    %332 = vector.broadcast %cst_83 : f32 to vector<32x1xf32>
    %333 = arith.divf %331, %332 : vector<32x1xf32>
    %334 = vector.broadcast %333 : vector<32x1xf32> to vector<32x32xf32>
    %335 = arith.subf %327, %334 : vector<32x32xf32>
    %336 = arith.mulf %335, %335 : vector<32x32xf32>
    %cst_84 = arith.constant dense<0.000000e+00> : vector<32xf32>
    %337 = vector.multi_reduction <add>, %336, %cst_84 [1] : vector<32x32xf32> to vector<32xf32>
    %338 = vector.shape_cast %337 : vector<32xf32> to vector<32x1xf32>
    %cst_85 = arith.constant 3.200000e+01 : f32
    %339 = vector.broadcast %cst_85 : f32 to vector<32x1xf32>
    %340 = arith.divf %338, %339 : vector<32x1xf32>
    %cst_86 = arith.constant 9.99999974E-6 : f32
    %341 = vector.broadcast %cst_86 : f32 to vector<32x1xf32>
    %342 = arith.addf %340, %341 : vector<32x1xf32>
    %343 = math.rsqrt %342 : vector<32x1xf32>
    %344 = vector.broadcast %343 : vector<32x1xf32> to vector<32x32xf32>
    %345 = arith.mulf %335, %344 : vector<32x32xf32>
    %346 = vector.broadcast %328 : vector<1x32xf32> to vector<32x32xf32>
    %347 = arith.mulf %345, %346 : vector<32x32xf32>
    %348 = vector.broadcast %329 : vector<1x32xf32> to vector<32x32xf32>
    %349 = arith.addf %347, %348 : vector<32x32xf32>
    %350 = arith.addf %349, %60 : vector<32x32xf32>
    %c0_87 = arith.constant 0 : index
    %c384 = arith.constant 384 : index
    %351 = vector.load %arg1[%c0_87, %c384] : memref<32x832xf32, #tpu.memory_space<vmem>>, vector<32x64xf32>
    %352 = arith.truncf %350 : vector<32x32xf32> to vector<32x32xbf16>
    %353 = arith.truncf %351 : vector<32x64xf32> to vector<32x64xbf16>
    %cst_88 = arith.constant dense<0.000000e+00> : vector<32x64xf32>
    %354 = tpu.matmul %352, %353, %cst_88 {dimension_numbers = #tpu.dot_dimension_numbers<[1], [0], [0], [1], [0, 0, 1, 1], [], []>} : vector<32x32xbf16>, vector<32x64xbf16>, vector<32x64xf32> -> vector<32x64xf32>
    %c36 = arith.constant 36 : index
    %c0_89 = arith.constant 0 : index
    %355 = vector.load %arg4[%c36, %c0_89] : memref<56x128xf32, #tpu.memory_space<vmem>>, vector<1x64xf32>
    %356 = vector.broadcast %355 : vector<1x64xf32> to vector<32x64xf32>
    %357 = arith.addf %354, %356 : vector<32x64xf32>
    %c0_90 = arith.constant 0 : index
    %c448 = arith.constant 448 : index
    %358 = vector.load %arg1[%c0_90, %c448] : memref<32x832xf32, #tpu.memory_space<vmem>>, vector<32x32xf32>
    %359 = arith.truncf %349 : vector<32x32xf32> to vector<32x32xbf16>
    %360 = arith.truncf %358 : vector<32x32xf32> to vector<32x32xbf16>
    %cst_91 = arith.constant dense<0.000000e+00> : vector<32x32xf32>
    %361 = tpu.matmul %359, %360, %cst_91 {dimension_numbers = #tpu.dot_dimension_numbers<[1], [0], [0], [1], [0, 0, 1, 1], [], []>} : vector<32x32xbf16>, vector<32x32xbf16>, vector<32x32xf32> -> vector<32x32xf32>
    %c37 = arith.constant 37 : index
    %c0_92 = arith.constant 0 : index
    %362 = vector.load %arg4[%c37, %c0_92] : memref<56x128xf32, #tpu.memory_space<vmem>>, vector<1x32xf32>
    %363 = vector.broadcast %362 : vector<1x32xf32> to vector<32x32xf32>
    %364 = arith.addf %361, %363 : vector<32x32xf32>
    %365 = vector.extract_strided_slice %357 {offsets = [0, 0], sizes = [32, 32], strides = [1, 1]} : vector<32x64xf32> to vector<32x32xf32>
    %366 = vector.extract_strided_slice %357 {offsets = [0, 32], sizes = [32, 32], strides = [1, 1]} : vector<32x64xf32> to vector<32x32xf32>
    %c0_93 = arith.constant 0 : index
    %c480 = arith.constant 480 : index
    %367 = vector.load %arg1[%c0_93, %c480] : memref<32x832xf32, #tpu.memory_space<vmem>>, vector<32x32xf32>
    %c38 = arith.constant 38 : index
    %c0_94 = arith.constant 0 : index
    %368 = vector.load %arg4[%c38, %c0_94] : memref<56x128xf32, #tpu.memory_space<vmem>>, vector<1x32xf32>
    %369 = vector.shape_cast %365 : vector<32x32xf32> to vector<2x16x32xf32>
    %370 = vector.shape_cast %366 : vector<32x32xf32> to vector<2x16x32xf32>
    %371 = vector.shape_cast %364 : vector<32x32xf32> to vector<2x16x32xf32>
    %372 = vector.shape_cast %7 : vector<1x32xf32> to vector<1x1x32xf32>
    %373 = vector.broadcast %372 : vector<1x1x32xf32> to vector<2x16x32xf32>
    %374 = arith.mulf %370, %373 : vector<2x16x32xf32>
    %375 = vector.shape_cast %14 : vector<1x32xf32> to vector<1x1x32xf32>
    %376 = vector.broadcast %375 : vector<1x1x32xf32> to vector<2x16x32xf32>
    %377 = arith.mulf %370, %376 : vector<2x16x32xf32>
    %378 = vector.shape_cast %21 : vector<1x32xf32> to vector<1x1x32xf32>
    %379 = vector.broadcast %378 : vector<1x1x32xf32> to vector<2x16x32xf32>
    %380 = arith.mulf %370, %379 : vector<2x16x32xf32>
    %381 = vector.shape_cast %28 : vector<1x32xf32> to vector<1x1x32xf32>
    %382 = vector.broadcast %381 : vector<1x1x32xf32> to vector<2x16x32xf32>
    %383 = arith.mulf %370, %382 : vector<2x16x32xf32>
    %384 = tpu.concatenate %374, %377, %380, %383 in 1 : vector<2x16x32xf32>, vector<2x16x32xf32>, vector<2x16x32xf32>, vector<2x16x32xf32> -> vector<2x64x32xf32>
    %385 = vector.shape_cast %7 : vector<1x32xf32> to vector<1x1x32xf32>
    %386 = vector.broadcast %385 : vector<1x1x32xf32> to vector<2x16x32xf32>
    %387 = arith.mulf %371, %386 : vector<2x16x32xf32>
    %388 = vector.shape_cast %14 : vector<1x32xf32> to vector<1x1x32xf32>
    %389 = vector.broadcast %388 : vector<1x1x32xf32> to vector<2x16x32xf32>
    %390 = arith.mulf %371, %389 : vector<2x16x32xf32>
    %391 = vector.shape_cast %21 : vector<1x32xf32> to vector<1x1x32xf32>
    %392 = vector.broadcast %391 : vector<1x1x32xf32> to vector<2x16x32xf32>
    %393 = arith.mulf %371, %392 : vector<2x16x32xf32>
    %394 = vector.shape_cast %28 : vector<1x32xf32> to vector<1x1x32xf32>
    %395 = vector.broadcast %394 : vector<1x1x32xf32> to vector<2x16x32xf32>
    %396 = arith.mulf %371, %395 : vector<2x16x32xf32>
    %397 = tpu.concatenate %387, %390, %393, %396 in 1 : vector<2x16x32xf32>, vector<2x16x32xf32>, vector<2x16x32xf32>, vector<2x16x32xf32> -> vector<2x64x32xf32>
    %398 = arith.truncf %369 : vector<2x16x32xf32> to vector<2x16x32xbf16>
    %399 = arith.truncf %384 : vector<2x64x32xf32> to vector<2x64x32xbf16>
    "tpu.trace_start"() <{level = 10 : i32, message = "bqd,bkd->bqk"}> : () -> ()
    %cst_95 = arith.constant dense<0.000000e+00> : vector<2x16x64xf32>
    %400 = tpu.matmul %398, %399, %cst_95 {dimension_numbers = #tpu.dot_dimension_numbers<[2], [2], [1], [1], [0, 0, 0, 1, 1, 1], [0], [0]>} : vector<2x16x32xbf16>, vector<2x64x32xbf16>, vector<2x16x64xf32> -> vector<2x16x64xf32>
    "tpu.trace_stop"() : () -> ()
    %cst_96 = arith.constant dense<0xFF800000> : vector<2x16xf32>
    %401 = vector.multi_reduction <maximumf>, %400, %cst_96 [2] : vector<2x16x64xf32> to vector<2x16xf32>
    %402 = vector.shape_cast %401 : vector<2x16xf32> to vector<2x16x1xf32>
    %403 = vector.broadcast %402 : vector<2x16x1xf32> to vector<2x16x64xf32>
    %404 = arith.subf %400, %403 : vector<2x16x64xf32>
    %405 = math.exp %404 : vector<2x16x64xf32>
    %406 = vector.extract_strided_slice %405 {offsets = [0, 0, 0], sizes = [2, 16, 16], strides = [1, 1, 1]} : vector<2x16x64xf32> to vector<2x16x16xf32>
    %cst_97 = arith.constant dense<0.000000e+00> : vector<2x16xf32>
    %407 = vector.multi_reduction <add>, %406, %cst_97 [2] : vector<2x16x16xf32> to vector<2x16xf32>
    %408 = vector.shape_cast %407 : vector<2x16xf32> to vector<2x16x1xf32>
    %409 = tpu.reciprocal %408 {approx = true} : vector<2x16x1xf32> -> vector<2x16x1xf32>
    %410 = vector.shape_cast %409 : vector<2x16x1xf32> to vector<2x16x1xf32>
    %411 = vector.broadcast %410 : vector<2x16x1xf32> to vector<2x16x8xf32>
    %412 = vector.extract_strided_slice %405 {offsets = [0, 0, 16], sizes = [2, 16, 16], strides = [1, 1, 1]} : vector<2x16x64xf32> to vector<2x16x16xf32>
    %cst_98 = arith.constant dense<0.000000e+00> : vector<2x16xf32>
    %413 = vector.multi_reduction <add>, %412, %cst_98 [2] : vector<2x16x16xf32> to vector<2x16xf32>
    %414 = vector.shape_cast %413 : vector<2x16xf32> to vector<2x16x1xf32>
    %415 = tpu.reciprocal %414 {approx = true} : vector<2x16x1xf32> -> vector<2x16x1xf32>
    %416 = vector.shape_cast %415 : vector<2x16x1xf32> to vector<2x16x1xf32>
    %417 = vector.broadcast %416 : vector<2x16x1xf32> to vector<2x16x8xf32>
    %418 = vector.extract_strided_slice %405 {offsets = [0, 0, 32], sizes = [2, 16, 16], strides = [1, 1, 1]} : vector<2x16x64xf32> to vector<2x16x16xf32>
    %cst_99 = arith.constant dense<0.000000e+00> : vector<2x16xf32>
    %419 = vector.multi_reduction <add>, %418, %cst_99 [2] : vector<2x16x16xf32> to vector<2x16xf32>
    %420 = vector.shape_cast %419 : vector<2x16xf32> to vector<2x16x1xf32>
    %421 = tpu.reciprocal %420 {approx = true} : vector<2x16x1xf32> -> vector<2x16x1xf32>
    %422 = vector.shape_cast %421 : vector<2x16x1xf32> to vector<2x16x1xf32>
    %423 = vector.broadcast %422 : vector<2x16x1xf32> to vector<2x16x8xf32>
    %424 = vector.extract_strided_slice %405 {offsets = [0, 0, 48], sizes = [2, 16, 16], strides = [1, 1, 1]} : vector<2x16x64xf32> to vector<2x16x16xf32>
    %cst_100 = arith.constant dense<0.000000e+00> : vector<2x16xf32>
    %425 = vector.multi_reduction <add>, %424, %cst_100 [2] : vector<2x16x16xf32> to vector<2x16xf32>
    %426 = vector.shape_cast %425 : vector<2x16xf32> to vector<2x16x1xf32>
    %427 = tpu.reciprocal %426 {approx = true} : vector<2x16x1xf32> -> vector<2x16x1xf32>
    %428 = vector.shape_cast %427 : vector<2x16x1xf32> to vector<2x16x1xf32>
    %429 = vector.broadcast %428 : vector<2x16x1xf32> to vector<2x16x8xf32>
    %430 = tpu.concatenate %411, %417, %423, %429 in 2 : vector<2x16x8xf32>, vector<2x16x8xf32>, vector<2x16x8xf32>, vector<2x16x8xf32> -> vector<2x16x32xf32>
    %431 = arith.truncf %405 : vector<2x16x64xf32> to vector<2x16x64xbf16>
    %432 = arith.truncf %397 : vector<2x64x32xf32> to vector<2x64x32xbf16>
    "tpu.trace_start"() <{level = 10 : i32, message = "bqk,bkd->bqd"}> : () -> ()
    %cst_101 = arith.constant dense<0.000000e+00> : vector<2x16x32xf32>
    %433 = tpu.matmul %431, %432, %cst_101 {dimension_numbers = #tpu.dot_dimension_numbers<[2], [1], [1], [2], [0, 0, 0, 1, 1, 2], [0], [0]>} : vector<2x16x64xbf16>, vector<2x64x32xbf16>, vector<2x16x32xf32> -> vector<2x16x32xf32>
    "tpu.trace_stop"() : () -> ()
    %434 = arith.mulf %433, %430 : vector<2x16x32xf32>
    %435 = vector.shape_cast %434 : vector<2x16x32xf32> to vector<32x32xf32>
    %436 = arith.truncf %435 : vector<32x32xf32> to vector<32x32xbf16>
    %437 = arith.truncf %367 : vector<32x32xf32> to vector<32x32xbf16>
    %cst_102 = arith.constant dense<0.000000e+00> : vector<32x32xf32>
    %438 = tpu.matmul %436, %437, %cst_102 {dimension_numbers = #tpu.dot_dimension_numbers<[1], [0], [0], [1], [0, 0, 1, 1], [], []>} : vector<32x32xbf16>, vector<32x32xbf16>, vector<32x32xf32> -> vector<32x32xf32>
    %439 = vector.broadcast %368 : vector<1x32xf32> to vector<32x32xf32>
    %440 = arith.addf %438, %439 : vector<32x32xf32>
    %441 = arith.addf %327, %440 : vector<32x32xf32>
    %c46 = arith.constant 46 : index
    %c0_103 = arith.constant 0 : index
    %442 = vector.load %arg4[%c46, %c0_103] : memref<56x128xf32, #tpu.memory_space<vmem>>, vector<1x32xf32>
    %c47 = arith.constant 47 : index
    %c0_104 = arith.constant 0 : index
    %443 = vector.load %arg4[%c47, %c0_104] : memref<56x128xf32, #tpu.memory_space<vmem>>, vector<1x32xf32>
    %cst_105 = arith.constant dense<0.000000e+00> : vector<32xf32>
    %444 = vector.multi_reduction <add>, %441, %cst_105 [1] : vector<32x32xf32> to vector<32xf32>
    %445 = vector.shape_cast %444 : vector<32xf32> to vector<32x1xf32>
    %cst_106 = arith.constant 3.200000e+01 : f32
    %446 = vector.broadcast %cst_106 : f32 to vector<32x1xf32>
    %447 = arith.divf %445, %446 : vector<32x1xf32>
    %448 = vector.broadcast %447 : vector<32x1xf32> to vector<32x32xf32>
    %449 = arith.subf %441, %448 : vector<32x32xf32>
    %450 = arith.mulf %449, %449 : vector<32x32xf32>
    %cst_107 = arith.constant dense<0.000000e+00> : vector<32xf32>
    %451 = vector.multi_reduction <add>, %450, %cst_107 [1] : vector<32x32xf32> to vector<32xf32>
    %452 = vector.shape_cast %451 : vector<32xf32> to vector<32x1xf32>
    %cst_108 = arith.constant 3.200000e+01 : f32
    %453 = vector.broadcast %cst_108 : f32 to vector<32x1xf32>
    %454 = arith.divf %452, %453 : vector<32x1xf32>
    %cst_109 = arith.constant 9.99999974E-6 : f32
    %455 = vector.broadcast %cst_109 : f32 to vector<32x1xf32>
    %456 = arith.addf %454, %455 : vector<32x1xf32>
    %457 = math.rsqrt %456 : vector<32x1xf32>
    %458 = vector.broadcast %457 : vector<32x1xf32> to vector<32x32xf32>
    %459 = arith.mulf %449, %458 : vector<32x32xf32>
    %460 = vector.broadcast %442 : vector<1x32xf32> to vector<32x32xf32>
    %461 = arith.mulf %459, %460 : vector<32x32xf32>
    %462 = vector.broadcast %443 : vector<1x32xf32> to vector<32x32xf32>
    %463 = arith.addf %461, %462 : vector<32x32xf32>
    %464 = arith.addf %463, %60 : vector<32x32xf32>
    %c0_110 = arith.constant 0 : index
    %c512 = arith.constant 512 : index
    %465 = vector.load %arg1[%c0_110, %c512] : memref<32x832xf32, #tpu.memory_space<vmem>>, vector<32x32xf32>
    %466 = arith.truncf %464 : vector<32x32xf32> to vector<32x32xbf16>
    %467 = arith.truncf %465 : vector<32x32xf32> to vector<32x32xbf16>
    %cst_111 = arith.constant dense<0.000000e+00> : vector<32x32xf32>
    %468 = tpu.matmul %466, %467, %cst_111 {dimension_numbers = #tpu.dot_dimension_numbers<[1], [0], [0], [1], [0, 0, 1, 1], [], []>} : vector<32x32xbf16>, vector<32x32xbf16>, vector<32x32xf32> -> vector<32x32xf32>
    %c39 = arith.constant 39 : index
    %c0_112 = arith.constant 0 : index
    %469 = vector.load %arg4[%c39, %c0_112] : memref<56x128xf32, #tpu.memory_space<vmem>>, vector<1x32xf32>
    %470 = vector.broadcast %469 : vector<1x32xf32> to vector<32x32xf32>
    %471 = arith.addf %468, %470 : vector<32x32xf32>
    %c0_113 = arith.constant 0 : index
    %c544 = arith.constant 544 : index
    %472 = vector.load %arg1[%c0_113, %c544] : memref<32x832xf32, #tpu.memory_space<vmem>>, vector<32x64xf32>
    %473 = arith.truncf %54 : vector<32x32xf32> to vector<32x32xbf16>
    %474 = arith.truncf %472 : vector<32x64xf32> to vector<32x64xbf16>
    %cst_114 = arith.constant dense<0.000000e+00> : vector<32x64xf32>
    %475 = tpu.matmul %473, %474, %cst_114 {dimension_numbers = #tpu.dot_dimension_numbers<[1], [0], [0], [1], [0, 0, 1, 1], [], []>} : vector<32x32xbf16>, vector<32x64xbf16>, vector<32x64xf32> -> vector<32x64xf32>
    %c40 = arith.constant 40 : index
    %c0_115 = arith.constant 0 : index
    %476 = vector.load %arg4[%c40, %c0_115] : memref<56x128xf32, #tpu.memory_space<vmem>>, vector<1x64xf32>
    %477 = vector.broadcast %476 : vector<1x64xf32> to vector<32x64xf32>
    %478 = arith.addf %475, %477 : vector<32x64xf32>
    %479 = vector.extract_strided_slice %478 {offsets = [0, 0], sizes = [32, 32], strides = [1, 1]} : vector<32x64xf32> to vector<32x32xf32>
    %480 = vector.extract_strided_slice %478 {offsets = [0, 32], sizes = [32, 32], strides = [1, 1]} : vector<32x64xf32> to vector<32x32xf32>
    %c0_116 = arith.constant 0 : index
    %c608 = arith.constant 608 : index
    %481 = vector.load %arg1[%c0_116, %c608] : memref<32x832xf32, #tpu.memory_space<vmem>>, vector<32x32xf32>
    %c41 = arith.constant 41 : index
    %c0_117 = arith.constant 0 : index
    %482 = vector.load %arg4[%c41, %c0_117] : memref<56x128xf32, #tpu.memory_space<vmem>>, vector<1x32xf32>
    %483 = vector.shape_cast %471 : vector<32x32xf32> to vector<2x16x32xf32>
    %484 = vector.shape_cast %479 : vector<32x32xf32> to vector<2x16x32xf32>
    %485 = vector.shape_cast %480 : vector<32x32xf32> to vector<2x16x32xf32>
    %486 = vector.shape_cast %7 : vector<1x32xf32> to vector<1x1x32xf32>
    %487 = vector.broadcast %486 : vector<1x1x32xf32> to vector<2x16x32xf32>
    %488 = arith.mulf %484, %487 : vector<2x16x32xf32>
    %489 = vector.shape_cast %14 : vector<1x32xf32> to vector<1x1x32xf32>
    %490 = vector.broadcast %489 : vector<1x1x32xf32> to vector<2x16x32xf32>
    %491 = arith.mulf %484, %490 : vector<2x16x32xf32>
    %492 = vector.shape_cast %21 : vector<1x32xf32> to vector<1x1x32xf32>
    %493 = vector.broadcast %492 : vector<1x1x32xf32> to vector<2x16x32xf32>
    %494 = arith.mulf %484, %493 : vector<2x16x32xf32>
    %495 = vector.shape_cast %28 : vector<1x32xf32> to vector<1x1x32xf32>
    %496 = vector.broadcast %495 : vector<1x1x32xf32> to vector<2x16x32xf32>
    %497 = arith.mulf %484, %496 : vector<2x16x32xf32>
    %498 = tpu.concatenate %488, %491, %494, %497 in 1 : vector<2x16x32xf32>, vector<2x16x32xf32>, vector<2x16x32xf32>, vector<2x16x32xf32> -> vector<2x64x32xf32>
    %499 = vector.shape_cast %7 : vector<1x32xf32> to vector<1x1x32xf32>
    %500 = vector.broadcast %499 : vector<1x1x32xf32> to vector<2x16x32xf32>
    %501 = arith.mulf %485, %500 : vector<2x16x32xf32>
    %502 = vector.shape_cast %14 : vector<1x32xf32> to vector<1x1x32xf32>
    %503 = vector.broadcast %502 : vector<1x1x32xf32> to vector<2x16x32xf32>
    %504 = arith.mulf %485, %503 : vector<2x16x32xf32>
    %505 = vector.shape_cast %21 : vector<1x32xf32> to vector<1x1x32xf32>
    %506 = vector.broadcast %505 : vector<1x1x32xf32> to vector<2x16x32xf32>
    %507 = arith.mulf %485, %506 : vector<2x16x32xf32>
    %508 = vector.shape_cast %28 : vector<1x32xf32> to vector<1x1x32xf32>
    %509 = vector.broadcast %508 : vector<1x1x32xf32> to vector<2x16x32xf32>
    %510 = arith.mulf %485, %509 : vector<2x16x32xf32>
    %511 = tpu.concatenate %501, %504, %507, %510 in 1 : vector<2x16x32xf32>, vector<2x16x32xf32>, vector<2x16x32xf32>, vector<2x16x32xf32> -> vector<2x64x32xf32>
    %512 = arith.truncf %483 : vector<2x16x32xf32> to vector<2x16x32xbf16>
    %513 = arith.truncf %498 : vector<2x64x32xf32> to vector<2x64x32xbf16>
    "tpu.trace_start"() <{level = 10 : i32, message = "bqd,bkd->bqk"}> : () -> ()
    %cst_118 = arith.constant dense<0.000000e+00> : vector<2x16x64xf32>
    %514 = tpu.matmul %512, %513, %cst_118 {dimension_numbers = #tpu.dot_dimension_numbers<[2], [2], [1], [1], [0, 0, 0, 1, 1, 1], [0], [0]>} : vector<2x16x32xbf16>, vector<2x64x32xbf16>, vector<2x16x64xf32> -> vector<2x16x64xf32>
    "tpu.trace_stop"() : () -> ()
    %cst_119 = arith.constant dense<0xFF800000> : vector<2x16xf32>
    %515 = vector.multi_reduction <maximumf>, %514, %cst_119 [2] : vector<2x16x64xf32> to vector<2x16xf32>
    %516 = vector.shape_cast %515 : vector<2x16xf32> to vector<2x16x1xf32>
    %517 = vector.broadcast %516 : vector<2x16x1xf32> to vector<2x16x64xf32>
    %518 = arith.subf %514, %517 : vector<2x16x64xf32>
    %519 = math.exp %518 : vector<2x16x64xf32>
    %520 = vector.extract_strided_slice %519 {offsets = [0, 0, 0], sizes = [2, 16, 16], strides = [1, 1, 1]} : vector<2x16x64xf32> to vector<2x16x16xf32>
    %cst_120 = arith.constant dense<0.000000e+00> : vector<2x16xf32>
    %521 = vector.multi_reduction <add>, %520, %cst_120 [2] : vector<2x16x16xf32> to vector<2x16xf32>
    %522 = vector.shape_cast %521 : vector<2x16xf32> to vector<2x16x1xf32>
    %523 = tpu.reciprocal %522 {approx = true} : vector<2x16x1xf32> -> vector<2x16x1xf32>
    %524 = vector.shape_cast %523 : vector<2x16x1xf32> to vector<2x16x1xf32>
    %525 = vector.broadcast %524 : vector<2x16x1xf32> to vector<2x16x8xf32>
    %526 = vector.extract_strided_slice %519 {offsets = [0, 0, 16], sizes = [2, 16, 16], strides = [1, 1, 1]} : vector<2x16x64xf32> to vector<2x16x16xf32>
    %cst_121 = arith.constant dense<0.000000e+00> : vector<2x16xf32>
    %527 = vector.multi_reduction <add>, %526, %cst_121 [2] : vector<2x16x16xf32> to vector<2x16xf32>
    %528 = vector.shape_cast %527 : vector<2x16xf32> to vector<2x16x1xf32>
    %529 = tpu.reciprocal %528 {approx = true} : vector<2x16x1xf32> -> vector<2x16x1xf32>
    %530 = vector.shape_cast %529 : vector<2x16x1xf32> to vector<2x16x1xf32>
    %531 = vector.broadcast %530 : vector<2x16x1xf32> to vector<2x16x8xf32>
    %532 = vector.extract_strided_slice %519 {offsets = [0, 0, 32], sizes = [2, 16, 16], strides = [1, 1, 1]} : vector<2x16x64xf32> to vector<2x16x16xf32>
    %cst_122 = arith.constant dense<0.000000e+00> : vector<2x16xf32>
    %533 = vector.multi_reduction <add>, %532, %cst_122 [2] : vector<2x16x16xf32> to vector<2x16xf32>
    %534 = vector.shape_cast %533 : vector<2x16xf32> to vector<2x16x1xf32>
    %535 = tpu.reciprocal %534 {approx = true} : vector<2x16x1xf32> -> vector<2x16x1xf32>
    %536 = vector.shape_cast %535 : vector<2x16x1xf32> to vector<2x16x1xf32>
    %537 = vector.broadcast %536 : vector<2x16x1xf32> to vector<2x16x8xf32>
    %538 = vector.extract_strided_slice %519 {offsets = [0, 0, 48], sizes = [2, 16, 16], strides = [1, 1, 1]} : vector<2x16x64xf32> to vector<2x16x16xf32>
    %cst_123 = arith.constant dense<0.000000e+00> : vector<2x16xf32>
    %539 = vector.multi_reduction <add>, %538, %cst_123 [2] : vector<2x16x16xf32> to vector<2x16xf32>
    %540 = vector.shape_cast %539 : vector<2x16xf32> to vector<2x16x1xf32>
    %541 = tpu.reciprocal %540 {approx = true} : vector<2x16x1xf32> -> vector<2x16x1xf32>
    %542 = vector.shape_cast %541 : vector<2x16x1xf32> to vector<2x16x1xf32>
    %543 = vector.broadcast %542 : vector<2x16x1xf32> to vector<2x16x8xf32>
    %544 = tpu.concatenate %525, %531, %537, %543 in 2 : vector<2x16x8xf32>, vector<2x16x8xf32>, vector<2x16x8xf32>, vector<2x16x8xf32> -> vector<2x16x32xf32>
    %545 = arith.truncf %519 : vector<2x16x64xf32> to vector<2x16x64xbf16>
    %546 = arith.truncf %511 : vector<2x64x32xf32> to vector<2x64x32xbf16>
    "tpu.trace_start"() <{level = 10 : i32, message = "bqk,bkd->bqd"}> : () -> ()
    %cst_124 = arith.constant dense<0.000000e+00> : vector<2x16x32xf32>
    %547 = tpu.matmul %545, %546, %cst_124 {dimension_numbers = #tpu.dot_dimension_numbers<[2], [1], [1], [2], [0, 0, 0, 1, 1, 2], [0], [0]>} : vector<2x16x64xbf16>, vector<2x64x32xbf16>, vector<2x16x32xf32> -> vector<2x16x32xf32>
    "tpu.trace_stop"() : () -> ()
    %548 = arith.mulf %547, %544 : vector<2x16x32xf32>
    %549 = vector.shape_cast %548 : vector<2x16x32xf32> to vector<32x32xf32>
    %550 = arith.truncf %549 : vector<32x32xf32> to vector<32x32xbf16>
    %551 = arith.truncf %481 : vector<32x32xf32> to vector<32x32xbf16>
    %cst_125 = arith.constant dense<0.000000e+00> : vector<32x32xf32>
    %552 = tpu.matmul %550, %551, %cst_125 {dimension_numbers = #tpu.dot_dimension_numbers<[1], [0], [0], [1], [0, 0, 1, 1], [], []>} : vector<32x32xbf16>, vector<32x32xbf16>, vector<32x32xf32> -> vector<32x32xf32>
    %553 = vector.broadcast %482 : vector<1x32xf32> to vector<32x32xf32>
    %554 = arith.addf %552, %553 : vector<32x32xf32>
    %555 = arith.addf %441, %554 : vector<32x32xf32>
    %c48 = arith.constant 48 : index
    %c0_126 = arith.constant 0 : index
    %556 = vector.load %arg4[%c48, %c0_126] : memref<56x128xf32, #tpu.memory_space<vmem>>, vector<1x32xf32>
    %c49 = arith.constant 49 : index
    %c0_127 = arith.constant 0 : index
    %557 = vector.load %arg4[%c49, %c0_127] : memref<56x128xf32, #tpu.memory_space<vmem>>, vector<1x32xf32>
    %cst_128 = arith.constant dense<0.000000e+00> : vector<32xf32>
    %558 = vector.multi_reduction <add>, %555, %cst_128 [1] : vector<32x32xf32> to vector<32xf32>
    %559 = vector.shape_cast %558 : vector<32xf32> to vector<32x1xf32>
    %cst_129 = arith.constant 3.200000e+01 : f32
    %560 = vector.broadcast %cst_129 : f32 to vector<32x1xf32>
    %561 = arith.divf %559, %560 : vector<32x1xf32>
    %562 = vector.broadcast %561 : vector<32x1xf32> to vector<32x32xf32>
    %563 = arith.subf %555, %562 : vector<32x32xf32>
    %564 = arith.mulf %563, %563 : vector<32x32xf32>
    %cst_130 = arith.constant dense<0.000000e+00> : vector<32xf32>
    %565 = vector.multi_reduction <add>, %564, %cst_130 [1] : vector<32x32xf32> to vector<32xf32>
    %566 = vector.shape_cast %565 : vector<32xf32> to vector<32x1xf32>
    %cst_131 = arith.constant 3.200000e+01 : f32
    %567 = vector.broadcast %cst_131 : f32 to vector<32x1xf32>
    %568 = arith.divf %566, %567 : vector<32x1xf32>
    %cst_132 = arith.constant 9.99999974E-6 : f32
    %569 = vector.broadcast %cst_132 : f32 to vector<32x1xf32>
    %570 = arith.addf %568, %569 : vector<32x1xf32>
    %571 = math.rsqrt %570 : vector<32x1xf32>
    %572 = vector.broadcast %571 : vector<32x1xf32> to vector<32x32xf32>
    %573 = arith.mulf %563, %572 : vector<32x32xf32>
    %574 = vector.broadcast %556 : vector<1x32xf32> to vector<32x32xf32>
    %575 = arith.mulf %573, %574 : vector<32x32xf32>
    %576 = vector.broadcast %557 : vector<1x32xf32> to vector<32x32xf32>
    %577 = arith.addf %575, %576 : vector<32x32xf32>
    %c0_133 = arith.constant 0 : index
    %c640 = arith.constant 640 : index
    %578 = vector.load %arg1[%c0_133, %c640] : memref<32x832xf32, #tpu.memory_space<vmem>>, vector<32x128xf32>
    %579 = arith.truncf %577 : vector<32x32xf32> to vector<32x32xbf16>
    %580 = arith.truncf %578 : vector<32x128xf32> to vector<32x128xbf16>
    %cst_134 = arith.constant dense<0.000000e+00> : vector<32x128xf32>
    %581 = tpu.matmul %579, %580, %cst_134 {dimension_numbers = #tpu.dot_dimension_numbers<[1], [0], [0], [1], [0, 0, 1, 1], [], []>} : vector<32x32xbf16>, vector<32x128xbf16>, vector<32x128xf32> -> vector<32x128xf32>
    %c42 = arith.constant 42 : index
    %c0_135 = arith.constant 0 : index
    %582 = vector.load %arg4[%c42, %c0_135] : memref<56x128xf32, #tpu.memory_space<vmem>>, vector<1x128xf32>
    %583 = vector.broadcast %582 : vector<1x128xf32> to vector<32x128xf32>
    %584 = arith.addf %581, %583 : vector<32x128xf32>
    %cst_136 = arith.constant 0.000000e+00 : f32
    %585 = vector.broadcast %cst_136 : f32 to vector<32x128xf32>
    %586 = arith.maximumf %584, %585 : vector<32x128xf32>
    %c0_137 = arith.constant 0 : index
    %c64_138 = arith.constant 64 : index
    %587 = vector.load %arg3[%c0_137, %c64_138] : memref<128x96xf32, #tpu.memory_space<vmem>>, vector<128x32xf32>
    %588 = arith.truncf %586 : vector<32x128xf32> to vector<32x128xbf16>
    %589 = arith.truncf %587 : vector<128x32xf32> to vector<128x32xbf16>
    %cst_139 = arith.constant dense<0.000000e+00> : vector<32x32xf32>
    %590 = tpu.matmul %588, %589, %cst_139 {dimension_numbers = #tpu.dot_dimension_numbers<[1], [0], [0], [1], [0, 0, 1, 1], [], []>} : vector<32x128xbf16>, vector<128x32xbf16>, vector<32x32xf32> -> vector<32x32xf32>
    %c43 = arith.constant 43 : index
    %c0_140 = arith.constant 0 : index
    %591 = vector.load %arg4[%c43, %c0_140] : memref<56x128xf32, #tpu.memory_space<vmem>>, vector<1x32xf32>
    %592 = vector.broadcast %591 : vector<1x32xf32> to vector<32x32xf32>
    %593 = arith.addf %590, %592 : vector<32x32xf32>
    %594 = arith.addf %555, %593 : vector<32x32xf32>
    %c50 = arith.constant 50 : index
    %c0_141 = arith.constant 0 : index
    %595 = vector.load %arg4[%c50, %c0_141] : memref<56x128xf32, #tpu.memory_space<vmem>>, vector<1x32xf32>
    %c51 = arith.constant 51 : index
    %c0_142 = arith.constant 0 : index
    %596 = vector.load %arg4[%c51, %c0_142] : memref<56x128xf32, #tpu.memory_space<vmem>>, vector<1x32xf32>
    %cst_143 = arith.constant dense<0.000000e+00> : vector<32xf32>
    %597 = vector.multi_reduction <add>, %594, %cst_143 [1] : vector<32x32xf32> to vector<32xf32>
    %598 = vector.shape_cast %597 : vector<32xf32> to vector<32x1xf32>
    %cst_144 = arith.constant 3.200000e+01 : f32
    %599 = vector.broadcast %cst_144 : f32 to vector<32x1xf32>
    %600 = arith.divf %598, %599 : vector<32x1xf32>
    %601 = vector.broadcast %600 : vector<32x1xf32> to vector<32x32xf32>
    %602 = arith.subf %594, %601 : vector<32x32xf32>
    %603 = arith.mulf %602, %602 : vector<32x32xf32>
    %cst_145 = arith.constant dense<0.000000e+00> : vector<32xf32>
    %604 = vector.multi_reduction <add>, %603, %cst_145 [1] : vector<32x32xf32> to vector<32xf32>
    %605 = vector.shape_cast %604 : vector<32xf32> to vector<32x1xf32>
    %cst_146 = arith.constant 3.200000e+01 : f32
    %606 = vector.broadcast %cst_146 : f32 to vector<32x1xf32>
    %607 = arith.divf %605, %606 : vector<32x1xf32>
    %cst_147 = arith.constant 9.99999974E-6 : f32
    %608 = vector.broadcast %cst_147 : f32 to vector<32x1xf32>
    %609 = arith.addf %607, %608 : vector<32x1xf32>
    %610 = math.rsqrt %609 : vector<32x1xf32>
    %611 = vector.broadcast %610 : vector<32x1xf32> to vector<32x32xf32>
    %612 = arith.mulf %602, %611 : vector<32x32xf32>
    %613 = vector.broadcast %595 : vector<1x32xf32> to vector<32x32xf32>
    %614 = arith.mulf %612, %613 : vector<32x32xf32>
    %615 = vector.broadcast %596 : vector<1x32xf32> to vector<32x32xf32>
    %616 = arith.addf %614, %615 : vector<32x32xf32>
    %c0_148 = arith.constant 0 : index
    %c768 = arith.constant 768 : index
    %617 = vector.load %arg1[%c0_148, %c768] : memref<32x832xf32, #tpu.memory_space<vmem>>, vector<32x64xf32>
    %618 = arith.truncf %616 : vector<32x32xf32> to vector<32x32xbf16>
    %619 = arith.truncf %617 : vector<32x64xf32> to vector<32x64xbf16>
    %cst_149 = arith.constant dense<0.000000e+00> : vector<32x64xf32>
    %620 = tpu.matmul %618, %619, %cst_149 {dimension_numbers = #tpu.dot_dimension_numbers<[1], [0], [0], [1], [0, 0, 1, 1], [], []>} : vector<32x32xbf16>, vector<32x64xbf16>, vector<32x64xf32> -> vector<32x64xf32>
    %c52 = arith.constant 52 : index
    %c0_150 = arith.constant 0 : index
    %621 = vector.load %arg4[%c52, %c0_150] : memref<56x128xf32, #tpu.memory_space<vmem>>, vector<1x64xf32>
    %622 = vector.broadcast %621 : vector<1x64xf32> to vector<32x64xf32>
    %623 = arith.addf %620, %622 : vector<32x64xf32>
    %cst_151 = arith.constant 0.000000e+00 : f32
    %624 = vector.broadcast %cst_151 : f32 to vector<32x64xf32>
    %625 = arith.maximumf %623, %624 : vector<32x64xf32>
    %c0_152 = arith.constant 0 : index
    %c128_153 = arith.constant 128 : index
    %626 = vector.load %arg2[%c0_152, %c128_153] : memref<64x131xf32, #tpu.memory_space<vmem>>, vector<64x3xf32>
    %627 = arith.truncf %625 : vector<32x64xf32> to vector<32x64xbf16>
    %628 = arith.truncf %626 : vector<64x3xf32> to vector<64x3xbf16>
    %cst_154 = arith.constant dense<0.000000e+00> : vector<32x3xf32>
    %629 = tpu.matmul %627, %628, %cst_154 {dimension_numbers = #tpu.dot_dimension_numbers<[1], [0], [0], [1], [0, 0, 1, 1], [], []>} : vector<32x64xbf16>, vector<64x3xbf16>, vector<32x3xf32> -> vector<32x3xf32>
    %c53 = arith.constant 53 : index
    %c0_155 = arith.constant 0 : index
    %630 = vector.load %arg4[%c53, %c0_155] : memref<56x128xf32, #tpu.memory_space<vmem>>, vector<1x3xf32>
    %631 = vector.broadcast %630 : vector<1x3xf32> to vector<32x3xf32>
    %632 = arith.addf %629, %631 : vector<32x3xf32>
    %c0_156 = arith.constant 0 : index
    %c0_157 = arith.constant 0 : index
    %633 = vector.load %arg5[%c0_156, %c0_157] : memref<32x3xf32, #tpu.memory_space<vmem>>, vector<32x3xf32>
    tpu.vector_store %arg5[%c0_156, %c0_157], %632 {strides = array<i32>} : memref<32x3xf32, #tpu.memory_space<vmem>>, vector<32x3xf32>,
    return
  }
}

</mosaic_0001>

<llo_original>
// kernel: point_denoising_forward.1
$region0: #{point_denoising_forward.1}
  #allocation0 [shape = 'u32[]', space=smem, size = 0x4, offset = 0x4, fixed_abs, tag = 'smem constant byte address 0x4 - core index']
  #allocation1 [shape = 'u32[144,128]{1,0:T(1,128)}', space=vmem, size = 0x12000, scoped, tag = 'internal scratch']
  %s0 = inlined_call_operand.vmem [shape: f32[32,3], index: 0, kind: input, shape index: {}]
  %s1 = inlined_call_operand.vmem [shape: f32[32,832], index: 1, kind: input, shape index: {}]
  %s2 = inlined_call_operand.hbm [shape: f32[64,131], index: 2, kind: input, shape index: {}]
  %s3 = inlined_call_operand.vmem [shape: f32[128,96], index: 3, kind: input, shape index: {}]
  %s4 = inlined_call_operand.vmem [shape: f32[56,128], index: 4, kind: input, shape index: {}]
  %s5 = inlined_call_operand.vmem [shape: f32[32,3], index: 5, kind: output, shape index: {}]
  %s6 = sld [smem:[#allocation0]]
  $region34: #{point_denoising_forward.1} parent=0
    _
  %s8 = ssub.s32 1, %s6
  %s9 = scalar_select 0, %s8, %s6
  $region1: #{point_denoising_forward.1} parent=0
    #allocation2 [shape = 'u8[65536]{0}', space=vmem, size = 0x10000, scoped, tag = 'input window, operand 2, single buffered']
    #allocation3 [shape = 's32[1]{0}', space=sflag, size = 0x4, scoped, tag = 'scoped memory for point_denoising_forward.1']
    %10 = vsyncpa [#allocation3], 0
    // Predicated region
    $region2: #{point_denoising_forward.1} parent=1 // pred_check
      _
    $region3: #{point_denoising_forward.1} parent=1 // pred_check_branch
      %12 = sbr.rel (0) target = $region5
    $region4: #{point_denoising_forward.1} parent=1 // pred_region
      _
    $region5: #{point_denoising_forward.1} parent=1 // pred_fallthru
      _
    // Predicated region
    $region6: #{point_denoising_forward.1} parent=1 // pred_check
      _
    $region7: #{point_denoising_forward.1} parent=1 // pred_check_branch
      %14 = sbr.rel (0) target = $region9
    $region8: #{point_denoising_forward.1} parent=1 // pred_region
      _
    $region9: #{point_denoising_forward.1} parent=1 // pred_fallthru
      _
    // Predicated region
    $region10: #{point_denoising_forward.1} parent=1 // pred_check
      _
    $region11: #{point_denoising_forward.1} parent=1 // pred_check_branch
      %16 = sbr.rel (0) target = $region13
    $region12: #{point_denoising_forward.1} parent=1 // pred_region
      %s18 = ssub.s32 2048, 2048
      %19 = vsyncadd [#allocation3], %s18
      %s20 = sshll.u32 [#allocation2], 4
      %s21 = int_to_ptr.vmem [resolvable:$true] %s20
      %26 = dma.hbm_to_vmem [thread:$0]  %s2, 2048, %s21, [#allocation3], 256, 256, 16
    $region13: #{point_denoising_forward.1} parent=1 // pred_fallthru
      _
    // Predicated region
    $region14: #{point_denoising_forward.1} parent=1 // pred_check
      _
    $region15: #{point_denoising_forward.1} parent=1 // pred_check_branch
      %28 = sbr.rel (0) target = $region17
    $region16: #{point_denoising_forward.1} parent=1 // pred_region
      _
    $region17: #{point_denoising_forward.1} parent=1 // pred_fallthru
      _
    // Predicated region
    $region18: #{point_denoising_forward.1} parent=1 // pred_check
      _
    $region19: #{point_denoising_forward.1} parent=1 // pred_check_branch
      %30 = sbr.rel (0) target = $region21
    $region20: #{point_denoising_forward.1} parent=1 // pred_region
      _
    $region21: #{point_denoising_forward.1} parent=1 // pred_fallthru
      _
    // Predicated region
    $region22: #{point_denoising_forward.1} parent=1 // pred_check
      _
    $region23: #{point_denoising_forward.1} parent=1 // pred_check_branch
      %32 = sbr.rel (0) target = $region25
    $region24: #{point_denoising_forward.1} parent=1 // pred_region
      %33 = dma.done [#allocation3], 2048
    $region25: #{point_denoising_forward.1} parent=1 // pred_fallthru
      _
    %v35 = vlaneseq
    %v36 = vand.u32 %v35, 127
    %vm37 = vcmp.ge.s32.totalorder %v36, 0
    %vm38 = vcmp.lt.s32.totalorder %v36, 8
    %vm39 = vmand %vm37, %vm38
    %v40 = vsel %vm39, 1, 0
    %v41 = vcvt.s32.f32 %v40
    %vm42 = vcmp.ge.s32.totalorder %v36, 8
    %vm43 = vcmp.lt.s32.totalorder %v36, 16
    %vm44 = vmand %vm42, %vm43
    %v45 = vsel %vm44, 1, 0
    %v46 = vcvt.s32.f32 %v45
    %vm47 = vcmp.ge.s32.totalorder %v36, 16
    %vm48 = vcmp.lt.s32.totalorder %v36, 24
    %vm49 = vmand %vm47, %vm48
    %v50 = vsel %vm49, 1, 0
    %v51 = vcvt.s32.f32 %v50
    %vm52 = vcmp.ge.s32.totalorder %v36, 24
    %vm53 = vcmp.lt.s32.totalorder %v36, 32
    %vm54 = vmand %vm52, %vm53
    %v55 = vsel %vm54, 1, 0
    %v56 = vcvt.s32.f32 %v55
    %v57 = vld [vmem:[%s0] sm:$0xff]
    %v58 = vld [vmem:[%s0 + $0x8] sm:$0xff]
    %v59 = vld [vmem:[%s0 + $0x10] sm:$0xff]
    %v60 = vld [vmem:[%s0 + $0x18] sm:$0xff]
    %v61 = vld [vmem:[%s4 + $0x3] sm:$0x7]
    %v62 = vpack.c.bf16 %v58, %v57
    %v63 = vpack.c.bf16 %v60, %v59
    %v64 = vpack.c.bf16 %v61, %v61
    %v65 = vld [vmem:[%s4] sm:$0x1]
    %v66 = vlaneseq
    %v67 = vshrl.u32 %v66, 7
    %v68 = vsub.s32 0, %v67
    %v69 = vrot.slane %v65, %v68
    %vm70 = vcmask 23552
    %v72 = vsel %vm70, %v62, 0
    %v75 = vsel %vm70, %v63, 0
    %vm77 = vcmask 1040384
    %vm78 = vcmask 1041408
    %v79 = vsel %vm77, 4294967295, 65535
    %v80 = vsel %vm78, %v79, 0
    %v82 = vand.u32 %v64, %v80
    %84 = vmatprep.subr.bf16.mxu0 0
    %85 = vmatpush1.bf16.msra.mxu0 %v82
    %86 = vmatprep.subr.bf16.mxu0 0
    %87 = vmatpush1.bf16.msra.mxu0 0
    %88 = vmatprep.subr.bf16.mxu0 0
    %89 = vmatpush1.bf16.msra.mxu0 0
    %90 = vmatprep.subr.bf16.mxu0 0
    %91 = vmatpush1.bf16.msra.mxu0 0
    %92 = vmatprep.subr.bf16.mxu0 0
    %93 = vmatpush1.bf16.msra.mxu0 0
    %94 = vmatprep.subr.bf16.mxu0 0
    %95 = vmatpush1.bf16.msra.mxu0 0
    %96 = vmatprep.subr.bf16.mxu0 0
    %97 = vmatpush1.bf16.msra.mxu0 0
    %98 = vmatprep.subr.bf16.mxu0 0
    %99 = vmatpush1.bf16.msra.mxu0 0
    %100 = vmatprep.subr.bf16.mxu0 0
    %101 = vmatpush1.bf16.msra.mxu0 0
    %102 = vmatprep.subr.bf16.mxu0 0
    %103 = vmatpush1.bf16.msra.mxu0 0
    %104 = vmatprep.subr.bf16.mxu0 0
    %105 = vmatpush1.bf16.msra.mxu0 0
    %106 = vmatprep.subr.bf16.mxu0 0
    %107 = vmatpush1.bf16.msra.mxu0 0
    %108 = vmatprep.subr.bf16.mxu0 0
    %109 = vmatpush1.bf16.msra.mxu0 0
    %110 = vmatprep.subr.bf16.mxu0 0
    %111 = vmatpush1.bf16.msra.mxu0 0
    %112 = vmatprep.subr.bf16.mxu0 0
    %113 = vmatpush1.bf16.msra.mxu0 0
    %114 = vmatprep.subr.bf16.mxu0 0
    %115 = vmatpush1.bf16.msra.mxu0 0
    %116 = vmatprep.mubr.bf16.mxu0 0
    %117 = vmatmul.mubr.bf16.gmra.mrb[0].mxu0 %v72
    %v118 = vpop.f32.mrb[0].mxu0
    %v119 = vadd.f32 %v69, %v118
    %v120 = vpop.f32.mrb[0].mxu0
    %v121 = vpop.f32.mrb[0].mxu0
    %v122 = vadd.f32 %v69, %v121
    %v123 = vpop.f32.mrb[0].mxu0
    %124 = vmatprep.mubr.bf16.mxu0 0
    %125 = vmatmul.mubr.bf16.gmra.mrb[0].mxu0 %v75
    %v126 = vpop.f32.mrb[0].mxu0
    %v127 = vadd.f32 %v69, %v126
    %v128 = vpop.f32.mrb[0].mxu0
    %v129 = vpop.f32.mrb[0].mxu0
    %v130 = vadd.f32 %v69, %v129
    %v131 = vpop.f32.mrb[0].mxu0
    %132 = vdwg.mxu0
    %v133 = vmax.f32 %v119, 0.0
    %v134 = vmax.f32 %v122, 0.0
    %v135 = vmax.f32 %v127, 0.0
    %v136 = vmax.f32 %v130, 0.0
    %v137 = vld [vmem:[#allocation2] sm:$0xff]
    %v138 = vld [vmem:[#allocation2 + $0x10] sm:$0xff]
    %v139 = vld [vmem:[#allocation2 + $0x20] sm:$0xff]
    %v140 = vld [vmem:[#allocation2 + $0x30] sm:$0xff]
    %v141 = vld [vmem:[#allocation2 + $0x40] sm:$0xff]
    %v142 = vld [vmem:[#allocation2 + $0x50] sm:$0xff]
    %v143 = vld [vmem:[#allocation2 + $0x60] sm:$0xff]
    %v144 = vld [vmem:[#allocation2 + $0x70] sm:$0xff]
    %v145 = vpack.c.bf16 %v134, %v133
    %v146 = vpack.c.bf16 %v136, %v135
    %v147 = vpack.c.bf16 %v138, %v137
    %v148 = vpack.c.bf16 %v140, %v139
    %v149 = vpack.c.bf16 %v142, %v141
    %v150 = vpack.c.bf16 %v144, %v143
    %v151 = vld [vmem:[%s4 + $0x1] sm:$0x1]
    %v152 = vlaneseq
    %v153 = vshrl.u32 %v152, 7
    %v154 = vsub.s32 0, %v153
    %v155 = vrot.slane %v151, %v154
    %vm156 = vcmask 523264
    %v158 = vsel %vm156, %v145, 0
    %v161 = vsel %vm156, %v146, 0
    %163 = vmatprep.subr.bf16.mxu0 0
    %164 = vmatpush1.bf16.msra.mxu0 %v147
    %165 = vmatprep.subr.bf16.mxu0 0
    %166 = vmatpush1.bf16.msra.mxu0 %v148
    %167 = vmatprep.subr.bf16.mxu0 0
    %168 = vmatpush1.bf16.msra.mxu0 %v149
    %169 = vmatprep.subr.bf16.mxu0 0
    %170 = vmatpush1.bf16.msra.mxu0 %v150
    %171 = vmatprep.subr.bf16.mxu0 0
    %172 = vmatpush1.bf16.msra.mxu0 0
    %173 = vmatprep.subr.bf16.mxu0 0
    %174 = vmatpush1.bf16.msra.mxu0 0
    %175 = vmatprep.subr.bf16.mxu0 0
    %176 = vmatpush1.bf16.msra.mxu0 0
    %177 = vmatprep.subr.bf16.mxu0 0
    %178 = vmatpush1.bf16.msra.mxu0 0
    %179 = vmatprep.subr.bf16.mxu0 0
    %180 = vmatpush1.bf16.msra.mxu0 0
    %181 = vmatprep.subr.bf16.mxu0 0
    %182 = vmatpush1.bf16.msra.mxu0 0
    %183 = vmatprep.subr.bf16.mxu0 0
    %184 = vmatpush1.bf16.msra.mxu0 0
    %185 = vmatprep.subr.bf16.mxu0 0
    %186 = vmatpush1.bf16.msra.mxu0 0
    %187 = vmatprep.subr.bf16.mxu0 0
    %188 = vmatpush1.bf16.msra.mxu0 0
    %189 = vmatprep.subr.bf16.mxu0 0
    %190 = vmatpush1.bf16.msra.mxu0 0
    %191 = vmatprep.subr.bf16.mxu0 0
    %192 = vmatpush1.bf16.msra.mxu0 0
    %193 = vmatprep.subr.bf16.mxu0 0
    %194 = vmatpush1.bf16.msra.mxu0 0
    %195 = vmatprep.mubr.bf16.mxu0 0
    %196 = vmatmul.mubr.bf16.gmra.mrb[0].mxu0 %v158
    %v197 = vpop.f32.mrb[0].mxu0
    %v198 = vadd.f32 %v155, %v197
    %v199 = vpop.f32.mrb[0].mxu0
    %v200 = vpop.f32.mrb[0].mxu0
    %v201 = vadd.f32 %v155, %v200
    %v202 = vpop.f32.mrb[0].mxu0
    %203 = vmatprep.mubr.bf16.mxu0 0
    %204 = vmatmul.mubr.bf16.gmra.mrb[0].mxu0 %v161
    %v205 = vpop.f32.mrb[0].mxu0
    %v206 = vadd.f32 %v155, %v205
    %v207 = vpop.f32.mrb[0].mxu0
    %v208 = vpop.f32.mrb[0].mxu0
    %v209 = vadd.f32 %v155, %v208
    %v210 = vpop.f32.mrb[0].mxu0
    %211 = vdwg.mxu0
    %v212 = vmax.f32 %v198, 0.0
    %v213 = vmax.f32 %v201, 0.0
    %v214 = vmax.f32 %v206, 0.0
    %v215 = vmax.f32 %v209, 0.0
    %v216 = vld [vmem:[%s3] sm:$0xff]
    %v217 = vld [vmem:[%s3 + $0x8] sm:$0xff]
    %v218 = vld [vmem:[%s3 + $0x10] sm:$0xff]
    %v219 = vld [vmem:[%s3 + $0x18] sm:$0xff]
    %v220 = vld [vmem:[%s3 + $0x20] sm:$0xff]
    %v221 = vld [vmem:[%s3 + $0x28] sm:$0xff]
    %v222 = vld [vmem:[%s3 + $0x30] sm:$0xff]
    %v223 = vld [vmem:[%s3 + $0x38] sm:$0xff]
    %v224 = vld [vmem:[%s3 + $0x40] sm:$0xff]
    %v225 = vld [vmem:[%s3 + $0x48] sm:$0xff]
    %v226 = vld [vmem:[%s3 + $0x50] sm:$0xff]
    %v227 = vld [vmem:[%s3 + $0x58] sm:$0xff]
    %v228 = vld [vmem:[%s3 + $0x60] sm:$0xff]
    %v229 = vld [vmem:[%s3 + $0x68] sm:$0xff]
    %v230 = vld [vmem:[%s3 + $0x70] sm:$0xff]
    %v231 = vld [vmem:[%s3 + $0x78] sm:$0xff]
    %v232 = vpack.c.bf16 %v213, %v212
    %v233 = vpack.c.bf16 %v215, %v214
    %v234 = vpack.c.bf16 %v217, %v216
    %v235 = vpack.c.bf16 %v219, %v218
    %v236 = vpack.c.bf16 %v221, %v220
    %v237 = vpack.c.bf16 %v223, %v222
    %v238 = vpack.c.bf16 %v225, %v224
    %v239 = vpack.c.bf16 %v227, %v226
    %v240 = vpack.c.bf16 %v229, %v228
    %v241 = vpack.c.bf16 %v231, %v230
    %v242 = vld [vmem:[%s4 + $0x2] sm:$0x1]
    %v243 = vlaneseq
    %v244 = vshrl.u32 %v243, 7
    %v245 = vsub.s32 0, %v244
    %v246 = vrot.slane %v242, %v245
    %247 = vmatprep.subr.bf16.mxu0 0
    %248 = vmatpush1.bf16.msra.mxu0 %v234
    %249 = vmatprep.subr.bf16.mxu0 0
    %250 = vmatpush1.bf16.msra.mxu0 %v235
    %251 = vmatprep.subr.bf16.mxu0 0
    %252 = vmatpush1.bf16.msra.mxu0 %v236
    %253 = vmatprep.subr.bf16.mxu0 0
    %254 = vmatpush1.bf16.msra.mxu0 %v237
    %255 = vmatprep.subr.bf16.mxu0 0
    %256 = vmatpush1.bf16.msra.mxu0 %v238
    %257 = vmatprep.subr.bf16.mxu0 0
    %258 = vmatpush1.bf16.msra.mxu0 %v239
    %259 = vmatprep.subr.bf16.mxu0 0
    %260 = vmatpush1.bf16.msra.mxu0 %v240
    %261 = vmatprep.subr.bf16.mxu0 0
    %262 = vmatpush1.bf16.msra.mxu0 %v241
    %263 = vmatprep.subr.bf16.mxu0 0
    %264 = vmatpush1.bf16.msra.mxu0 0
    %265 = vmatprep.subr.bf16.mxu0 0
    %266 = vmatpush1.bf16.msra.mxu0 0
    %267 = vmatprep.subr.bf16.mxu0 0
    %268 = vmatpush1.bf16.msra.mxu0 0
    %269 = vmatprep.subr.bf16.mxu0 0
    %270 = vmatpush1.bf16.msra.mxu0 0
    %271 = vmatprep.subr.bf16.mxu0 0
    %272 = vmatpush1.bf16.msra.mxu0 0
    %273 = vmatprep.subr.bf16.mxu0 0
    %274 = vmatpush1.bf16.msra.mxu0 0
    %275 = vmatprep.subr.bf16.mxu0 0
    %276 = vmatpush1.bf16.msra.mxu0 0
    %277 = vmatprep.subr.bf16.mxu0 0
    %278 = vmatpush1.bf16.msra.mxu0 0
    %279 = vmatprep.mubr.bf16.mxu0 0
    %280 = vmatmul.mubr.bf16.gmra.mrb[0].mxu0 %v232
    %v281 = vpop.f32.mrb[0].mxu0
    %v282 = vadd.f32 %v246, %v281
    %v283 = vpop.f32.mrb[0].mxu0
    %v284 = vpop.f32.mrb[0].mxu0
    %v285 = vadd.f32 %v246, %v284
    %v286 = vpop.f32.mrb[0].mxu0
    %287 = vmatprep.mubr.bf16.mxu0 0
    %288 = vmatmul.mubr.bf16.gmra.mrb[0].mxu0 %v233
    %v289 = vpop.f32.mrb[0].mxu0
    %v290 = vadd.f32 %v246, %v289
    %v291 = vpop.f32.mrb[0].mxu0
    %v292 = vpop.f32.mrb[0].mxu0
    %v293 = vadd.f32 %v246, %v292
    %v294 = vpop.f32.mrb[0].mxu0
    %295 = vdwg.mxu0
    %v296 = vld [vmem:[%s4 + $0x6] sm:$0xff]
    %v297 = vld [vmem:[%s4 + $0xe] sm:$0xff]
    %v298 = vadd.f32 %v282, %v296
    %v299 = vadd.f32 %v285, %v297
    %v300 = vadd.f32 %v290, %v296
    %v301 = vadd.f32 %v293, %v297
    %v302 = vld [vmem:[%s4 + $0x1e] sm:$0x1]
    %v303 = vld [vmem:[%s4 + $0x1f] sm:$0x1]
    %vm304 = vcmask 261120
    %v305 = vsel %vm304, %v282, 0.0
    %306 = vadd.xlane.f32.xlu0 %v305
    %v307 = vpop.xlane.xlu0 %306
    %v308 = vsel %vm304, %v285, 0.0
    %309 = vadd.xlane.f32.xlu0 %v308
    %v310 = vpop.xlane.xlu0 %309
    %v311 = vsel %vm304, %v290, 0.0
    %312 = vadd.xlane.f32.xlu0 %v311
    %v313 = vpop.xlane.xlu0 %312
    %v314 = vsel %vm304, %v293, 0.0
    %315 = vadd.xlane.f32.xlu0 %v314
    %v316 = vpop.xlane.xlu0 %315
    %v317 = vrcp.pop 32.0
    %v318 = vmul.f32 %v307, %v317
    %v319 = vmul.f32 %v310, %v317
    %v320 = vmul.f32 %v313, %v317
    %v321 = vmul.f32 %v316, %v317
    %v322 = vsub.f32 %v282, %v318
    %v323 = vsub.f32 %v285, %v319
    %v324 = vsub.f32 %v290, %v320
    %v325 = vsub.f32 %v293, %v321
    %v326 = vmul.f32 %v322, %v322
    %v327 = vmul.f32 %v323, %v323
    %v328 = vmul.f32 %v324, %v324
    %v329 = vmul.f32 %v325, %v325
    %v330 = vsel %vm304, %v326, 0.0
    %331 = vadd.xlane.f32.xlu0 %v330
    %v332 = vpop.xlane.xlu0 %331
    %v333 = vsel %vm304, %v327, 0.0
    %334 = vadd.xlane.f32.xlu0 %v333
    %v335 = vpop.xlane.xlu0 %334
    %v336 = vsel %vm304, %v328, 0.0
    %337 = vadd.xlane.f32.xlu0 %v336
    %v338 = vpop.xlane.xlu0 %337
    %v339 = vsel %vm304, %v329, 0.0
    %340 = vadd.xlane.f32.xlu0 %v339
    %v341 = vpop.xlane.xlu0 %340
    %v342 = vmul.f32 %v332, %v317
    %v343 = vmul.f32 %v335, %v317
    %v344 = vmul.f32 %v338, %v317
    %v345 = vmul.f32 %v341, %v317
    %v346 = vadd.f32 %v342, 1e-05
    %v347 = vadd.f32 %v343, 1e-05
    %v348 = vadd.f32 %v344, 1e-05
    %v349 = vadd.f32 %v345, 1e-05
    %v350 = vrsqrt.pop %v346
    %v351 = vrsqrt.pop %v347
    %v352 = vrsqrt.pop %v348
    %v353 = vrsqrt.pop %v349
    %v354 = vmul.f32 %v322, %v350
    %v355 = vmul.f32 %v323, %v351
    %v356 = vmul.f32 %v324, %v352
    %v357 = vmul.f32 %v325, %v353
    %v358 = vlaneseq
    %v359 = vshrl.u32 %v358, 7
    %v360 = vsub.s32 0, %v359
    %v361 = vrot.slane %v302, %v360
    %v362 = vmul.f32 %v354, %v361
    %v363 = vmul.f32 %v355, %v361
    %v364 = vmul.f32 %v356, %v361
    %v365 = vmul.f32 %v357, %v361
    %v366 = vlaneseq
    %v367 = vshrl.u32 %v366, 7
    %v368 = vsub.s32 0, %v367
    %v369 = vrot.slane %v303, %v368
    %v370 = vadd.f32 %v362, %v369
    %v371 = vadd.f32 %v363, %v369
    %v372 = vadd.f32 %v364, %v369
    %v373 = vadd.f32 %v365, %v369
    %v374 = vadd.f32 %v370, %v298
    %v375 = vadd.f32 %v371, %v299
    %v376 = vadd.f32 %v372, %v300
    %v377 = vadd.f32 %v373, %v301
    %v378 = vld [vmem:[%s1] sm:$0xff]
    %v379 = vld [vmem:[%s1 + $0x38] sm:$0xff]
    %v380 = vld [vmem:[%s1 + $0x70] sm:$0xff]
    %v381 = vld [vmem:[%s1 + $0xa8] sm:$0xff]
    %v382 = vpack.c.bf16 %v375, %v374
    %v383 = vpack.c.bf16 %v377, %v376
    %v384 = vpack.c.bf16 %v379, %v378
    %v385 = vpack.c.bf16 %v381, %v380
    %v386 = vld [vmem:[%s4 + $0x16] sm:$0x1]
    %v387 = vlaneseq
    %v388 = vshrl.u32 %v387, 7
    %v389 = vsub.s32 0, %v388
    %v390 = vrot.slane %v386, %v389
    %v392 = vsel %vm304, %v382, 0
    %v395 = vsel %vm304, %v383, 0
    %397 = vmatprep.subr.bf16.mxu0 0
    %398 = vmatpush1.bf16.msra.mxu0 %v384
    %399 = vmatprep.subr.bf16.mxu0 0
    %400 = vmatpush1.bf16.msra.mxu0 %v385
    %401 = vmatprep.subr.bf16.mxu0 0
    %402 = vmatpush1.bf16.msra.mxu0 0
    %403 = vmatprep.subr.bf16.mxu0 0
    %404 = vmatpush1.bf16.msra.mxu0 0
    %405 = vmatprep.subr.bf16.mxu0 0
    %406 = vmatpush1.bf16.msra.mxu0 0
    %407 = vmatprep.subr.bf16.mxu0 0
    %408 = vmatpush1.bf16.msra.mxu0 0
    %409 = vmatprep.subr.bf16.mxu0 0
    %410 = vmatpush1.bf16.msra.mxu0 0
    %411 = vmatprep.subr.bf16.mxu0 0
    %412 = vmatpush1.bf16.msra.mxu0 0
    %413 = vmatprep.subr.bf16.mxu0 0
    %414 = vmatpush1.bf16.msra.mxu0 0
    %415 = vmatprep.subr.bf16.mxu0 0
    %416 = vmatpush1.bf16.msra.mxu0 0
    %417 = vmatprep.subr.bf16.mxu0 0
    %418 = vmatpush1.bf16.msra.mxu0 0
    %419 = vmatprep.subr.bf16.mxu0 0
    %420 = vmatpush1.bf16.msra.mxu0 0
    %421 = vmatprep.subr.bf16.mxu0 0
    %422 = vmatpush1.bf16.msra.mxu0 0
    %423 = vmatprep.subr.bf16.mxu0 0
    %424 = vmatpush1.bf16.msra.mxu0 0
    %425 = vmatprep.subr.bf16.mxu0 0
    %426 = vmatpush1.bf16.msra.mxu0 0
    %427 = vmatprep.subr.bf16.mxu0 0
    %428 = vmatpush1.bf16.msra.mxu0 0
    %429 = vmatprep.mubr.bf16.mxu0 0
    %430 = vmatmul.mubr.bf16.gmra.mrb[0].mxu0 %v392
    %v431 = vpop.f32.mrb[0].mxu0
    %v432 = vadd.f32 %v390, %v431
    %v433 = vpop.f32.mrb[0].mxu0
    %v434 = vpop.f32.mrb[0].mxu0
    %v435 = vadd.f32 %v390, %v434
    %v436 = vpop.f32.mrb[0].mxu0
    %437 = vmatprep.mubr.bf16.mxu0 0
    %438 = vmatmul.mubr.bf16.gmra.mrb[0].mxu0 %v395
    %v439 = vpop.f32.mrb[0].mxu0
    %v440 = vadd.f32 %v390, %v439
    %v441 = vpop.f32.mrb[0].mxu0
    %v442 = vpop.f32.mrb[0].mxu0
    %v443 = vadd.f32 %v390, %v442
    %v444 = vpop.f32.mrb[0].mxu0
    %445 = vdwg.mxu0
    %v446 = vpack.c.bf16 %v371, %v370
    %v447 = vpack.c.bf16 %v373, %v372
    %v448 = vld [vmem:[%s4 + $0x17] sm:$0x1]
    %v449 = vlaneseq
    %v450 = vshrl.u32 %v449, 7
    %v451 = vsub.s32 0, %v450
    %v452 = vrot.slane %v448, %v451
    %455 = vrot.lane.b32.xlu0 %v384, 64
    %v456 = vpop.permute.xlu0 %455
    %457 = vrot.lane.b32.xlu0 %v385, 64
    %v458 = vpop.permute.xlu0 %457
    %v462 = vsel %vm304, %v446, 0
    %v465 = vsel %vm304, %v447, 0
    %467 = vmatprep.subr.bf16.mxu0 0
    %468 = vmatpush1.bf16.msra.mxu0 %v456
    %469 = vmatprep.subr.bf16.mxu0 0
    %470 = vmatpush1.bf16.msra.mxu0 %v458
    %471 = vmatprep.subr.bf16.mxu0 0
    %472 = vmatpush1.bf16.msra.mxu0 0
    %473 = vmatprep.subr.bf16.mxu0 0
    %474 = vmatpush1.bf16.msra.mxu0 0
    %475 = vmatprep.subr.bf16.mxu0 0
    %476 = vmatpush1.bf16.msra.mxu0 0
    %477 = vmatprep.subr.bf16.mxu0 0
    %478 = vmatpush1.bf16.msra.mxu0 0
    %479 = vmatprep.subr.bf16.mxu0 0
    %480 = vmatpush1.bf16.msra.mxu0 0
    %481 = vmatprep.subr.bf16.mxu0 0
    %482 = vmatpush1.bf16.msra.mxu0 0
    %483 = vmatprep.subr.bf16.mxu0 0
    %484 = vmatpush1.bf16.msra.mxu0 0
    %485 = vmatprep.subr.bf16.mxu0 0
    %486 = vmatpush1.bf16.msra.mxu0 0
    %487 = vmatprep.subr.bf16.mxu0 0
    %488 = vmatpush1.bf16.msra.mxu0 0
    %489 = vmatprep.subr.bf16.mxu0 0
    %490 = vmatpush1.bf16.msra.mxu0 0
    %491 = vmatprep.subr.bf16.mxu0 0
    %492 = vmatpush1.bf16.msra.mxu0 0
    %493 = vmatprep.subr.bf16.mxu0 0
    %494 = vmatpush1.bf16.msra.mxu0 0
    %495 = vmatprep.subr.bf16.mxu0 0
    %496 = vmatpush1.bf16.msra.mxu0 0
    %497 = vmatprep.subr.bf16.mxu0 0
    %498 = vmatpush1.bf16.msra.mxu0 0
    %499 = vmatprep.mubr.bf16.mxu0 0
    %500 = vmatmul.mubr.bf16.gmra.mrb[0].mxu0 %v462
    %v501 = vpop.f32.mrb[0].mxu0
    %v502 = vadd.f32 %v452, %v501
    %v503 = vpop.f32.mrb[0].mxu0
    %v504 = vpop.f32.mrb[0].mxu0
    %v505 = vadd.f32 %v452, %v504
    %v506 = vpop.f32.mrb[0].mxu0
    %507 = vmatprep.mubr.bf16.mxu0 0
    %508 = vmatmul.mubr.bf16.gmra.mrb[0].mxu0 %v465
    %v509 = vpop.f32.mrb[0].mxu0
    %v510 = vadd.f32 %v452, %v509
    %v511 = vpop.f32.mrb[0].mxu0
    %v512 = vpop.f32.mrb[0].mxu0
    %v513 = vadd.f32 %v452, %v512
    %v514 = vpop.f32.mrb[0].mxu0
    %515 = vdwg.mxu0
    %v516 = vld [vmem:[%s4 + $0x18] sm:$0x1]
    %518 = vrot.lane.b32.xlu0 %v41, 32
    %v519 = vpop.permute.xlu0 %518
    %v521 = vmul.f32 %v432, %v519
    %v522 = vmul.f32 %v435, %v519
    %v523 = vmul.f32 %v440, %v519
    %v524 = vmul.f32 %v443, %v519
    %526 = vrot.lane.b32.xlu0 %v46, 32
    %v527 = vpop.permute.xlu0 %526
    %v529 = vmul.f32 %v432, %v527
    %v530 = vmul.f32 %v435, %v527
    %v531 = vmul.f32 %v440, %v527
    %v532 = vmul.f32 %v443, %v527
    %534 = vrot.lane.b32.xlu0 %v51, 32
    %v535 = vpop.permute.xlu0 %534
    %v537 = vmul.f32 %v432, %v535
    %v538 = vmul.f32 %v435, %v535
    %v539 = vmul.f32 %v440, %v535
    %v540 = vmul.f32 %v443, %v535
    %542 = vrot.lane.b32.xlu0 %v56, 32
    %v543 = vpop.permute.xlu0 %542
    %v545 = vmul.f32 %v432, %v543
    %v546 = vmul.f32 %v435, %v543
    %v547 = vmul.f32 %v440, %v543
    %v548 = vmul.f32 %v443, %v543
    %v549 = vmul.f32 %v502, %v41
    %v550 = vmul.f32 %v505, %v41
    %v551 = vmul.f32 %v510, %v41
    %v552 = vmul.f32 %v513, %v41
    %v553 = vmul.f32 %v502, %v46
    %v554 = vmul.f32 %v505, %v46
    %v555 = vmul.f32 %v510, %v46
    %v556 = vmul.f32 %v513, %v46
    %v557 = vmul.f32 %v502, %v51
    %v558 = vmul.f32 %v505, %v51
    %v559 = vmul.f32 %v510, %v51
    %v560 = vmul.f32 %v513, %v51
    %v561 = vmul.f32 %v502, %v56
    %v562 = vmul.f32 %v505, %v56
    %v563 = vmul.f32 %v510, %v56
    %v564 = vmul.f32 %v513, %v56
    %v565 = vpack.c.bf16 %v435, %v432
    %v566 = vpack.c.bf16 %v443, %v440
    %v567 = vpack.c.bf16 %v522, %v521
    %v568 = vpack.c.bf16 %v530, %v529
    %v569 = vpack.c.bf16 %v538, %v537
    %v570 = vpack.c.bf16 %v546, %v545
    %v571 = vpack.c.bf16 %v524, %v523
    %v572 = vpack.c.bf16 %v532, %v531
    %v573 = vpack.c.bf16 %v540, %v539
    %v574 = vpack.c.bf16 %v548, %v547
    %579 = vrot.lane.b32.xlu0 %v567, 96
    %v580 = vpop.permute.xlu0 %579
    %581 = vrot.lane.b32.xlu0 %v568, 96
    %v582 = vpop.permute.xlu0 %581
    %583 = vrot.lane.b32.xlu0 %v569, 96
    %v584 = vpop.permute.xlu0 %583
    %585 = vrot.lane.b32.xlu0 %v570, 96
    %v586 = vpop.permute.xlu0 %585
    %v588 = vsel %vm304, %v565, 0
    %v591 = vsel %vm304, %v580, 0
    %v594 = vsel %vm304, %v582, 0
    %v597 = vsel %vm304, %v584, 0
    %v600 = vsel %vm304, %v586, 0
    %602 = vmatprep.subr.bf16.mxu0 0
    %603 = vmatpush1.bf16.xpose.msra.mxu0 %v591
    %604 = vmatprep.subr.bf16.mxu0 0
    %605 = vmatpush1.bf16.xpose.msra.mxu0 %v594
    %606 = vmatprep.subr.bf16.mxu0 0
    %607 = vmatpush1.bf16.xpose.msra.mxu0 %v597
    %608 = vmatprep.subr.bf16.mxu0 0
    %609 = vmatpush1.bf16.xpose.msra.mxu0 %v600
    %610 = vmatprep.subr.bf16.mxu0 0
    %611 = vmatpush1.bf16.xpose.msra.mxu0 0
    %612 = vmatprep.subr.bf16.mxu0 0
    %613 = vmatpush1.bf16.xpose.msra.mxu0 0
    %614 = vmatprep.subr.bf16.mxu0 0
    %615 = vmatpush1.bf16.xpose.msra.mxu0 0
    %616 = vmatprep.subr.bf16.mxu0 0
    %617 = vmatpush1.bf16.xpose.msra.mxu0 0
    %618 = vmatprep.subr.bf16.mxu0 0
    %619 = vmatpush1.bf16.xpose.msra.mxu0 0
    %620 = vmatprep.subr.bf16.mxu0 0
    %621 = vmatpush1.bf16.xpose.msra.mxu0 0
    %622 = vmatprep.subr.bf16.mxu0 0
    %623 = vmatpush1.bf16.xpose.msra.mxu0 0
    %624 = vmatprep.subr.bf16.mxu0 0
    %625 = vmatpush1.bf16.xpose.msra.mxu0 0
    %626 = vmatprep.subr.bf16.mxu0 0
    %627 = vmatpush1.bf16.xpose.msra.mxu0 0
    %628 = vmatprep.subr.bf16.mxu0 0
    %629 = vmatpush1.bf16.xpose.msra.mxu0 0
    %630 = vmatprep.subr.bf16.mxu0 0
    %631 = vmatpush1.bf16.xpose.msra.mxu0 0
    %632 = vmatprep.subr.bf16.mxu0 0
    %633 = vmatpush1.bf16.xpose.msra.mxu0 0
    %634 = vmatprep.mubr.bf16.mxu0 0
    %635 = vmatmul.mubr.bf16.gmra.mrb[0].mxu0 %v588
    %v636 = vpop.f32.mrb[0].mxu0
    %v637 = vadd.f32 0.0, %v636
    %v638 = vpop.f32.mrb[0].mxu0
    %v639 = vpop.f32.mrb[0].mxu0
    %v640 = vadd.f32 0.0, %v639
    %v641 = vpop.f32.mrb[0].mxu0
    %642 = vdwg.mxu0
    %647 = vrot.lane.b32.xlu0 %v571, 96
    %v648 = vpop.permute.xlu0 %647
    %649 = vrot.lane.b32.xlu0 %v572, 96
    %v650 = vpop.permute.xlu0 %649
    %651 = vrot.lane.b32.xlu0 %v573, 96
    %v652 = vpop.permute.xlu0 %651
    %653 = vrot.lane.b32.xlu0 %v574, 96
    %v654 = vpop.permute.xlu0 %653
    %v656 = vsel %vm304, %v566, 0
    %v659 = vsel %vm304, %v648, 0
    %v662 = vsel %vm304, %v650, 0
    %v665 = vsel %vm304, %v652, 0
    %v668 = vsel %vm304, %v654, 0
    %670 = vmatprep.subr.bf16.mxu0 0
    %671 = vmatpush1.bf16.xpose.msra.mxu0 %v659
    %672 = vmatprep.subr.bf16.mxu0 0
    %673 = vmatpush1.bf16.xpose.msra.mxu0 %v662
    %674 = vmatprep.subr.bf16.mxu0 0
    %675 = vmatpush1.bf16.xpose.msra.mxu0 %v665
    %676 = vmatprep.subr.bf16.mxu0 0
    %677 = vmatpush1.bf16.xpose.msra.mxu0 %v668
    %678 = vmatprep.subr.bf16.mxu0 0
    %679 = vmatpush1.bf16.xpose.msra.mxu0 0
    %680 = vmatprep.subr.bf16.mxu0 0
    %681 = vmatpush1.bf16.xpose.msra.mxu0 0
    %682 = vmatprep.subr.bf16.mxu0 0
    %683 = vmatpush1.bf16.xpose.msra.mxu0 0
    %684 = vmatprep.subr.bf16.mxu0 0
    %685 = vmatpush1.bf16.xpose.msra.mxu0 0
    %686 = vmatprep.subr.bf16.mxu0 0
    %687 = vmatpush1.bf16.xpose.msra.mxu0 0
    %688 = vmatprep.subr.bf16.mxu0 0
    %689 = vmatpush1.bf16.xpose.msra.mxu0 0
    %690 = vmatprep.subr.bf16.mxu0 0
    %691 = vmatpush1.bf16.xpose.msra.mxu0 0
    %692 = vmatprep.subr.bf16.mxu0 0
    %693 = vmatpush1.bf16.xpose.msra.mxu0 0
    %694 = vmatprep.subr.bf16.mxu0 0
    %695 = vmatpush1.bf16.xpose.msra.mxu0 0
    %696 = vmatprep.subr.bf16.mxu0 0
    %697 = vmatpush1.bf16.xpose.msra.mxu0 0
    %698 = vmatprep.subr.bf16.mxu0 0
    %699 = vmatpush1.bf16.xpose.msra.mxu0 0
    %700 = vmatprep.subr.bf16.mxu0 0
    %701 = vmatpush1.bf16.xpose.msra.mxu0 0
    %702 = vmatprep.mubr.bf16.mxu0 0
    %703 = vmatmul.mubr.bf16.gmra.mrb[0].mxu0 %v656
    %v704 = vpop.f32.mrb[0].mxu0
    %v705 = vadd.f32 0.0, %v704
    %v706 = vpop.f32.mrb[0].mxu0
    %v707 = vpop.f32.mrb[0].mxu0
    %v708 = vadd.f32 0.0, %v707
    %v709 = vpop.f32.mrb[0].mxu0
    %710 = vdwg.mxu0
    %v711 = vsel %vm156, %v637, -inf
    %712 = vmax.xlane.f32.xlu0 %v711
    %v713 = vpop.xlane.xlu0 %712
    %v714 = vsel %vm156, %v640, -inf
    %715 = vmax.xlane.f32.xlu0 %v714
    %v716 = vpop.xlane.xlu0 %715
    %v717 = vsel %vm156, %v705, -inf
    %718 = vmax.xlane.f32.xlu0 %v717
    %v719 = vpop.xlane.xlu0 %718
    %v720 = vsel %vm156, %v708, -inf
    %721 = vmax.xlane.f32.xlu0 %v720
    %v722 = vpop.xlane.xlu0 %721
    %v723 = vsub.f32 %v637, %v713
    %v724 = vsub.f32 %v640, %v716
    %v725 = vsub.f32 %v705, %v719
    %v726 = vsub.f32 %v708, %v722
    %v727 = vmul.f32 %v723, 1.442695
    %v728 = vpow.pop %v727
    %v729 = vmul.f32 %v724, 1.442695
    %v730 = vpow.pop %v729
    %v731 = vmul.f32 %v725, 1.442695
    %v732 = vpow.pop %v731
    %v733 = vmul.f32 %v726, 1.442695
    %v734 = vpow.pop %v733
    %vm735 = vcmask 130048
    %v736 = vsel %vm735, %v728, 0.0
    %737 = vadd.xlane.f32.xlu0 %v736
    %v738 = vpop.xlane.xlu0 %737
    %v739 = vsel %vm735, %v730, 0.0
    %740 = vadd.xlane.f32.xlu0 %v739
    %v741 = vpop.xlane.xlu0 %740
    %v742 = vsel %vm735, %v732, 0.0
    %743 = vadd.xlane.f32.xlu0 %v742
    %v744 = vpop.xlane.xlu0 %743
    %v745 = vsel %vm735, %v734, 0.0
    %746 = vadd.xlane.f32.xlu0 %v745
    %v747 = vpop.xlane.xlu0 %746
    %v748 = vrcp.pop %v738
    %v749 = vrcp.pop %v741
    %v750 = vrcp.pop %v744
    %v751 = vrcp.pop %v747
    %756 = vrot.lane.b32.xlu0 %v728, 112
    %v757 = vpop.permute.xlu0 %756
    %758 = vrot.lane.b32.xlu0 %v730, 112
    %v759 = vpop.permute.xlu0 %758
    %760 = vrot.lane.b32.xlu0 %v732, 112
    %v761 = vpop.permute.xlu0 %760
    %762 = vrot.lane.b32.xlu0 %v734, 112
    %v763 = vpop.permute.xlu0 %762
    %v768 = vsel %vm735, %v757, 0.0
    %769 = vadd.xlane.f32.xlu0 %v768
    %v770 = vpop.xlane.xlu0 %769
    %v771 = vsel %vm735, %v759, 0.0
    %772 = vadd.xlane.f32.xlu0 %v771
    %v773 = vpop.xlane.xlu0 %772
    %v774 = vsel %vm735, %v761, 0.0
    %775 = vadd.xlane.f32.xlu0 %v774
    %v776 = vpop.xlane.xlu0 %775
    %v777 = vsel %vm735, %v763, 0.0
    %778 = vadd.xlane.f32.xlu0 %v777
    %v779 = vpop.xlane.xlu0 %778
    %v780 = vrcp.pop %v770
    %v781 = vrcp.pop %v773
    %v782 = vrcp.pop %v776
    %v783 = vrcp.pop %v779
    %784 = vrot.lane.b32.xlu0 %v728, 96
    %v785 = vpop.permute.xlu0 %784
    %786 = vrot.lane.b32.xlu0 %v730, 96
    %v787 = vpop.permute.xlu0 %786
    %788 = vrot.lane.b32.xlu0 %v732, 96
    %v789 = vpop.permute.xlu0 %788
    %790 = vrot.lane.b32.xlu0 %v734, 96
    %v791 = vpop.permute.xlu0 %790
    %v796 = vsel %vm735, %v785, 0.0
    %797 = vadd.xlane.f32.xlu0 %v796
    %v798 = vpop.xlane.xlu0 %797
    %v799 = vsel %vm735, %v787, 0.0
    %800 = vadd.xlane.f32.xlu0 %v799
    %v801 = vpop.xlane.xlu0 %800
    %v802 = vsel %vm735, %v789, 0.0
    %803 = vadd.xlane.f32.xlu0 %v802
    %v804 = vpop.xlane.xlu0 %803
    %v805 = vsel %vm735, %v791, 0.0
    %806 = vadd.xlane.f32.xlu0 %v805
    %v807 = vpop.xlane.xlu0 %806
    %v808 = vrcp.pop %v798
    %v809 = vrcp.pop %v801
    %v810 = vrcp.pop %v804
    %v811 = vrcp.pop %v807
    %812 = vrot.lane.b32.xlu0 %v728, 80
    %v813 = vpop.permute.xlu0 %812
    %814 = vrot.lane.b32.xlu0 %v730, 80
    %v815 = vpop.permute.xlu0 %814
    %816 = vrot.lane.b32.xlu0 %v732, 80
    %v817 = vpop.permute.xlu0 %816
    %818 = vrot.lane.b32.xlu0 %v734, 80
    %v819 = vpop.permute.xlu0 %818
    %v824 = vsel %vm735, %v813, 0.0
    %825 = vadd.xlane.f32.xlu0 %v824
    %v826 = vpop.xlane.xlu0 %825
    %v827 = vsel %vm735, %v815, 0.0
    %828 = vadd.xlane.f32.xlu0 %v827
    %v829 = vpop.xlane.xlu0 %828
    %v830 = vsel %vm735, %v817, 0.0
    %831 = vadd.xlane.f32.xlu0 %v830
    %v832 = vpop.xlane.xlu0 %831
    %v833 = vsel %vm735, %v819, 0.0
    %834 = vadd.xlane.f32.xlu0 %v833
    %v835 = vpop.xlane.xlu0 %834
    %v836 = vrcp.pop %v826
    %v837 = vrcp.pop %v829
    %v838 = vrcp.pop %v832
    %v839 = vrcp.pop %v835
    %vm840 = vcmask 64512
    %v841 = vsel %vm840, %v748, %v780
    %v842 = vsel %vm840, %v749, %v781
    %v843 = vsel %vm840, %v750, %v782
    %v844 = vsel %vm840, %v751, %v783
    %v845 = vsel %vm735, %v841, %v808
    %v846 = vsel %vm735, %v842, %v809
    %v847 = vsel %vm735, %v843, %v810
    %v848 = vsel %vm735, %v844, %v811
    %vm849 = vcmask 195584
    %v850 = vsel %vm849, %v845, %v836
    %v851 = vsel %vm849, %v846, %v837
    %v852 = vsel %vm849, %v847, %v838
    %v853 = vsel %vm849, %v848, %v839
    %v854 = vpack.c.bf16 %v730, %v728
    %v855 = vpack.c.bf16 %v734, %v732
    %v856 = vpack.c.bf16 %v550, %v549
    %v857 = vpack.c.bf16 %v554, %v553
    %v858 = vpack.c.bf16 %v558, %v557
    %v859 = vpack.c.bf16 %v562, %v561
    %v860 = vpack.c.bf16 %v552, %v551
    %v861 = vpack.c.bf16 %v556, %v555
    %v862 = vpack.c.bf16 %v560, %v559
    %v863 = vpack.c.bf16 %v564, %v563
    %v865 = vsel %vm156, %v854, 0
    %867 = vmatprep.subr.bf16.mxu0 0
    %868 = vmatpush1.bf16.msra.mxu0 %v856
    %869 = vmatprep.subr.bf16.mxu0 0
    %870 = vmatpush1.bf16.msra.mxu0 %v857
    %871 = vmatprep.subr.bf16.mxu0 0
    %872 = vmatpush1.bf16.msra.mxu0 %v858
    %873 = vmatprep.subr.bf16.mxu0 0
    %874 = vmatpush1.bf16.msra.mxu0 %v859
    %875 = vmatprep.subr.bf16.mxu0 0
    %876 = vmatpush1.bf16.msra.mxu0 0
    %877 = vmatprep.subr.bf16.mxu0 0
    %878 = vmatpush1.bf16.msra.mxu0 0
    %879 = vmatprep.subr.bf16.mxu0 0
    %880 = vmatpush1.bf16.msra.mxu0 0
    %881 = vmatprep.subr.bf16.mxu0 0
    %882 = vmatpush1.bf16.msra.mxu0 0
    %883 = vmatprep.subr.bf16.mxu0 0
    %884 = vmatpush1.bf16.msra.mxu0 0
    %885 = vmatprep.subr.bf16.mxu0 0
    %886 = vmatpush1.bf16.msra.mxu0 0
    %887 = vmatprep.subr.bf16.mxu0 0
    %888 = vmatpush1.bf16.msra.mxu0 0
    %889 = vmatprep.subr.bf16.mxu0 0
    %890 = vmatpush1.bf16.msra.mxu0 0
    %891 = vmatprep.subr.bf16.mxu0 0
    %892 = vmatpush1.bf16.msra.mxu0 0
    %893 = vmatprep.subr.bf16.mxu0 0
    %894 = vmatpush1.bf16.msra.mxu0 0
    %895 = vmatprep.subr.bf16.mxu0 0
    %896 = vmatpush1.bf16.msra.mxu0 0
    %897 = vmatprep.subr.bf16.mxu0 0
    %898 = vmatpush1.bf16.msra.mxu0 0
    %899 = vmatprep.mubr.bf16.mxu0 0
    %900 = vmatmul.mubr.bf16.gmra.mrb[0].mxu0 %v865
    %v901 = vpop.f32.mrb[0].mxu0
    %v902 = vadd.f32 0.0, %v901
    %v903 = vpop.f32.mrb[0].mxu0
    %v904 = vpop.f32.mrb[0].mxu0
    %v905 = vadd.f32 0.0, %v904
    %v906 = vpop.f32.mrb[0].mxu0
    %907 = vdwg.mxu0
    %v909 = vsel %vm156, %v855, 0
    %911 = vmatprep.subr.bf16.mxu0 0
    %912 = vmatpush1.bf16.msra.mxu0 %v860
    %913 = vmatprep.subr.bf16.mxu0 0
    %914 = vmatpush1.bf16.msra.mxu0 %v861
    %915 = vmatprep.subr.bf16.mxu0 0
    %916 = vmatpush1.bf16.msra.mxu0 %v862
    %917 = vmatprep.subr.bf16.mxu0 0
    %918 = vmatpush1.bf16.msra.mxu0 %v863
    %919 = vmatprep.subr.bf16.mxu0 0
    %920 = vmatpush1.bf16.msra.mxu0 0
    %921 = vmatprep.subr.bf16.mxu0 0
    %922 = vmatpush1.bf16.msra.mxu0 0
    %923 = vmatprep.subr.bf16.mxu0 0
    %924 = vmatpush1.bf16.msra.mxu0 0
    %925 = vmatprep.subr.bf16.mxu0 0
    %926 = vmatpush1.bf16.msra.mxu0 0
    %927 = vmatprep.subr.bf16.mxu0 0
    %928 = vmatpush1.bf16.msra.mxu0 0
    %929 = vmatprep.subr.bf16.mxu0 0
    %930 = vmatpush1.bf16.msra.mxu0 0
    %931 = vmatprep.subr.bf16.mxu0 0
    %932 = vmatpush1.bf16.msra.mxu0 0
    %933 = vmatprep.subr.bf16.mxu0 0
    %934 = vmatpush1.bf16.msra.mxu0 0
    %935 = vmatprep.subr.bf16.mxu0 0
    %936 = vmatpush1.bf16.msra.mxu0 0
    %937 = vmatprep.subr.bf16.mxu0 0
    %938 = vmatpush1.bf16.msra.mxu0 0
    %939 = vmatprep.subr.bf16.mxu0 0
    %940 = vmatpush1.bf16.msra.mxu0 0
    %941 = vmatprep.subr.bf16.mxu0 0
    %942 = vmatpush1.bf16.msra.mxu0 0
    %943 = vmatprep.mubr.bf16.mxu0 0
    %944 = vmatmul.mubr.bf16.gmra.mrb[0].mxu0 %v909
    %v945 = vpop.f32.mrb[0].mxu0
    %v946 = vadd.f32 0.0, %v945
    %v947 = vpop.f32.mrb[0].mxu0
    %v948 = vpop.f32.mrb[0].mxu0
    %v949 = vadd.f32 0.0, %v948
    %v950 = vpop.f32.mrb[0].mxu0
    %951 = vdwg.mxu0
    %v952 = vmul.f32 %v902, %v850
    %v953 = vmul.f32 %v905, %v851
    %v954 = vmul.f32 %v946, %v852
    %v955 = vmul.f32 %v949, %v853
    %v956 = vpack.c.bf16 %v953, %v952
    %v957 = vpack.c.bf16 %v955, %v954
    %v958 = vlaneseq
    %v959 = vshrl.u32 %v958, 7
    %v960 = vsub.s32 0, %v959
    %v961 = vrot.slane %v516, %v960
    %962 = vrot.lane.b32.xlu0 %v384, 32
    %v963 = vpop.permute.xlu0 %962
    %964 = vrot.lane.b32.xlu0 %v385, 32
    %v965 = vpop.permute.xlu0 %964
    %v969 = vsel %vm304, %v956, 0
    %v972 = vsel %vm304, %v957, 0
    %974 = vmatprep.subr.bf16.mxu0 0
    %975 = vmatpush1.bf16.msra.mxu0 %v963
    %976 = vmatprep.subr.bf16.mxu0 0
    %977 = vmatpush1.bf16.msra.mxu0 %v965
    %978 = vmatprep.subr.bf16.mxu0 0
    %979 = vmatpush1.bf16.msra.mxu0 0
    %980 = vmatprep.subr.bf16.mxu0 0
    %981 = vmatpush1.bf16.msra.mxu0 0
    %982 = vmatprep.subr.bf16.mxu0 0
    %983 = vmatpush1.bf16.msra.mxu0 0
    %984 = vmatprep.subr.bf16.mxu0 0
    %985 = vmatpush1.bf16.msra.mxu0 0
    %986 = vmatprep.subr.bf16.mxu0 0
    %987 = vmatpush1.bf16.msra.mxu0 0
    %988 = vmatprep.subr.bf16.mxu0 0
    %989 = vmatpush1.bf16.msra.mxu0 0
    %990 = vmatprep.subr.bf16.mxu0 0
    %991 = vmatpush1.bf16.msra.mxu0 0
    %992 = vmatprep.subr.bf16.mxu0 0
    %993 = vmatpush1.bf16.msra.mxu0 0
    %994 = vmatprep.subr.bf16.mxu0 0
    %995 = vmatpush1.bf16.msra.mxu0 0
    %996 = vmatprep.subr.bf16.mxu0 0
    %997 = vmatpush1.bf16.msra.mxu0 0
    %998 = vmatprep.subr.bf16.mxu0 0
    %999 = vmatpush1.bf16.msra.mxu0 0
    %1000 = vmatprep.subr.bf16.mxu0 0
    %1001 = vmatpush1.bf16.msra.mxu0 0
    %1002 = vmatprep.subr.bf16.mxu0 0
    %1003 = vmatpush1.bf16.msra.mxu0 0
    %1004 = vmatprep.subr.bf16.mxu0 0
    %1005 = vmatpush1.bf16.msra.mxu0 0
    %1006 = vmatprep.mubr.bf16.mxu0 0
    %1007 = vmatmul.mubr.bf16.gmra.mrb[0].mxu0 %v969
    %v1008 = vpop.f32.mrb[0].mxu0
    %v1009 = vadd.f32 %v961, %v1008
    %v1010 = vpop.f32.mrb[0].mxu0
    %v1011 = vpop.f32.mrb[0].mxu0
    %v1012 = vadd.f32 %v961, %v1011
    %v1013 = vpop.f32.mrb[0].mxu0
    %1014 = vmatprep.mubr.bf16.mxu0 0
    %1015 = vmatmul.mubr.bf16.gmra.mrb[0].mxu0 %v972
    %v1016 = vpop.f32.mrb[0].mxu0
    %v1017 = vadd.f32 %v961, %v1016
    %v1018 = vpop.f32.mrb[0].mxu0
    %v1019 = vpop.f32.mrb[0].mxu0
    %v1020 = vadd.f32 %v961, %v1019
    %v1021 = vpop.f32.mrb[0].mxu0
    %1022 = vdwg.mxu0
    %v1023 = vadd.f32 %v282, %v1009
    %v1024 = vadd.f32 %v285, %v1012
    %v1025 = vadd.f32 %v290, %v1017
    %v1026 = vadd.f32 %v293, %v1020
    %v1027 = vld [vmem:[%s4 + $0x20] sm:$0x1]
    %v1028 = vld [vmem:[%s4 + $0x21] sm:$0x1]
    %v1029 = vsel %vm304, %v1023, 0.0
    %1030 = vadd.xlane.f32.xlu0 %v1029
    %v1031 = vpop.xlane.xlu0 %1030
    %v1032 = vsel %vm304, %v1024, 0.0
    %1033 = vadd.xlane.f32.xlu0 %v1032
    %v1034 = vpop.xlane.xlu0 %1033
    %v1035 = vsel %vm304, %v1025, 0.0
    %1036 = vadd.xlane.f32.xlu0 %v1035
    %v1037 = vpop.xlane.xlu0 %1036
    %v1038 = vsel %vm304, %v1026, 0.0
    %1039 = vadd.xlane.f32.xlu0 %v1038
    %v1040 = vpop.xlane.xlu0 %1039
    %v1041 = vmul.f32 %v1031, %v317
    %v1042 = vmul.f32 %v1034, %v317
    %v1043 = vmul.f32 %v1037, %v317
    %v1044 = vmul.f32 %v1040, %v317
    %v1045 = vsub.f32 %v1023, %v1041
    %v1046 = vsub.f32 %v1024, %v1042
    %v1047 = vsub.f32 %v1025, %v1043
    %v1048 = vsub.f32 %v1026, %v1044
    %v1049 = vmul.f32 %v1045, %v1045
    %v1050 = vmul.f32 %v1046, %v1046
    %v1051 = vmul.f32 %v1047, %v1047
    %v1052 = vmul.f32 %v1048, %v1048
    %v1053 = vsel %vm304, %v1049, 0.0
    %1054 = vadd.xlane.f32.xlu0 %v1053
    %v1055 = vpop.xlane.xlu0 %1054
    %v1056 = vsel %vm304, %v1050, 0.0
    %1057 = vadd.xlane.f32.xlu0 %v1056
    %v1058 = vpop.xlane.xlu0 %1057
    %v1059 = vsel %vm304, %v1051, 0.0
    %1060 = vadd.xlane.f32.xlu0 %v1059
    %v1061 = vpop.xlane.xlu0 %1060
    %v1062 = vsel %vm304, %v1052, 0.0
    %1063 = vadd.xlane.f32.xlu0 %v1062
    %v1064 = vpop.xlane.xlu0 %1063
    %v1065 = vmul.f32 %v1055, %v317
    %v1066 = vmul.f32 %v1058, %v317
    %v1067 = vmul.f32 %v1061, %v317
    %v1068 = vmul.f32 %v1064, %v317
    %v1069 = vadd.f32 %v1065, 1e-05
    %v1070 = vadd.f32 %v1066, 1e-05
    %v1071 = vadd.f32 %v1067, 1e-05
    %v1072 = vadd.f32 %v1068, 1e-05
    %v1073 = vrsqrt.pop %v1069
    %v1074 = vrsqrt.pop %v1070
    %v1075 = vrsqrt.pop %v1071
    %v1076 = vrsqrt.pop %v1072
    %v1077 = vmul.f32 %v1045, %v1073
    %v1078 = vmul.f32 %v1046, %v1074
    %v1079 = vmul.f32 %v1047, %v1075
    %v1080 = vmul.f32 %v1048, %v1076
    %v1081 = vlaneseq
    %v1082 = vshrl.u32 %v1081, 7
    %v1083 = vsub.s32 0, %v1082
    %v1084 = vrot.slane %v1027, %v1083
    %v1085 = vmul.f32 %v1077, %v1084
    %v1086 = vmul.f32 %v1078, %v1084
    %v1087 = vmul.f32 %v1079, %v1084
    %v1088 = vmul.f32 %v1080, %v1084
    %v1089 = vlaneseq
    %v1090 = vshrl.u32 %v1089, 7
    %v1091 = vsub.s32 0, %v1090
    %v1092 = vrot.slane %v1028, %v1091
    %v1093 = vadd.f32 %v1085, %v1092
    %v1094 = vadd.f32 %v1086, %v1092
    %v1095 = vadd.f32 %v1087, %v1092
    %v1096 = vadd.f32 %v1088, %v1092
    %v1097 = vadd.f32 %v1093, %v298
    %v1098 = vadd.f32 %v1094, %v299
    %v1099 = vadd.f32 %v1095, %v300
    %v1100 = vadd.f32 %v1096, %v301
    %v1101 = vld [vmem:[%s1 + $0x8] sm:$0xff]
    %v1102 = vld [vmem:[%s1 + $0x40] sm:$0xff]
    %v1103 = vld [vmem:[%s1 + $0x78] sm:$0xff]
    %v1104 = vld [vmem:[%s1 + $0xb0] sm:$0xff]
    %v1105 = vpack.c.bf16 %v1098, %v1097
    %v1106 = vpack.c.bf16 %v1100, %v1099
    %v1107 = vpack.c.bf16 %v1102, %v1101
    %v1108 = vpack.c.bf16 %v1104, %v1103
    %v1109 = vld [vmem:[%s4 + $0x19] sm:$0x1]
    %v1110 = vlaneseq
    %v1111 = vshrl.u32 %v1110, 7
    %v1112 = vsub.s32 0, %v1111
    %v1113 = vrot.slane %v1109, %v1112
    %v1115 = vsel %vm304, %v1105, 0
    %v1118 = vsel %vm304, %v1106, 0
    %1120 = vmatprep.subr.bf16.mxu0 0
    %1121 = vmatpush1.bf16.msra.mxu0 %v1107
    %1122 = vmatprep.subr.bf16.mxu0 0
    %1123 = vmatpush1.bf16.msra.mxu0 %v1108
    %1124 = vmatprep.subr.bf16.mxu0 0
    %1125 = vmatpush1.bf16.msra.mxu0 0
    %1126 = vmatprep.subr.bf16.mxu0 0
    %1127 = vmatpush1.bf16.msra.mxu0 0
    %1128 = vmatprep.subr.bf16.mxu0 0
    %1129 = vmatpush1.bf16.msra.mxu0 0
    %1130 = vmatprep.subr.bf16.mxu0 0
    %1131 = vmatpush1.bf16.msra.mxu0 0
    %1132 = vmatprep.subr.bf16.mxu0 0
    %1133 = vmatpush1.bf16.msra.mxu0 0
    %1134 = vmatprep.subr.bf16.mxu0 0
    %1135 = vmatpush1.bf16.msra.mxu0 0
    %1136 = vmatprep.subr.bf16.mxu0 0
    %1137 = vmatpush1.bf16.msra.mxu0 0
    %1138 = vmatprep.subr.bf16.mxu0 0
    %1139 = vmatpush1.bf16.msra.mxu0 0
    %1140 = vmatprep.subr.bf16.mxu0 0
    %1141 = vmatpush1.bf16.msra.mxu0 0
    %1142 = vmatprep.subr.bf16.mxu0 0
    %1143 = vmatpush1.bf16.msra.mxu0 0
    %1144 = vmatprep.subr.bf16.mxu0 0
    %1145 = vmatpush1.bf16.msra.mxu0 0
    %1146 = vmatprep.subr.bf16.mxu0 0
    %1147 = vmatpush1.bf16.msra.mxu0 0
    %1148 = vmatprep.subr.bf16.mxu0 0
    %1149 = vmatpush1.bf16.msra.mxu0 0
    %1150 = vmatprep.subr.bf16.mxu0 0
    %1151 = vmatpush1.bf16.msra.mxu0 0
    %1152 = vmatprep.mubr.bf16.mxu0 0
    %1153 = vmatmul.mubr.bf16.gmra.mrb[0].mxu0 %v1115
    %v1154 = vpop.f32.mrb[0].mxu0
    %v1155 = vadd.f32 %v1113, %v1154
    %v1156 = vpop.f32.mrb[0].mxu0
    %v1157 = vpop.f32.mrb[0].mxu0
    %v1158 = vadd.f32 %v1113, %v1157
    %v1159 = vpop.f32.mrb[0].mxu0
    %1160 = vmatprep.mubr.bf16.mxu0 0
    %1161 = vmatmul.mubr.bf16.gmra.mrb[0].mxu0 %v1118
    %v1162 = vpop.f32.mrb[0].mxu0
    %v1163 = vadd.f32 %v1113, %v1162
    %v1164 = vpop.f32.mrb[0].mxu0
    %v1165 = vpop.f32.mrb[0].mxu0
    %v1166 = vadd.f32 %v1113, %v1165
    %v1167 = vpop.f32.mrb[0].mxu0
    %1168 = vdwg.mxu0
    %v1169 = vpack.c.bf16 %v285, %v282
    %v1170 = vpack.c.bf16 %v293, %v290
    %v1171 = vld [vmem:[%s4 + $0x1a] sm:$0x1]
    %v1172 = vlaneseq
    %v1173 = vshrl.u32 %v1172, 7
    %v1174 = vsub.s32 0, %v1173
    %v1175 = vrot.slane %v1171, %v1174
    %1178 = vrot.lane.b32.xlu0 %v1107, 96
    %v1179 = vpop.permute.xlu0 %1178
    %1180 = vrot.lane.b32.xlu0 %v1108, 96
    %v1181 = vpop.permute.xlu0 %1180
    %v1185 = vsel %vm304, %v1169, 0
    %v1188 = vsel %vm304, %v1170, 0
    %1190 = vmatprep.subr.bf16.mxu0 0
    %1191 = vmatpush1.bf16.msra.mxu0 %v1179
    %1192 = vmatprep.subr.bf16.mxu0 0
    %1193 = vmatpush1.bf16.msra.mxu0 %v1181
    %1194 = vmatprep.subr.bf16.mxu0 0
    %1195 = vmatpush1.bf16.msra.mxu0 0
    %1196 = vmatprep.subr.bf16.mxu0 0
    %1197 = vmatpush1.bf16.msra.mxu0 0
    %1198 = vmatprep.subr.bf16.mxu0 0
    %1199 = vmatpush1.bf16.msra.mxu0 0
    %1200 = vmatprep.subr.bf16.mxu0 0
    %1201 = vmatpush1.bf16.msra.mxu0 0
    %1202 = vmatprep.subr.bf16.mxu0 0
    %1203 = vmatpush1.bf16.msra.mxu0 0
    %1204 = vmatprep.subr.bf16.mxu0 0
    %1205 = vmatpush1.bf16.msra.mxu0 0
    %1206 = vmatprep.subr.bf16.mxu0 0
    %1207 = vmatpush1.bf16.msra.mxu0 0
    %1208 = vmatprep.subr.bf16.mxu0 0
    %1209 = vmatpush1.bf16.msra.mxu0 0
    %1210 = vmatprep.subr.bf16.mxu0 0
    %1211 = vmatpush1.bf16.msra.mxu0 0
    %1212 = vmatprep.subr.bf16.mxu0 0
    %1213 = vmatpush1.bf16.msra.mxu0 0
    %1214 = vmatprep.subr.bf16.mxu0 0
    %1215 = vmatpush1.bf16.msra.mxu0 0
    %1216 = vmatprep.subr.bf16.mxu0 0
    %1217 = vmatpush1.bf16.msra.mxu0 0
    %1218 = vmatprep.subr.bf16.mxu0 0
    %1219 = vmatpush1.bf16.msra.mxu0 0
    %1220 = vmatprep.subr.bf16.mxu0 0
    %1221 = vmatpush1.bf16.msra.mxu0 0
    %1222 = vmatprep.mubr.bf16.mxu0 0
    %1223 = vmatmul.mubr.bf16.gmra.mrb[0].mxu0 %v1185
    %v1224 = vpop.f32.mrb[0].mxu0
    %v1225 = vadd.f32 %v1175, %v1224
    %v1226 = vpop.f32.mrb[0].mxu0
    %v1227 = vpop.f32.mrb[0].mxu0
    %v1228 = vadd.f32 %v1175, %v1227
    %v1229 = vpop.f32.mrb[0].mxu0
    %1230 = vmatprep.mubr.bf16.mxu0 0
    %1231 = vmatmul.mubr.bf16.gmra.mrb[0].mxu0 %v1188
    %v1232 = vpop.f32.mrb[0].mxu0
    %v1233 = vadd.f32 %v1175, %v1232
    %v1234 = vpop.f32.mrb[0].mxu0
    %v1235 = vpop.f32.mrb[0].mxu0
    %v1236 = vadd.f32 %v1175, %v1235
    %v1237 = vpop.f32.mrb[0].mxu0
    %1238 = vdwg.mxu0
    %v1239 = vld [vmem:[%s4 + $0x1b] sm:$0x1]
    %v1240 = vmul.f32 %v1225, %v41
    %v1241 = vmul.f32 %v1228, %v41
    %v1242 = vmul.f32 %v1233, %v41
    %v1243 = vmul.f32 %v1236, %v41
    %v1244 = vmul.f32 %v1225, %v46
    %v1245 = vmul.f32 %v1228, %v46
    %v1246 = vmul.f32 %v1233, %v46
    %v1247 = vmul.f32 %v1236, %v46
    %v1248 = vmul.f32 %v1225, %v51
    %v1249 = vmul.f32 %v1228, %v51
    %v1250 = vmul.f32 %v1233, %v51
    %v1251 = vmul.f32 %v1236, %v51
    %v1252 = vmul.f32 %v1225, %v56
    %v1253 = vmul.f32 %v1228, %v56
    %v1254 = vmul.f32 %v1233, %v56
    %v1255 = vmul.f32 %v1236, %v56
    %v1256 = vmul.f32 %v1225, %v519
    %v1257 = vmul.f32 %v1228, %v519
    %v1258 = vmul.f32 %v1233, %v519
    %v1259 = vmul.f32 %v1236, %v519
    %v1260 = vmul.f32 %v1225, %v527
    %v1261 = vmul.f32 %v1228, %v527
    %v1262 = vmul.f32 %v1233, %v527
    %v1263 = vmul.f32 %v1236, %v527
    %v1264 = vmul.f32 %v1225, %v535
    %v1265 = vmul.f32 %v1228, %v535
    %v1266 = vmul.f32 %v1233, %v535
    %v1267 = vmul.f32 %v1236, %v535
    %v1268 = vmul.f32 %v1225, %v543
    %v1269 = vmul.f32 %v1228, %v543
    %v1270 = vmul.f32 %v1233, %v543
    %v1271 = vmul.f32 %v1236, %v543
    %v1272 = vpack.c.bf16 %v1158, %v1155
    %v1273 = vpack.c.bf16 %v1166, %v1163
    %v1274 = vpack.c.bf16 %v1241, %v1240
    %v1275 = vpack.c.bf16 %v1245, %v1244
    %v1276 = vpack.c.bf16 %v1249, %v1248
    %v1277 = vpack.c.bf16 %v1253, %v1252
    %v1278 = vpack.c.bf16 %v1243, %v1242
    %v1279 = vpack.c.bf16 %v1247, %v1246
    %v1280 = vpack.c.bf16 %v1251, %v1250
    %v1281 = vpack.c.bf16 %v1255, %v1254
    %v1283 = vsel %vm304, %v1272, 0
    %v1286 = vsel %vm304, %v1274, 0
    %v1289 = vsel %vm304, %v1275, 0
    %v1292 = vsel %vm304, %v1276, 0
    %v1295 = vsel %vm304, %v1277, 0
    %1297 = vmatprep.subr.bf16.mxu0 0
    %1298 = vmatpush1.bf16.xpose.msra.mxu0 %v1286
    %1299 = vmatprep.subr.bf16.mxu0 0
    %1300 = vmatpush1.bf16.xpose.msra.mxu0 %v1289
    %1301 = vmatprep.subr.bf16.mxu0 0
    %1302 = vmatpush1.bf16.xpose.msra.mxu0 %v1292
    %1303 = vmatprep.subr.bf16.mxu0 0
    %1304 = vmatpush1.bf16.xpose.msra.mxu0 %v1295
    %1305 = vmatprep.subr.bf16.mxu0 0
    %1306 = vmatpush1.bf16.xpose.msra.mxu0 0
    %1307 = vmatprep.subr.bf16.mxu0 0
    %1308 = vmatpush1.bf16.xpose.msra.mxu0 0
    %1309 = vmatprep.subr.bf16.mxu0 0
    %1310 = vmatpush1.bf16.xpose.msra.mxu0 0
    %1311 = vmatprep.subr.bf16.mxu0 0
    %1312 = vmatpush1.bf16.xpose.msra.mxu0 0
    %1313 = vmatprep.subr.bf16.mxu0 0
    %1314 = vmatpush1.bf16.xpose.msra.mxu0 0
    %1315 = vmatprep.subr.bf16.mxu0 0
    %1316 = vmatpush1.bf16.xpose.msra.mxu0 0
    %1317 = vmatprep.subr.bf16.mxu0 0
    %1318 = vmatpush1.bf16.xpose.msra.mxu0 0
    %1319 = vmatprep.subr.bf16.mxu0 0
    %1320 = vmatpush1.bf16.xpose.msra.mxu0 0
    %1321 = vmatprep.subr.bf16.mxu0 0
    %1322 = vmatpush1.bf16.xpose.msra.mxu0 0
    %1323 = vmatprep.subr.bf16.mxu0 0
    %1324 = vmatpush1.bf16.xpose.msra.mxu0 0
    %1325 = vmatprep.subr.bf16.mxu0 0
    %1326 = vmatpush1.bf16.xpose.msra.mxu0 0
    %1327 = vmatprep.subr.bf16.mxu0 0
    %1328 = vmatpush1.bf16.xpose.msra.mxu0 0
    %1329 = vmatprep.mubr.bf16.mxu0 0
    %1330 = vmatmul.mubr.bf16.gmra.mrb[0].mxu0 %v1283
    %v1331 = vpop.f32.mrb[0].mxu0
    %v1332 = vadd.f32 0.0, %v1331
    %v1333 = vpop.f32.mrb[0].mxu0
    %v1334 = vpop.f32.mrb[0].mxu0
    %v1335 = vadd.f32 0.0, %v1334
    %v1336 = vpop.f32.mrb[0].mxu0
    %1337 = vdwg.mxu0
    %v1339 = vsel %vm304, %v1273, 0
    %v1342 = vsel %vm304, %v1278, 0
    %v1345 = vsel %vm304, %v1279, 0
    %v1348 = vsel %vm304, %v1280, 0
    %v1351 = vsel %vm304, %v1281, 0
    %1353 = vmatprep.subr.bf16.mxu0 0
    %1354 = vmatpush1.bf16.xpose.msra.mxu0 %v1342
    %1355 = vmatprep.subr.bf16.mxu0 0
    %1356 = vmatpush1.bf16.xpose.msra.mxu0 %v1345
    %1357 = vmatprep.subr.bf16.mxu0 0
    %1358 = vmatpush1.bf16.xpose.msra.mxu0 %v1348
    %1359 = vmatprep.subr.bf16.mxu0 0
    %1360 = vmatpush1.bf16.xpose.msra.mxu0 %v1351
    %1361 = vmatprep.subr.bf16.mxu0 0
    %1362 = vmatpush1.bf16.xpose.msra.mxu0 0
    %1363 = vmatprep.subr.bf16.mxu0 0
    %1364 = vmatpush1.bf16.xpose.msra.mxu0 0
    %1365 = vmatprep.subr.bf16.mxu0 0
    %1366 = vmatpush1.bf16.xpose.msra.mxu0 0
    %1367 = vmatprep.subr.bf16.mxu0 0
    %1368 = vmatpush1.bf16.xpose.msra.mxu0 0
    %1369 = vmatprep.subr.bf16.mxu0 0
    %1370 = vmatpush1.bf16.xpose.msra.mxu0 0
    %1371 = vmatprep.subr.bf16.mxu0 0
    %1372 = vmatpush1.bf16.xpose.msra.mxu0 0
    %1373 = vmatprep.subr.bf16.mxu0 0
    %1374 = vmatpush1.bf16.xpose.msra.mxu0 0
    %1375 = vmatprep.subr.bf16.mxu0 0
    %1376 = vmatpush1.bf16.xpose.msra.mxu0 0
    %1377 = vmatprep.subr.bf16.mxu0 0
    %1378 = vmatpush1.bf16.xpose.msra.mxu0 0
    %1379 = vmatprep.subr.bf16.mxu0 0
    %1380 = vmatpush1.bf16.xpose.msra.mxu0 0
    %1381 = vmatprep.subr.bf16.mxu0 0
    %1382 = vmatpush1.bf16.xpose.msra.mxu0 0
    %1383 = vmatprep.subr.bf16.mxu0 0
    %1384 = vmatpush1.bf16.xpose.msra.mxu0 0
    %1385 = vmatprep.mubr.bf16.mxu0 0
    %1386 = vmatmul.mubr.bf16.gmra.mrb[0].mxu0 %v1339
    %v1387 = vpop.f32.mrb[0].mxu0
    %v1388 = vadd.f32 0.0, %v1387
    %v1389 = vpop.f32.mrb[0].mxu0
    %v1390 = vpop.f32.mrb[0].mxu0
    %v1391 = vadd.f32 0.0, %v1390
    %v1392 = vpop.f32.mrb[0].mxu0
    %1393 = vdwg.mxu0
    %v1394 = vsel %vm156, %v1332, -inf
    %1395 = vmax.xlane.f32.xlu0 %v1394
    %v1396 = vpop.xlane.xlu0 %1395
    %v1397 = vsel %vm156, %v1335, -inf
    %1398 = vmax.xlane.f32.xlu0 %v1397
    %v1399 = vpop.xlane.xlu0 %1398
    %v1400 = vsel %vm156, %v1388, -inf
    %1401 = vmax.xlane.f32.xlu0 %v1400
    %v1402 = vpop.xlane.xlu0 %1401
    %v1403 = vsel %vm156, %v1391, -inf
    %1404 = vmax.xlane.f32.xlu0 %v1403
    %v1405 = vpop.xlane.xlu0 %1404
    %v1406 = vsub.f32 %v1332, %v1396
    %v1407 = vsub.f32 %v1335, %v1399
    %v1408 = vsub.f32 %v1388, %v1402
    %v1409 = vsub.f32 %v1391, %v1405
    %v1410 = vmul.f32 %v1406, 1.442695
    %v1411 = vpow.pop %v1410
    %v1412 = vmul.f32 %v1407, 1.442695
    %v1413 = vpow.pop %v1412
    %v1414 = vmul.f32 %v1408, 1.442695
    %v1415 = vpow.pop %v1414
    %v1416 = vmul.f32 %v1409, 1.442695
    %v1417 = vpow.pop %v1416
    %v1418 = vsel %vm735, %v1411, 0.0
    %1419 = vadd.xlane.f32.xlu0 %v1418
    %v1420 = vpop.xlane.xlu0 %1419
    %v1421 = vsel %vm735, %v1413, 0.0
    %1422 = vadd.xlane.f32.xlu0 %v1421
    %v1423 = vpop.xlane.xlu0 %1422
    %v1424 = vsel %vm735, %v1415, 0.0
    %1425 = vadd.xlane.f32.xlu0 %v1424
    %v1426 = vpop.xlane.xlu0 %1425
    %v1427 = vsel %vm735, %v1417, 0.0
    %1428 = vadd.xlane.f32.xlu0 %v1427
    %v1429 = vpop.xlane.xlu0 %1428
    %v1430 = vrcp.pop %v1420
    %v1431 = vrcp.pop %v1423
    %v1432 = vrcp.pop %v1426
    %v1433 = vrcp.pop %v1429
    %1438 = vrot.lane.b32.xlu0 %v1411, 112
    %v1439 = vpop.permute.xlu0 %1438
    %1440 = vrot.lane.b32.xlu0 %v1413, 112
    %v1441 = vpop.permute.xlu0 %1440
    %1442 = vrot.lane.b32.xlu0 %v1415, 112
    %v1443 = vpop.permute.xlu0 %1442
    %1444 = vrot.lane.b32.xlu0 %v1417, 112
    %v1445 = vpop.permute.xlu0 %1444
    %v1450 = vsel %vm735, %v1439, 0.0
    %1451 = vadd.xlane.f32.xlu0 %v1450
    %v1452 = vpop.xlane.xlu0 %1451
    %v1453 = vsel %vm735, %v1441, 0.0
    %1454 = vadd.xlane.f32.xlu0 %v1453
    %v1455 = vpop.xlane.xlu0 %1454
    %v1456 = vsel %vm735, %v1443, 0.0
    %1457 = vadd.xlane.f32.xlu0 %v1456
    %v1458 = vpop.xlane.xlu0 %1457
    %v1459 = vsel %vm735, %v1445, 0.0
    %1460 = vadd.xlane.f32.xlu0 %v1459
    %v1461 = vpop.xlane.xlu0 %1460
    %v1462 = vrcp.pop %v1452
    %v1463 = vrcp.pop %v1455
    %v1464 = vrcp.pop %v1458
    %v1465 = vrcp.pop %v1461
    %1466 = vrot.lane.b32.xlu0 %v1411, 96
    %v1467 = vpop.permute.xlu0 %1466
    %1468 = vrot.lane.b32.xlu0 %v1413, 96
    %v1469 = vpop.permute.xlu0 %1468
    %1470 = vrot.lane.b32.xlu0 %v1415, 96
    %v1471 = vpop.permute.xlu0 %1470
    %1472 = vrot.lane.b32.xlu0 %v1417, 96
    %v1473 = vpop.permute.xlu0 %1472
    %v1478 = vsel %vm735, %v1467, 0.0
    %1479 = vadd.xlane.f32.xlu0 %v1478
    %v1480 = vpop.xlane.xlu0 %1479
    %v1481 = vsel %vm735, %v1469, 0.0
    %1482 = vadd.xlane.f32.xlu0 %v1481
    %v1483 = vpop.xlane.xlu0 %1482
    %v1484 = vsel %vm735, %v1471, 0.0
    %1485 = vadd.xlane.f32.xlu0 %v1484
    %v1486 = vpop.xlane.xlu0 %1485
    %v1487 = vsel %vm735, %v1473, 0.0
    %1488 = vadd.xlane.f32.xlu0 %v1487
    %v1489 = vpop.xlane.xlu0 %1488
    %v1490 = vrcp.pop %v1480
    %v1491 = vrcp.pop %v1483
    %v1492 = vrcp.pop %v1486
    %v1493 = vrcp.pop %v1489
    %1494 = vrot.lane.b32.xlu0 %v1411, 80
    %v1495 = vpop.permute.xlu0 %1494
    %1496 = vrot.lane.b32.xlu0 %v1413, 80
    %v1497 = vpop.permute.xlu0 %1496
    %1498 = vrot.lane.b32.xlu0 %v1415, 80
    %v1499 = vpop.permute.xlu0 %1498
    %1500 = vrot.lane.b32.xlu0 %v1417, 80
    %v1501 = vpop.permute.xlu0 %1500
    %v1506 = vsel %vm735, %v1495, 0.0
    %1507 = vadd.xlane.f32.xlu0 %v1506
    %v1508 = vpop.xlane.xlu0 %1507
    %v1509 = vsel %vm735, %v1497, 0.0
    %1510 = vadd.xlane.f32.xlu0 %v1509
    %v1511 = vpop.xlane.xlu0 %1510
    %v1512 = vsel %vm735, %v1499, 0.0
    %1513 = vadd.xlane.f32.xlu0 %v1512
    %v1514 = vpop.xlane.xlu0 %1513
    %v1515 = vsel %vm735, %v1501, 0.0
    %1516 = vadd.xlane.f32.xlu0 %v1515
    %v1517 = vpop.xlane.xlu0 %1516
    %v1518 = vrcp.pop %v1508
    %v1519 = vrcp.pop %v1511
    %v1520 = vrcp.pop %v1514
    %v1521 = vrcp.pop %v1517
    %v1522 = vsel %vm840, %v1430, %v1462
    %v1523 = vsel %vm840, %v1431, %v1463
    %v1524 = vsel %vm840, %v1432, %v1464
    %v1525 = vsel %vm840, %v1433, %v1465
    %v1526 = vsel %vm735, %v1522, %v1490
    %v1527 = vsel %vm735, %v1523, %v1491
    %v1528 = vsel %vm735, %v1524, %v1492
    %v1529 = vsel %vm735, %v1525, %v1493
    %v1530 = vsel %vm849, %v1526, %v1518
    %v1531 = vsel %vm849, %v1527, %v1519
    %v1532 = vsel %vm849, %v1528, %v1520
    %v1533 = vsel %vm849, %v1529, %v1521
    %v1534 = vpack.c.bf16 %v1413, %v1411
    %v1535 = vpack.c.bf16 %v1417, %v1415
    %v1536 = vpack.c.bf16 %v1257, %v1256
    %v1537 = vpack.c.bf16 %v1261, %v1260
    %v1538 = vpack.c.bf16 %v1265, %v1264
    %v1539 = vpack.c.bf16 %v1269, %v1268
    %v1540 = vpack.c.bf16 %v1259, %v1258
    %v1541 = vpack.c.bf16 %v1263, %v1262
    %v1542 = vpack.c.bf16 %v1267, %v1266
    %v1543 = vpack.c.bf16 %v1271, %v1270
    %1548 = vrot.lane.b32.xlu0 %v1536, 96
    %v1549 = vpop.permute.xlu0 %1548
    %1550 = vrot.lane.b32.xlu0 %v1537, 96
    %v1551 = vpop.permute.xlu0 %1550
    %1552 = vrot.lane.b32.xlu0 %v1538, 96
    %v1553 = vpop.permute.xlu0 %1552
    %1554 = vrot.lane.b32.xlu0 %v1539, 96
    %v1555 = vpop.permute.xlu0 %1554
    %v1561 = vsel %vm156, %v1534, 0
    %1563 = vmatprep.subr.bf16.mxu0 0
    %1564 = vmatpush1.bf16.msra.mxu0 %v1549
    %1565 = vmatprep.subr.bf16.mxu0 0
    %1566 = vmatpush1.bf16.msra.mxu0 %v1551
    %1567 = vmatprep.subr.bf16.mxu0 0
    %1568 = vmatpush1.bf16.msra.mxu0 %v1553
    %1569 = vmatprep.subr.bf16.mxu0 0
    %1570 = vmatpush1.bf16.msra.mxu0 %v1555
    %1571 = vmatprep.subr.bf16.mxu0 0
    %1572 = vmatpush1.bf16.msra.mxu0 0
    %1573 = vmatprep.subr.bf16.mxu0 0
    %1574 = vmatpush1.bf16.msra.mxu0 0
    %1575 = vmatprep.subr.bf16.mxu0 0
    %1576 = vmatpush1.bf16.msra.mxu0 0
    %1577 = vmatprep.subr.bf16.mxu0 0
    %1578 = vmatpush1.bf16.msra.mxu0 0
    %1579 = vmatprep.subr.bf16.mxu0 0
    %1580 = vmatpush1.bf16.msra.mxu0 0
    %1581 = vmatprep.subr.bf16.mxu0 0
    %1582 = vmatpush1.bf16.msra.mxu0 0
    %1583 = vmatprep.subr.bf16.mxu0 0
    %1584 = vmatpush1.bf16.msra.mxu0 0
    %1585 = vmatprep.subr.bf16.mxu0 0
    %1586 = vmatpush1.bf16.msra.mxu0 0
    %1587 = vmatprep.subr.bf16.mxu0 0
    %1588 = vmatpush1.bf16.msra.mxu0 0
    %1589 = vmatprep.subr.bf16.mxu0 0
    %1590 = vmatpush1.bf16.msra.mxu0 0
    %1591 = vmatprep.subr.bf16.mxu0 0
    %1592 = vmatpush1.bf16.msra.mxu0 0
    %1593 = vmatprep.subr.bf16.mxu0 0
    %1594 = vmatpush1.bf16.msra.mxu0 0
    %1595 = vmatprep.mubr.bf16.mxu0 0
    %1596 = vmatmul.mubr.bf16.gmra.mrb[0].mxu0 %v1561
    %v1597 = vpop.f32.mrb[0].mxu0
    %v1598 = vadd.f32 0.0, %v1597
    %v1599 = vpop.f32.mrb[0].mxu0
    %v1600 = vpop.f32.mrb[0].mxu0
    %v1601 = vadd.f32 0.0, %v1600
    %v1602 = vpop.f32.mrb[0].mxu0
    %1603 = vdwg.mxu0
    %1608 = vrot.lane.b32.xlu0 %v1540, 96
    %v1609 = vpop.permute.xlu0 %1608
    %1610 = vrot.lane.b32.xlu0 %v1541, 96
    %v1611 = vpop.permute.xlu0 %1610
    %1612 = vrot.lane.b32.xlu0 %v1542, 96
    %v1613 = vpop.permute.xlu0 %1612
    %1614 = vrot.lane.b32.xlu0 %v1543, 96
    %v1615 = vpop.permute.xlu0 %1614
    %v1621 = vsel %vm156, %v1535, 0
    %1623 = vmatprep.subr.bf16.mxu0 0
    %1624 = vmatpush1.bf16.msra.mxu0 %v1609
    %1625 = vmatprep.subr.bf16.mxu0 0
    %1626 = vmatpush1.bf16.msra.mxu0 %v1611
    %1627 = vmatprep.subr.bf16.mxu0 0
    %1628 = vmatpush1.bf16.msra.mxu0 %v1613
    %1629 = vmatprep.subr.bf16.mxu0 0
    %1630 = vmatpush1.bf16.msra.mxu0 %v1615
    %1631 = vmatprep.subr.bf16.mxu0 0
    %1632 = vmatpush1.bf16.msra.mxu0 0
    %1633 = vmatprep.subr.bf16.mxu0 0
    %1634 = vmatpush1.bf16.msra.mxu0 0
    %1635 = vmatprep.subr.bf16.mxu0 0
    %1636 = vmatpush1.bf16.msra.mxu0 0
    %1637 = vmatprep.subr.bf16.mxu0 0
    %1638 = vmatpush1.bf16.msra.mxu0 0
    %1639 = vmatprep.subr.bf16.mxu0 0
    %1640 = vmatpush1.bf16.msra.mxu0 0
    %1641 = vmatprep.subr.bf16.mxu0 0
    %1642 = vmatpush1.bf16.msra.mxu0 0
    %1643 = vmatprep.subr.bf16.mxu0 0
    %1644 = vmatpush1.bf16.msra.mxu0 0
    %1645 = vmatprep.subr.bf16.mxu0 0
    %1646 = vmatpush1.bf16.msra.mxu0 0
    %1647 = vmatprep.subr.bf16.mxu0 0
    %1648 = vmatpush1.bf16.msra.mxu0 0
    %1649 = vmatprep.subr.bf16.mxu0 0
    %1650 = vmatpush1.bf16.msra.mxu0 0
    %1651 = vmatprep.subr.bf16.mxu0 0
    %1652 = vmatpush1.bf16.msra.mxu0 0
    %1653 = vmatprep.subr.bf16.mxu0 0
    %1654 = vmatpush1.bf16.msra.mxu0 0
    %1655 = vmatprep.mubr.bf16.mxu0 0
    %1656 = vmatmul.mubr.bf16.gmra.mrb[0].mxu0 %v1621
    %v1657 = vpop.f32.mrb[0].mxu0
    %v1658 = vadd.f32 0.0, %v1657
    %v1659 = vpop.f32.mrb[0].mxu0
    %v1660 = vpop.f32.mrb[0].mxu0
    %v1661 = vadd.f32 0.0, %v1660
    %v1662 = vpop.f32.mrb[0].mxu0
    %1663 = vdwg.mxu0
    %v1664 = vmul.f32 %v1598, %v1530
    %v1665 = vmul.f32 %v1601, %v1531
    %v1666 = vmul.f32 %v1658, %v1532
    %v1667 = vmul.f32 %v1661, %v1533
    %v1668 = vpack.c.bf16 %v1665, %v1664
    %v1669 = vpack.c.bf16 %v1667, %v1666
    %v1670 = vlaneseq
    %v1671 = vshrl.u32 %v1670, 7
    %v1672 = vsub.s32 0, %v1671
    %v1673 = vrot.slane %v1239, %v1672
    %1674 = vrot.lane.b32.xlu0 %v1107, 32
    %v1675 = vpop.permute.xlu0 %1674
    %1676 = vrot.lane.b32.xlu0 %v1108, 32
    %v1677 = vpop.permute.xlu0 %1676
    %v1681 = vsel %vm304, %v1668, 0
    %v1684 = vsel %vm304, %v1669, 0
    %1686 = vmatprep.subr.bf16.mxu0 0
    %1687 = vmatpush1.bf16.msra.mxu0 %v1675
    %1688 = vmatprep.subr.bf16.mxu0 0
    %1689 = vmatpush1.bf16.msra.mxu0 %v1677
    %1690 = vmatprep.subr.bf16.mxu0 0
    %1691 = vmatpush1.bf16.msra.mxu0 0
    %1692 = vmatprep.subr.bf16.mxu0 0
    %1693 = vmatpush1.bf16.msra.mxu0 0
    %1694 = vmatprep.subr.bf16.mxu0 0
    %1695 = vmatpush1.bf16.msra.mxu0 0
    %1696 = vmatprep.subr.bf16.mxu0 0
    %1697 = vmatpush1.bf16.msra.mxu0 0
    %1698 = vmatprep.subr.bf16.mxu0 0
    %1699 = vmatpush1.bf16.msra.mxu0 0
    %1700 = vmatprep.subr.bf16.mxu0 0
    %1701 = vmatpush1.bf16.msra.mxu0 0
    %1702 = vmatprep.subr.bf16.mxu0 0
    %1703 = vmatpush1.bf16.msra.mxu0 0
    %1704 = vmatprep.subr.bf16.mxu0 0
    %1705 = vmatpush1.bf16.msra.mxu0 0
    %1706 = vmatprep.subr.bf16.mxu0 0
    %1707 = vmatpush1.bf16.msra.mxu0 0
    %1708 = vmatprep.subr.bf16.mxu0 0
    %1709 = vmatpush1.bf16.msra.mxu0 0
    %1710 = vmatprep.subr.bf16.mxu0 0
    %1711 = vmatpush1.bf16.msra.mxu0 0
    %1712 = vmatprep.subr.bf16.mxu0 0
    %1713 = vmatpush1.bf16.msra.mxu0 0
    %1714 = vmatprep.subr.bf16.mxu0 0
    %1715 = vmatpush1.bf16.msra.mxu0 0
    %1716 = vmatprep.subr.bf16.mxu0 0
    %1717 = vmatpush1.bf16.msra.mxu0 0
    %1718 = vmatprep.mubr.bf16.mxu0 0
    %1719 = vmatmul.mubr.bf16.gmra.mrb[0].mxu0 %v1681
    %v1720 = vpop.f32.mrb[0].mxu0
    %v1721 = vadd.f32 %v1673, %v1720
    %v1722 = vpop.f32.mrb[0].mxu0
    %v1723 = vpop.f32.mrb[0].mxu0
    %v1724 = vadd.f32 %v1673, %v1723
    %v1725 = vpop.f32.mrb[0].mxu0
    %1726 = vmatprep.mubr.bf16.mxu0 0
    %1727 = vmatmul.mubr.bf16.gmra.mrb[0].mxu0 %v1684
    %v1728 = vpop.f32.mrb[0].mxu0
    %v1729 = vadd.f32 %v1673, %v1728
    %v1730 = vpop.f32.mrb[0].mxu0
    %v1731 = vpop.f32.mrb[0].mxu0
    %v1732 = vadd.f32 %v1673, %v1731
    %v1733 = vpop.f32.mrb[0].mxu0
    %1734 = vdwg.mxu0
    %v1735 = vadd.f32 %v1023, %v1721
    %v1736 = vadd.f32 %v1024, %v1724
    %v1737 = vadd.f32 %v1025, %v1729
    %v1738 = vadd.f32 %v1026, %v1732
    %v1739 = vld [vmem:[%s4 + $0x22] sm:$0x1]
    %v1740 = vld [vmem:[%s4 + $0x23] sm:$0x1]
    %v1741 = vsel %vm304, %v1735, 0.0
    %1742 = vadd.xlane.f32.xlu0 %v1741
    %v1743 = vpop.xlane.xlu0 %1742
    %v1744 = vsel %vm304, %v1736, 0.0
    %1745 = vadd.xlane.f32.xlu0 %v1744
    %v1746 = vpop.xlane.xlu0 %1745
    %v1747 = vsel %vm304, %v1737, 0.0
    %1748 = vadd.xlane.f32.xlu0 %v1747
    %v1749 = vpop.xlane.xlu0 %1748
    %v1750 = vsel %vm304, %v1738, 0.0
    %1751 = vadd.xlane.f32.xlu0 %v1750
    %v1752 = vpop.xlane.xlu0 %1751
    %v1753 = vmul.f32 %v1743, %v317
    %v1754 = vmul.f32 %v1746, %v317
    %v1755 = vmul.f32 %v1749, %v317
    %v1756 = vmul.f32 %v1752, %v317
    %v1757 = vsub.f32 %v1735, %v1753
    %v1758 = vsub.f32 %v1736, %v1754
    %v1759 = vsub.f32 %v1737, %v1755
    %v1760 = vsub.f32 %v1738, %v1756
    %v1761 = vmul.f32 %v1757, %v1757
    %v1762 = vmul.f32 %v1758, %v1758
    %v1763 = vmul.f32 %v1759, %v1759
    %v1764 = vmul.f32 %v1760, %v1760
    %v1765 = vsel %vm304, %v1761, 0.0
    %1766 = vadd.xlane.f32.xlu0 %v1765
    %v1767 = vpop.xlane.xlu0 %1766
    %v1768 = vsel %vm304, %v1762, 0.0
    %1769 = vadd.xlane.f32.xlu0 %v1768
    %v1770 = vpop.xlane.xlu0 %1769
    %v1771 = vsel %vm304, %v1763, 0.0
    %1772 = vadd.xlane.f32.xlu0 %v1771
    %v1773 = vpop.xlane.xlu0 %1772
    %v1774 = vsel %vm304, %v1764, 0.0
    %1775 = vadd.xlane.f32.xlu0 %v1774
    %v1776 = vpop.xlane.xlu0 %1775
    %v1777 = vmul.f32 %v1767, %v317
    %v1778 = vmul.f32 %v1770, %v317
    %v1779 = vmul.f32 %v1773, %v317
    %v1780 = vmul.f32 %v1776, %v317
    %v1781 = vadd.f32 %v1777, 1e-05
    %v1782 = vadd.f32 %v1778, 1e-05
    %v1783 = vadd.f32 %v1779, 1e-05
    %v1784 = vadd.f32 %v1780, 1e-05
    %v1785 = vrsqrt.pop %v1781
    %v1786 = vrsqrt.pop %v1782
    %v1787 = vrsqrt.pop %v1783
    %v1788 = vrsqrt.pop %v1784
    %v1789 = vmul.f32 %v1757, %v1785
    %v1790 = vmul.f32 %v1758, %v1786
    %v1791 = vmul.f32 %v1759, %v1787
    %v1792 = vmul.f32 %v1760, %v1788
    %v1793 = vlaneseq
    %v1794 = vshrl.u32 %v1793, 7
    %v1795 = vsub.s32 0, %v1794
    %v1796 = vrot.slane %v1739, %v1795
    %v1797 = vmul.f32 %v1789, %v1796
    %v1798 = vmul.f32 %v1790, %v1796
    %v1799 = vmul.f32 %v1791, %v1796
    %v1800 = vmul.f32 %v1792, %v1796
    %v1801 = vlaneseq
    %v1802 = vshrl.u32 %v1801, 7
    %v1803 = vsub.s32 0, %v1802
    %v1804 = vrot.slane %v1740, %v1803
    %v1805 = vadd.f32 %v1797, %v1804
    %v1806 = vadd.f32 %v1798, %v1804
    %v1807 = vadd.f32 %v1799, %v1804
    %v1808 = vadd.f32 %v1800, %v1804
    %v1809 = vld [vmem:[%s1 + $0x10] sm:$0xff]
    %v1810 = vld [vmem:[%s1 + $0x48] sm:$0xff]
    %v1811 = vld [vmem:[%s1 + $0x80] sm:$0xff]
    %v1812 = vld [vmem:[%s1 + $0xb8] sm:$0xff]
    %v1813 = vpack.c.bf16 %v1806, %v1805
    %v1814 = vpack.c.bf16 %v1808, %v1807
    %v1815 = vpack.c.bf16 %v1810, %v1809
    %v1816 = vpack.c.bf16 %v1812, %v1811
    %v1817 = vld [vmem:[%s4 + $0x1c] sm:$0x1]
    %v1818 = vlaneseq
    %v1819 = vshrl.u32 %v1818, 7
    %v1820 = vsub.s32 0, %v1819
    %v1821 = vrot.slane %v1817, %v1820
    %v1823 = vsel %vm304, %v1813, 0
    %v1826 = vsel %vm304, %v1814, 0
    %1828 = vmatprep.subr.bf16.mxu0 0
    %1829 = vmatpush1.bf16.msra.mxu0 %v1815
    %1830 = vmatprep.subr.bf16.mxu0 0
    %1831 = vmatpush1.bf16.msra.mxu0 %v1816
    %1832 = vmatprep.subr.bf16.mxu0 0
    %1833 = vmatpush1.bf16.msra.mxu0 0
    %1834 = vmatprep.subr.bf16.mxu0 0
    %1835 = vmatpush1.bf16.msra.mxu0 0
    %1836 = vmatprep.subr.bf16.mxu0 0
    %1837 = vmatpush1.bf16.msra.mxu0 0
    %1838 = vmatprep.subr.bf16.mxu0 0
    %1839 = vmatpush1.bf16.msra.mxu0 0
    %1840 = vmatprep.subr.bf16.mxu0 0
    %1841 = vmatpush1.bf16.msra.mxu0 0
    %1842 = vmatprep.subr.bf16.mxu0 0
    %1843 = vmatpush1.bf16.msra.mxu0 0
    %1844 = vmatprep.subr.bf16.mxu0 0
    %1845 = vmatpush1.bf16.msra.mxu0 0
    %1846 = vmatprep.subr.bf16.mxu0 0
    %1847 = vmatpush1.bf16.msra.mxu0 0
    %1848 = vmatprep.subr.bf16.mxu0 0
    %1849 = vmatpush1.bf16.msra.mxu0 0
    %1850 = vmatprep.subr.bf16.mxu0 0
    %1851 = vmatpush1.bf16.msra.mxu0 0
    %1852 = vmatprep.subr.bf16.mxu0 0
    %1853 = vmatpush1.bf16.msra.mxu0 0
    %1854 = vmatprep.subr.bf16.mxu0 0
    %1855 = vmatpush1.bf16.msra.mxu0 0
    %1856 = vmatprep.subr.bf16.mxu0 0
    %1857 = vmatpush1.bf16.msra.mxu0 0
    %1858 = vmatprep.subr.bf16.mxu0 0
    %1859 = vmatpush1.bf16.msra.mxu0 0
    %1860 = vmatprep.mubr.bf16.mxu0 0
    %1861 = vmatmul.mubr.bf16.gmra.mrb[0].mxu0 %v1823
    %v1862 = vpop.f32.mrb[0].mxu0
    %v1863 = vadd.f32 %v1821, %v1862
    %v1864 = vpop.f32.mrb[0].mxu0
    %v1865 = vpop.f32.mrb[0].mxu0
    %v1866 = vadd.f32 %v1821, %v1865
    %v1867 = vpop.f32.mrb[0].mxu0
    %1868 = vmatprep.mubr.bf16.mxu0 0
    %1869 = vmatmul.mubr.bf16.gmra.mrb[0].mxu0 %v1826
    %v1870 = vpop.f32.mrb[0].mxu0
    %v1871 = vadd.f32 %v1821, %v1870
    %v1872 = vpop.f32.mrb[0].mxu0
    %v1873 = vpop.f32.mrb[0].mxu0
    %v1874 = vadd.f32 %v1821, %v1873
    %v1875 = vpop.f32.mrb[0].mxu0
    %1876 = vdwg.mxu0
    %v1877 = vmax.f32 %v1863, 0.0
    %v1878 = vmax.f32 %v1866, 0.0
    %v1879 = vmax.f32 %v1871, 0.0
    %v1880 = vmax.f32 %v1874, 0.0
    %v1881 = vld [vmem:[%s3] sm:$0xff]
    %v1882 = vld [vmem:[%s3 + $0x8] sm:$0xff]
    %v1883 = vld [vmem:[%s3 + $0x10] sm:$0xff]
    %v1884 = vld [vmem:[%s3 + $0x18] sm:$0xff]
    %v1885 = vld [vmem:[%s3 + $0x20] sm:$0xff]
    %v1886 = vld [vmem:[%s3 + $0x28] sm:$0xff]
    %v1887 = vld [vmem:[%s3 + $0x30] sm:$0xff]
    %v1888 = vld [vmem:[%s3 + $0x38] sm:$0xff]
    %v1889 = vld [vmem:[%s3 + $0x40] sm:$0xff]
    %v1890 = vld [vmem:[%s3 + $0x48] sm:$0xff]
    %v1891 = vld [vmem:[%s3 + $0x50] sm:$0xff]
    %v1892 = vld [vmem:[%s3 + $0x58] sm:$0xff]
    %v1893 = vld [vmem:[%s3 + $0x60] sm:$0xff]
    %v1894 = vld [vmem:[%s3 + $0x68] sm:$0xff]
    %v1895 = vld [vmem:[%s3 + $0x70] sm:$0xff]
    %v1896 = vld [vmem:[%s3 + $0x78] sm:$0xff]
    %v1897 = vpack.c.bf16 %v1878, %v1877
    %v1898 = vpack.c.bf16 %v1880, %v1879
    %v1899 = vpack.c.bf16 %v1882, %v1881
    %v1900 = vpack.c.bf16 %v1884, %v1883
    %v1901 = vpack.c.bf16 %v1886, %v1885
    %v1902 = vpack.c.bf16 %v1888, %v1887
    %v1903 = vpack.c.bf16 %v1890, %v1889
    %v1904 = vpack.c.bf16 %v1892, %v1891
    %v1905 = vpack.c.bf16 %v1894, %v1893
    %v1906 = vpack.c.bf16 %v1896, %v1895
    %v1907 = vld [vmem:[%s4 + $0x1d] sm:$0x1]
    %v1908 = vlaneseq
    %v1909 = vshrl.u32 %v1908, 7
    %v1910 = vsub.s32 0, %v1909
    %v1911 = vrot.slane %v1907, %v1910
    %1920 = vrot.lane.b32.xlu0 %v1899, 96
    %v1921 = vpop.permute.xlu0 %1920
    %1922 = vrot.lane.b32.xlu0 %v1900, 96
    %v1923 = vpop.permute.xlu0 %1922
    %1924 = vrot.lane.b32.xlu0 %v1901, 96
    %v1925 = vpop.permute.xlu0 %1924
    %1926 = vrot.lane.b32.xlu0 %v1902, 96
    %v1927 = vpop.permute.xlu0 %1926
    %1928 = vrot.lane.b32.xlu0 %v1903, 96
    %v1929 = vpop.permute.xlu0 %1928
    %1930 = vrot.lane.b32.xlu0 %v1904, 96
    %v1931 = vpop.permute.xlu0 %1930
    %1932 = vrot.lane.b32.xlu0 %v1905, 96
    %v1933 = vpop.permute.xlu0 %1932
    %1934 = vrot.lane.b32.xlu0 %v1906, 96
    %v1935 = vpop.permute.xlu0 %1934
    %1944 = vmatprep.subr.bf16.mxu0 0
    %1945 = vmatpush1.bf16.msra.mxu0 %v1921
    %1946 = vmatprep.subr.bf16.mxu0 0
    %1947 = vmatpush1.bf16.msra.mxu0 %v1923
    %1948 = vmatprep.subr.bf16.mxu0 0
    %1949 = vmatpush1.bf16.msra.mxu0 %v1925
    %1950 = vmatprep.subr.bf16.mxu0 0
    %1951 = vmatpush1.bf16.msra.mxu0 %v1927
    %1952 = vmatprep.subr.bf16.mxu0 0
    %1953 = vmatpush1.bf16.msra.mxu0 %v1929
    %1954 = vmatprep.subr.bf16.mxu0 0
    %1955 = vmatpush1.bf16.msra.mxu0 %v1931
    %1956 = vmatprep.subr.bf16.mxu0 0
    %1957 = vmatpush1.bf16.msra.mxu0 %v1933
    %1958 = vmatprep.subr.bf16.mxu0 0
    %1959 = vmatpush1.bf16.msra.mxu0 %v1935
    %1960 = vmatprep.subr.bf16.mxu0 0
    %1961 = vmatpush1.bf16.msra.mxu0 0
    %1962 = vmatprep.subr.bf16.mxu0 0
    %1963 = vmatpush1.bf16.msra.mxu0 0
    %1964 = vmatprep.subr.bf16.mxu0 0
    %1965 = vmatpush1.bf16.msra.mxu0 0
    %1966 = vmatprep.subr.bf16.mxu0 0
    %1967 = vmatpush1.bf16.msra.mxu0 0
    %1968 = vmatprep.subr.bf16.mxu0 0
    %1969 = vmatpush1.bf16.msra.mxu0 0
    %1970 = vmatprep.subr.bf16.mxu0 0
    %1971 = vmatpush1.bf16.msra.mxu0 0
    %1972 = vmatprep.subr.bf16.mxu0 0
    %1973 = vmatpush1.bf16.msra.mxu0 0
    %1974 = vmatprep.subr.bf16.mxu0 0
    %1975 = vmatpush1.bf16.msra.mxu0 0
    %1976 = vmatprep.mubr.bf16.mxu0 0
    %1977 = vmatmul.mubr.bf16.gmra.mrb[0].mxu0 %v1897
    %v1978 = vpop.f32.mrb[0].mxu0
    %v1979 = vadd.f32 %v1911, %v1978
    %v1980 = vpop.f32.mrb[0].mxu0
    %v1981 = vpop.f32.mrb[0].mxu0
    %v1982 = vadd.f32 %v1911, %v1981
    %v1983 = vpop.f32.mrb[0].mxu0
    %1984 = vmatprep.mubr.bf16.mxu0 0
    %1985 = vmatmul.mubr.bf16.gmra.mrb[0].mxu0 %v1898
    %v1986 = vpop.f32.mrb[0].mxu0
    %v1987 = vadd.f32 %v1911, %v1986
    %v1988 = vpop.f32.mrb[0].mxu0
    %v1989 = vpop.f32.mrb[0].mxu0
    %v1990 = vadd.f32 %v1911, %v1989
    %v1991 = vpop.f32.mrb[0].mxu0
    %1992 = vdwg.mxu0
    %v1993 = vadd.f32 %v1735, %v1979
    %v1994 = vadd.f32 %v1736, %v1982
    %v1995 = vadd.f32 %v1737, %v1987
    %v1996 = vadd.f32 %v1738, %v1990
    %v1997 = vld [vmem:[%s4 + $0x2c] sm:$0x1]
    %v1998 = vld [vmem:[%s4 + $0x2d] sm:$0x1]
    %v1999 = vsel %vm304, %v1993, 0.0
    %2000 = vadd.xlane.f32.xlu0 %v1999
    %v2001 = vpop.xlane.xlu0 %2000
    %v2002 = vsel %vm304, %v1994, 0.0
    %2003 = vadd.xlane.f32.xlu0 %v2002
    %v2004 = vpop.xlane.xlu0 %2003
    %v2005 = vsel %vm304, %v1995, 0.0
    %2006 = vadd.xlane.f32.xlu0 %v2005
    %v2007 = vpop.xlane.xlu0 %2006
    %v2008 = vsel %vm304, %v1996, 0.0
    %2009 = vadd.xlane.f32.xlu0 %v2008
    %v2010 = vpop.xlane.xlu0 %2009
    %v2011 = vmul.f32 %v2001, %v317
    %v2012 = vmul.f32 %v2004, %v317
    %v2013 = vmul.f32 %v2007, %v317
    %v2014 = vmul.f32 %v2010, %v317
    %v2015 = vsub.f32 %v1993, %v2011
    %v2016 = vsub.f32 %v1994, %v2012
    %v2017 = vsub.f32 %v1995, %v2013
    %v2018 = vsub.f32 %v1996, %v2014
    %v2019 = vmul.f32 %v2015, %v2015
    %v2020 = vmul.f32 %v2016, %v2016
    %v2021 = vmul.f32 %v2017, %v2017
    %v2022 = vmul.f32 %v2018, %v2018
    %v2023 = vsel %vm304, %v2019, 0.0
    %2024 = vadd.xlane.f32.xlu0 %v2023
    %v2025 = vpop.xlane.xlu0 %2024
    %v2026 = vsel %vm304, %v2020, 0.0
    %2027 = vadd.xlane.f32.xlu0 %v2026
    %v2028 = vpop.xlane.xlu0 %2027
    %v2029 = vsel %vm304, %v2021, 0.0
    %2030 = vadd.xlane.f32.xlu0 %v2029
    %v2031 = vpop.xlane.xlu0 %2030
    %v2032 = vsel %vm304, %v2022, 0.0
    %2033 = vadd.xlane.f32.xlu0 %v2032
    %v2034 = vpop.xlane.xlu0 %2033
    %v2035 = vmul.f32 %v2025, %v317
    %v2036 = vmul.f32 %v2028, %v317
    %v2037 = vmul.f32 %v2031, %v317
    %v2038 = vmul.f32 %v2034, %v317
    %v2039 = vadd.f32 %v2035, 1e-05
    %v2040 = vadd.f32 %v2036, 1e-05
    %v2041 = vadd.f32 %v2037, 1e-05
    %v2042 = vadd.f32 %v2038, 1e-05
    %v2043 = vrsqrt.pop %v2039
    %v2044 = vrsqrt.pop %v2040
    %v2045 = vrsqrt.pop %v2041
    %v2046 = vrsqrt.pop %v2042
    %v2047 = vmul.f32 %v2015, %v2043
    %v2048 = vmul.f32 %v2016, %v2044
    %v2049 = vmul.f32 %v2017, %v2045
    %v2050 = vmul.f32 %v2018, %v2046
    %v2051 = vlaneseq
    %v2052 = vshrl.u32 %v2051, 7
    %v2053 = vsub.s32 0, %v2052
    %v2054 = vrot.slane %v1997, %v2053
    %v2055 = vmul.f32 %v2047, %v2054
    %v2056 = vmul.f32 %v2048, %v2054
    %v2057 = vmul.f32 %v2049, %v2054
    %v2058 = vmul.f32 %v2050, %v2054
    %v2059 = vlaneseq
    %v2060 = vshrl.u32 %v2059, 7
    %v2061 = vsub.s32 0, %v2060
    %v2062 = vrot.slane %v1998, %v2061
    %v2063 = vadd.f32 %v2055, %v2062
    %v2064 = vadd.f32 %v2056, %v2062
    %v2065 = vadd.f32 %v2057, %v2062
    %v2066 = vadd.f32 %v2058, %v2062
    %v2067 = vadd.f32 %v2063, %v298
    %v2068 = vadd.f32 %v2064, %v299
    %v2069 = vadd.f32 %v2065, %v300
    %v2070 = vadd.f32 %v2066, %v301
    %v2071 = vld [vmem:[%s1 + $0x18] sm:$0xff]
    %v2072 = vld [vmem:[%s1 + $0x50] sm:$0xff]
    %v2073 = vld [vmem:[%s1 + $0x88] sm:$0xff]
    %v2074 = vld [vmem:[%s1 + $0xc0] sm:$0xff]
    %v2075 = vpack.c.bf16 %v2068, %v2067
    %v2076 = vpack.c.bf16 %v2070, %v2069
    %v2077 = vpack.c.bf16 %v2072, %v2071
    %v2078 = vpack.c.bf16 %v2074, %v2073
    %v2079 = vld [vmem:[%s4 + $0x24] sm:$0x1]
    %v2080 = vlaneseq
    %v2081 = vshrl.u32 %v2080, 7
    %v2082 = vsub.s32 0, %v2081
    %v2083 = vrot.slane %v2079, %v2082
    %v2085 = vsel %vm304, %v2075, 0
    %v2088 = vsel %vm304, %v2076, 0
    %2090 = vmatprep.subr.bf16.mxu0 0
    %2091 = vmatpush1.bf16.msra.mxu0 %v2077
    %2092 = vmatprep.subr.bf16.mxu0 0
    %2093 = vmatpush1.bf16.msra.mxu0 %v2078
    %2094 = vmatprep.subr.bf16.mxu0 0
    %2095 = vmatpush1.bf16.msra.mxu0 0
    %2096 = vmatprep.subr.bf16.mxu0 0
    %2097 = vmatpush1.bf16.msra.mxu0 0
    %2098 = vmatprep.subr.bf16.mxu0 0
    %2099 = vmatpush1.bf16.msra.mxu0 0
    %2100 = vmatprep.subr.bf16.mxu0 0
    %2101 = vmatpush1.bf16.msra.mxu0 0
    %2102 = vmatprep.subr.bf16.mxu0 0
    %2103 = vmatpush1.bf16.msra.mxu0 0
    %2104 = vmatprep.subr.bf16.mxu0 0
    %2105 = vmatpush1.bf16.msra.mxu0 0
    %2106 = vmatprep.subr.bf16.mxu0 0
    %2107 = vmatpush1.bf16.msra.mxu0 0
    %2108 = vmatprep.subr.bf16.mxu0 0
    %2109 = vmatpush1.bf16.msra.mxu0 0
    %2110 = vmatprep.subr.bf16.mxu0 0
    %2111 = vmatpush1.bf16.msra.mxu0 0
    %2112 = vmatprep.subr.bf16.mxu0 0
    %2113 = vmatpush1.bf16.msra.mxu0 0
    %2114 = vmatprep.subr.bf16.mxu0 0
    %2115 = vmatpush1.bf16.msra.mxu0 0
    %2116 = vmatprep.subr.bf16.mxu0 0
    %2117 = vmatpush1.bf16.msra.mxu0 0
    %2118 = vmatprep.subr.bf16.mxu0 0
    %2119 = vmatpush1.bf16.msra.mxu0 0
    %2120 = vmatprep.subr.bf16.mxu0 0
    %2121 = vmatpush1.bf16.msra.mxu0 0
    %2122 = vmatprep.mubr.bf16.mxu0 0
    %2123 = vmatmul.mubr.bf16.gmra.mrb[0].mxu0 %v2085
    %v2124 = vpop.f32.mrb[0].mxu0
    %v2125 = vadd.f32 %v2083, %v2124
    %v2126 = vpop.f32.mrb[0].mxu0
    %v2127 = vpop.f32.mrb[0].mxu0
    %v2128 = vadd.f32 %v2083, %v2127
    %v2129 = vpop.f32.mrb[0].mxu0
    %2130 = vmatprep.mubr.bf16.mxu0 0
    %2131 = vmatmul.mubr.bf16.gmra.mrb[0].mxu0 %v2088
    %v2132 = vpop.f32.mrb[0].mxu0
    %v2133 = vadd.f32 %v2083, %v2132
    %v2134 = vpop.f32.mrb[0].mxu0
    %v2135 = vpop.f32.mrb[0].mxu0
    %v2136 = vadd.f32 %v2083, %v2135
    %v2137 = vpop.f32.mrb[0].mxu0
    %2138 = vdwg.mxu0
    %v2139 = vpack.c.bf16 %v2064, %v2063
    %v2140 = vpack.c.bf16 %v2066, %v2065
    %v2141 = vld [vmem:[%s4 + $0x25] sm:$0x1]
    %v2142 = vlaneseq
    %v2143 = vshrl.u32 %v2142, 7
    %v2144 = vsub.s32 0, %v2143
    %v2145 = vrot.slane %v2141, %v2144
    %2148 = vrot.lane.b32.xlu0 %v2077, 64
    %v2149 = vpop.permute.xlu0 %2148
    %2150 = vrot.lane.b32.xlu0 %v2078, 64
    %v2151 = vpop.permute.xlu0 %2150
    %v2155 = vsel %vm304, %v2139, 0
    %v2158 = vsel %vm304, %v2140, 0
    %2160 = vmatprep.subr.bf16.mxu0 0
    %2161 = vmatpush1.bf16.msra.mxu0 %v2149
    %2162 = vmatprep.subr.bf16.mxu0 0
    %2163 = vmatpush1.bf16.msra.mxu0 %v2151
    %2164 = vmatprep.subr.bf16.mxu0 0
    %2165 = vmatpush1.bf16.msra.mxu0 0
    %2166 = vmatprep.subr.bf16.mxu0 0
    %2167 = vmatpush1.bf16.msra.mxu0 0
    %2168 = vmatprep.subr.bf16.mxu0 0
    %2169 = vmatpush1.bf16.msra.mxu0 0
    %2170 = vmatprep.subr.bf16.mxu0 0
    %2171 = vmatpush1.bf16.msra.mxu0 0
    %2172 = vmatprep.subr.bf16.mxu0 0
    %2173 = vmatpush1.bf16.msra.mxu0 0
    %2174 = vmatprep.subr.bf16.mxu0 0
    %2175 = vmatpush1.bf16.msra.mxu0 0
    %2176 = vmatprep.subr.bf16.mxu0 0
    %2177 = vmatpush1.bf16.msra.mxu0 0
    %2178 = vmatprep.subr.bf16.mxu0 0
    %2179 = vmatpush1.bf16.msra.mxu0 0
    %2180 = vmatprep.subr.bf16.mxu0 0
    %2181 = vmatpush1.bf16.msra.mxu0 0
    %2182 = vmatprep.subr.bf16.mxu0 0
    %2183 = vmatpush1.bf16.msra.mxu0 0
    %2184 = vmatprep.subr.bf16.mxu0 0
    %2185 = vmatpush1.bf16.msra.mxu0 0
    %2186 = vmatprep.subr.bf16.mxu0 0
    %2187 = vmatpush1.bf16.msra.mxu0 0
    %2188 = vmatprep.subr.bf16.mxu0 0
    %2189 = vmatpush1.bf16.msra.mxu0 0
    %2190 = vmatprep.subr.bf16.mxu0 0
    %2191 = vmatpush1.bf16.msra.mxu0 0
    %2192 = vmatprep.mubr.bf16.mxu0 0
    %2193 = vmatmul.mubr.bf16.gmra.mrb[0].mxu0 %v2155
    %v2194 = vpop.f32.mrb[0].mxu0
    %v2195 = vadd.f32 %v2145, %v2194
    %v2196 = vpop.f32.mrb[0].mxu0
    %v2197 = vpop.f32.mrb[0].mxu0
    %v2198 = vadd.f32 %v2145, %v2197
    %v2199 = vpop.f32.mrb[0].mxu0
    %2200 = vmatprep.mubr.bf16.mxu0 0
    %2201 = vmatmul.mubr.bf16.gmra.mrb[0].mxu0 %v2158
    %v2202 = vpop.f32.mrb[0].mxu0
    %v2203 = vadd.f32 %v2145, %v2202
    %v2204 = vpop.f32.mrb[0].mxu0
    %v2205 = vpop.f32.mrb[0].mxu0
    %v2206 = vadd.f32 %v2145, %v2205
    %v2207 = vpop.f32.mrb[0].mxu0
    %2208 = vdwg.mxu0
    %v2209 = vld [vmem:[%s4 + $0x26] sm:$0x1]
    %v2210 = vmul.f32 %v2125, %v519
    %v2211 = vmul.f32 %v2128, %v519
    %v2212 = vmul.f32 %v2133, %v519
    %v2213 = vmul.f32 %v2136, %v519
    %v2214 = vmul.f32 %v2125, %v527
    %v2215 = vmul.f32 %v2128, %v527
    %v2216 = vmul.f32 %v2133, %v527
    %v2217 = vmul.f32 %v2136, %v527
    %v2218 = vmul.f32 %v2125, %v535
    %v2219 = vmul.f32 %v2128, %v535
    %v2220 = vmul.f32 %v2133, %v535
    %v2221 = vmul.f32 %v2136, %v535
    %v2222 = vmul.f32 %v2125, %v543
    %v2223 = vmul.f32 %v2128, %v543
    %v2224 = vmul.f32 %v2133, %v543
    %v2225 = vmul.f32 %v2136, %v543
    %v2226 = vmul.f32 %v2195, %v41
    %v2227 = vmul.f32 %v2198, %v41
    %v2228 = vmul.f32 %v2203, %v41
    %v2229 = vmul.f32 %v2206, %v41
    %v2230 = vmul.f32 %v2195, %v46
    %v2231 = vmul.f32 %v2198, %v46
    %v2232 = vmul.f32 %v2203, %v46
    %v2233 = vmul.f32 %v2206, %v46
    %v2234 = vmul.f32 %v2195, %v51
    %v2235 = vmul.f32 %v2198, %v51
    %v2236 = vmul.f32 %v2203, %v51
    %v2237 = vmul.f32 %v2206, %v51
    %v2238 = vmul.f32 %v2195, %v56
    %v2239 = vmul.f32 %v2198, %v56
    %v2240 = vmul.f32 %v2203, %v56
    %v2241 = vmul.f32 %v2206, %v56
    %v2242 = vpack.c.bf16 %v2128, %v2125
    %v2243 = vpack.c.bf16 %v2136, %v2133
    %v2244 = vpack.c.bf16 %v2211, %v2210
    %v2245 = vpack.c.bf16 %v2215, %v2214
    %v2246 = vpack.c.bf16 %v2219, %v2218
    %v2247 = vpack.c.bf16 %v2223, %v2222
    %v2248 = vpack.c.bf16 %v2213, %v2212
    %v2249 = vpack.c.bf16 %v2217, %v2216
    %v2250 = vpack.c.bf16 %v2221, %v2220
    %v2251 = vpack.c.bf16 %v2225, %v2224
    %2256 = vrot.lane.b32.xlu0 %v2244, 96
    %v2257 = vpop.permute.xlu0 %2256
    %2258 = vrot.lane.b32.xlu0 %v2245, 96
    %v2259 = vpop.permute.xlu0 %2258
    %2260 = vrot.lane.b32.xlu0 %v2246, 96
    %v2261 = vpop.permute.xlu0 %2260
    %2262 = vrot.lane.b32.xlu0 %v2247, 96
    %v2263 = vpop.permute.xlu0 %2262
    %v2265 = vsel %vm304, %v2242, 0
    %v2268 = vsel %vm304, %v2257, 0
    %v2271 = vsel %vm304, %v2259, 0
    %v2274 = vsel %vm304, %v2261, 0
    %v2277 = vsel %vm304, %v2263, 0
    %2279 = vmatprep.subr.bf16.mxu0 0
    %2280 = vmatpush1.bf16.xpose.msra.mxu0 %v2268
    %2281 = vmatprep.subr.bf16.mxu0 0
    %2282 = vmatpush1.bf16.xpose.msra.mxu0 %v2271
    %2283 = vmatprep.subr.bf16.mxu0 0
    %2284 = vmatpush1.bf16.xpose.msra.mxu0 %v2274
    %2285 = vmatprep.subr.bf16.mxu0 0
    %2286 = vmatpush1.bf16.xpose.msra.mxu0 %v2277
    %2287 = vmatprep.subr.bf16.mxu0 0
    %2288 = vmatpush1.bf16.xpose.msra.mxu0 0
    %2289 = vmatprep.subr.bf16.mxu0 0
    %2290 = vmatpush1.bf16.xpose.msra.mxu0 0
    %2291 = vmatprep.subr.bf16.mxu0 0
    %2292 = vmatpush1.bf16.xpose.msra.mxu0 0
    %2293 = vmatprep.subr.bf16.mxu0 0
    %2294 = vmatpush1.bf16.xpose.msra.mxu0 0
    %2295 = vmatprep.subr.bf16.mxu0 0
    %2296 = vmatpush1.bf16.xpose.msra.mxu0 0
    %2297 = vmatprep.subr.bf16.mxu0 0
    %2298 = vmatpush1.bf16.xpose.msra.mxu0 0
    %2299 = vmatprep.subr.bf16.mxu0 0
    %2300 = vmatpush1.bf16.xpose.msra.mxu0 0
    %2301 = vmatprep.subr.bf16.mxu0 0
    %2302 = vmatpush1.bf16.xpose.msra.mxu0 0
    %2303 = vmatprep.subr.bf16.mxu0 0
    %2304 = vmatpush1.bf16.xpose.msra.mxu0 0
    %2305 = vmatprep.subr.bf16.mxu0 0
    %2306 = vmatpush1.bf16.xpose.msra.mxu0 0
    %2307 = vmatprep.subr.bf16.mxu0 0
    %2308 = vmatpush1.bf16.xpose.msra.mxu0 0
    %2309 = vmatprep.subr.bf16.mxu0 0
    %2310 = vmatpush1.bf16.xpose.msra.mxu0 0
    %2311 = vmatprep.mubr.bf16.mxu0 0
    %2312 = vmatmul.mubr.bf16.gmra.mrb[0].mxu0 %v2265
    %v2313 = vpop.f32.mrb[0].mxu0
    %v2314 = vadd.f32 0.0, %v2313
    %v2315 = vpop.f32.mrb[0].mxu0
    %v2316 = vpop.f32.mrb[0].mxu0
    %v2317 = vadd.f32 0.0, %v2316
    %v2318 = vpop.f32.mrb[0].mxu0
    %2319 = vdwg.mxu0
    %2324 = vrot.lane.b32.xlu0 %v2248, 96
    %v2325 = vpop.permute.xlu0 %2324
    %2326 = vrot.lane.b32.xlu0 %v2249, 96
    %v2327 = vpop.permute.xlu0 %2326
    %2328 = vrot.lane.b32.xlu0 %v2250, 96
    %v2329 = vpop.permute.xlu0 %2328
    %2330 = vrot.lane.b32.xlu0 %v2251, 96
    %v2331 = vpop.permute.xlu0 %2330
    %v2333 = vsel %vm304, %v2243, 0
    %v2336 = vsel %vm304, %v2325, 0
    %v2339 = vsel %vm304, %v2327, 0
    %v2342 = vsel %vm304, %v2329, 0
    %v2345 = vsel %vm304, %v2331, 0
    %2347 = vmatprep.subr.bf16.mxu0 0
    %2348 = vmatpush1.bf16.xpose.msra.mxu0 %v2336
    %2349 = vmatprep.subr.bf16.mxu0 0
    %2350 = vmatpush1.bf16.xpose.msra.mxu0 %v2339
    %2351 = vmatprep.subr.bf16.mxu0 0
    %2352 = vmatpush1.bf16.xpose.msra.mxu0 %v2342
    %2353 = vmatprep.subr.bf16.mxu0 0
    %2354 = vmatpush1.bf16.xpose.msra.mxu0 %v2345
    %2355 = vmatprep.subr.bf16.mxu0 0
    %2356 = vmatpush1.bf16.xpose.msra.mxu0 0
    %2357 = vmatprep.subr.bf16.mxu0 0
    %2358 = vmatpush1.bf16.xpose.msra.mxu0 0
    %2359 = vmatprep.subr.bf16.mxu0 0
    %2360 = vmatpush1.bf16.xpose.msra.mxu0 0
    %2361 = vmatprep.subr.bf16.mxu0 0
    %2362 = vmatpush1.bf16.xpose.msra.mxu0 0
    %2363 = vmatprep.subr.bf16.mxu0 0
    %2364 = vmatpush1.bf16.xpose.msra.mxu0 0
    %2365 = vmatprep.subr.bf16.mxu0 0
    %2366 = vmatpush1.bf16.xpose.msra.mxu0 0
    %2367 = vmatprep.subr.bf16.mxu0 0
    %2368 = vmatpush1.bf16.xpose.msra.mxu0 0
    %2369 = vmatprep.subr.bf16.mxu0 0
    %2370 = vmatpush1.bf16.xpose.msra.mxu0 0
    %2371 = vmatprep.subr.bf16.mxu0 0
    %2372 = vmatpush1.bf16.xpose.msra.mxu0 0
    %2373 = vmatprep.subr.bf16.mxu0 0
    %2374 = vmatpush1.bf16.xpose.msra.mxu0 0
    %2375 = vmatprep.subr.bf16.mxu0 0
    %2376 = vmatpush1.bf16.xpose.msra.mxu0 0
    %2377 = vmatprep.subr.bf16.mxu0 0
    %2378 = vmatpush1.bf16.xpose.msra.mxu0 0
    %2379 = vmatprep.mubr.bf16.mxu0 0
    %2380 = vmatmul.mubr.bf16.gmra.mrb[0].mxu0 %v2333
    %v2381 = vpop.f32.mrb[0].mxu0
    %v2382 = vadd.f32 0.0, %v2381
    %v2383 = vpop.f32.mrb[0].mxu0
    %v2384 = vpop.f32.mrb[0].mxu0
    %v2385 = vadd.f32 0.0, %v2384
    %v2386 = vpop.f32.mrb[0].mxu0
    %2387 = vdwg.mxu0
    %v2388 = vsel %vm156, %v2314, -inf
    %2389 = vmax.xlane.f32.xlu0 %v2388
    %v2390 = vpop.xlane.xlu0 %2389
    %v2391 = vsel %vm156, %v2317, -inf
    %2392 = vmax.xlane.f32.xlu0 %v2391
    %v2393 = vpop.xlane.xlu0 %2392
    %v2394 = vsel %vm156, %v2382, -inf
    %2395 = vmax.xlane.f32.xlu0 %v2394
    %v2396 = vpop.xlane.xlu0 %2395
    %v2397 = vsel %vm156, %v2385, -inf
    %2398 = vmax.xlane.f32.xlu0 %v2397
    %v2399 = vpop.xlane.xlu0 %2398
    %v2400 = vsub.f32 %v2314, %v2390
    %v2401 = vsub.f32 %v2317, %v2393
    %v2402 = vsub.f32 %v2382, %v2396
    %v2403 = vsub.f32 %v2385, %v2399
    %v2404 = vmul.f32 %v2400, 1.442695
    %v2405 = vpow.pop %v2404
    %v2406 = vmul.f32 %v2401, 1.442695
    %v2407 = vpow.pop %v2406
    %v2408 = vmul.f32 %v2402, 1.442695
    %v2409 = vpow.pop %v2408
    %v2410 = vmul.f32 %v2403, 1.442695
    %v2411 = vpow.pop %v2410
    %v2412 = vsel %vm735, %v2405, 0.0
    %2413 = vadd.xlane.f32.xlu0 %v2412
    %v2414 = vpop.xlane.xlu0 %2413
    %v2415 = vsel %vm735, %v2407, 0.0
    %2416 = vadd.xlane.f32.xlu0 %v2415
    %v2417 = vpop.xlane.xlu0 %2416
    %v2418 = vsel %vm735, %v2409, 0.0
    %2419 = vadd.xlane.f32.xlu0 %v2418
    %v2420 = vpop.xlane.xlu0 %2419
    %v2421 = vsel %vm735, %v2411, 0.0
    %2422 = vadd.xlane.f32.xlu0 %v2421
    %v2423 = vpop.xlane.xlu0 %2422
    %v2424 = vrcp.pop %v2414
    %v2425 = vrcp.pop %v2417
    %v2426 = vrcp.pop %v2420
    %v2427 = vrcp.pop %v2423
    %2432 = vrot.lane.b32.xlu0 %v2405, 112
    %v2433 = vpop.permute.xlu0 %2432
    %2434 = vrot.lane.b32.xlu0 %v2407, 112
    %v2435 = vpop.permute.xlu0 %2434
    %2436 = vrot.lane.b32.xlu0 %v2409, 112
    %v2437 = vpop.permute.xlu0 %2436
    %2438 = vrot.lane.b32.xlu0 %v2411, 112
    %v2439 = vpop.permute.xlu0 %2438
    %v2444 = vsel %vm735, %v2433, 0.0
    %2445 = vadd.xlane.f32.xlu0 %v2444
    %v2446 = vpop.xlane.xlu0 %2445
    %v2447 = vsel %vm735, %v2435, 0.0
    %2448 = vadd.xlane.f32.xlu0 %v2447
    %v2449 = vpop.xlane.xlu0 %2448
    %v2450 = vsel %vm735, %v2437, 0.0
    %2451 = vadd.xlane.f32.xlu0 %v2450
    %v2452 = vpop.xlane.xlu0 %2451
    %v2453 = vsel %vm735, %v2439, 0.0
    %2454 = vadd.xlane.f32.xlu0 %v2453
    %v2455 = vpop.xlane.xlu0 %2454
    %v2456 = vrcp.pop %v2446
    %v2457 = vrcp.pop %v2449
    %v2458 = vrcp.pop %v2452
    %v2459 = vrcp.pop %v2455
    %2460 = vrot.lane.b32.xlu0 %v2405, 96
    %v2461 = vpop.permute.xlu0 %2460
    %2462 = vrot.lane.b32.xlu0 %v2407, 96
    %v2463 = vpop.permute.xlu0 %2462
    %2464 = vrot.lane.b32.xlu0 %v2409, 96
    %v2465 = vpop.permute.xlu0 %2464
    %2466 = vrot.lane.b32.xlu0 %v2411, 96
    %v2467 = vpop.permute.xlu0 %2466
    %v2472 = vsel %vm735, %v2461, 0.0
    %2473 = vadd.xlane.f32.xlu0 %v2472
    %v2474 = vpop.xlane.xlu0 %2473
    %v2475 = vsel %vm735, %v2463, 0.0
    %2476 = vadd.xlane.f32.xlu0 %v2475
    %v2477 = vpop.xlane.xlu0 %2476
    %v2478 = vsel %vm735, %v2465, 0.0
    %2479 = vadd.xlane.f32.xlu0 %v2478
    %v2480 = vpop.xlane.xlu0 %2479
    %v2481 = vsel %vm735, %v2467, 0.0
    %2482 = vadd.xlane.f32.xlu0 %v2481
    %v2483 = vpop.xlane.xlu0 %2482
    %v2484 = vrcp.pop %v2474
    %v2485 = vrcp.pop %v2477
    %v2486 = vrcp.pop %v2480
    %v2487 = vrcp.pop %v2483
    %2488 = vrot.lane.b32.xlu0 %v2405, 80
    %v2489 = vpop.permute.xlu0 %2488
    %2490 = vrot.lane.b32.xlu0 %v2407, 80
    %v2491 = vpop.permute.xlu0 %2490
    %2492 = vrot.lane.b32.xlu0 %v2409, 80
    %v2493 = vpop.permute.xlu0 %2492
    %2494 = vrot.lane.b32.xlu0 %v2411, 80
    %v2495 = vpop.permute.xlu0 %2494
    %v2500 = vsel %vm735, %v2489, 0.0
    %2501 = vadd.xlane.f32.xlu0 %v2500
    %v2502 = vpop.xlane.xlu0 %2501
    %v2503 = vsel %vm735, %v2491, 0.0
    %2504 = vadd.xlane.f32.xlu0 %v2503
    %v2505 = vpop.xlane.xlu0 %2504
    %v2506 = vsel %vm735, %v2493, 0.0
    %2507 = vadd.xlane.f32.xlu0 %v2506
    %v2508 = vpop.xlane.xlu0 %2507
    %v2509 = vsel %vm735, %v2495, 0.0
    %2510 = vadd.xlane.f32.xlu0 %v2509
    %v2511 = vpop.xlane.xlu0 %2510
    %v2512 = vrcp.pop %v2502
    %v2513 = vrcp.pop %v2505
    %v2514 = vrcp.pop %v2508
    %v2515 = vrcp.pop %v2511
    %v2516 = vsel %vm840, %v2424, %v2456
    %v2517 = vsel %vm840, %v2425, %v2457
    %v2518 = vsel %vm840, %v2426, %v2458
    %v2519 = vsel %vm840, %v2427, %v2459
    %v2520 = vsel %vm735, %v2516, %v2484
    %v2521 = vsel %vm735, %v2517, %v2485
    %v2522 = vsel %vm735, %v2518, %v2486
    %v2523 = vsel %vm735, %v2519, %v2487
    %v2524 = vsel %vm849, %v2520, %v2512
    %v2525 = vsel %vm849, %v2521, %v2513
    %v2526 = vsel %vm849, %v2522, %v2514
    %v2527 = vsel %vm849, %v2523, %v2515
    %v2528 = vpack.c.bf16 %v2407, %v2405
    %v2529 = vpack.c.bf16 %v2411, %v2409
    %v2530 = vpack.c.bf16 %v2227, %v2226
    %v2531 = vpack.c.bf16 %v2231, %v2230
    %v2532 = vpack.c.bf16 %v2235, %v2234
    %v2533 = vpack.c.bf16 %v2239, %v2238
    %v2534 = vpack.c.bf16 %v2229, %v2228
    %v2535 = vpack.c.bf16 %v2233, %v2232
    %v2536 = vpack.c.bf16 %v2237, %v2236
    %v2537 = vpack.c.bf16 %v2241, %v2240
    %v2539 = vsel %vm156, %v2528, 0
    %2541 = vmatprep.subr.bf16.mxu0 0
    %2542 = vmatpush1.bf16.msra.mxu0 %v2530
    %2543 = vmatprep.subr.bf16.mxu0 0
    %2544 = vmatpush1.bf16.msra.mxu0 %v2531
    %2545 = vmatprep.subr.bf16.mxu0 0
    %2546 = vmatpush1.bf16.msra.mxu0 %v2532
    %2547 = vmatprep.subr.bf16.mxu0 0
    %2548 = vmatpush1.bf16.msra.mxu0 %v2533
    %2549 = vmatprep.subr.bf16.mxu0 0
    %2550 = vmatpush1.bf16.msra.mxu0 0
    %2551 = vmatprep.subr.bf16.mxu0 0
    %2552 = vmatpush1.bf16.msra.mxu0 0
    %2553 = vmatprep.subr.bf16.mxu0 0
    %2554 = vmatpush1.bf16.msra.mxu0 0
    %2555 = vmatprep.subr.bf16.mxu0 0
    %2556 = vmatpush1.bf16.msra.mxu0 0
    %2557 = vmatprep.subr.bf16.mxu0 0
    %2558 = vmatpush1.bf16.msra.mxu0 0
    %2559 = vmatprep.subr.bf16.mxu0 0
    %2560 = vmatpush1.bf16.msra.mxu0 0
    %2561 = vmatprep.subr.bf16.mxu0 0
    %2562 = vmatpush1.bf16.msra.mxu0 0
    %2563 = vmatprep.subr.bf16.mxu0 0
    %2564 = vmatpush1.bf16.msra.mxu0 0
    %2565 = vmatprep.subr.bf16.mxu0 0
    %2566 = vmatpush1.bf16.msra.mxu0 0
    %2567 = vmatprep.subr.bf16.mxu0 0
    %2568 = vmatpush1.bf16.msra.mxu0 0
    %2569 = vmatprep.subr.bf16.mxu0 0
    %2570 = vmatpush1.bf16.msra.mxu0 0
    %2571 = vmatprep.subr.bf16.mxu0 0
    %2572 = vmatpush1.bf16.msra.mxu0 0
    %2573 = vmatprep.mubr.bf16.mxu0 0
    %2574 = vmatmul.mubr.bf16.gmra.mrb[0].mxu0 %v2539
    %v2575 = vpop.f32.mrb[0].mxu0
    %v2576 = vadd.f32 0.0, %v2575
    %v2577 = vpop.f32.mrb[0].mxu0
    %v2578 = vpop.f32.mrb[0].mxu0
    %v2579 = vadd.f32 0.0, %v2578
    %v2580 = vpop.f32.mrb[0].mxu0
    %2581 = vdwg.mxu0
    %v2583 = vsel %vm156, %v2529, 0
    %2585 = vmatprep.subr.bf16.mxu0 0
    %2586 = vmatpush1.bf16.msra.mxu0 %v2534
    %2587 = vmatprep.subr.bf16.mxu0 0
    %2588 = vmatpush1.bf16.msra.mxu0 %v2535
    %2589 = vmatprep.subr.bf16.mxu0 0
    %2590 = vmatpush1.bf16.msra.mxu0 %v2536
    %2591 = vmatprep.subr.bf16.mxu0 0
    %2592 = vmatpush1.bf16.msra.mxu0 %v2537
    %2593 = vmatprep.subr.bf16.mxu0 0
    %2594 = vmatpush1.bf16.msra.mxu0 0
    %2595 = vmatprep.subr.bf16.mxu0 0
    %2596 = vmatpush1.bf16.msra.mxu0 0
    %2597 = vmatprep.subr.bf16.mxu0 0
    %2598 = vmatpush1.bf16.msra.mxu0 0
    %2599 = vmatprep.subr.bf16.mxu0 0
    %2600 = vmatpush1.bf16.msra.mxu0 0
    %2601 = vmatprep.subr.bf16.mxu0 0
    %2602 = vmatpush1.bf16.msra.mxu0 0
    %2603 = vmatprep.subr.bf16.mxu0 0
    %2604 = vmatpush1.bf16.msra.mxu0 0
    %2605 = vmatprep.subr.bf16.mxu0 0
    %2606 = vmatpush1.bf16.msra.mxu0 0
    %2607 = vmatprep.subr.bf16.mxu0 0
    %2608 = vmatpush1.bf16.msra.mxu0 0
    %2609 = vmatprep.subr.bf16.mxu0 0
    %2610 = vmatpush1.bf16.msra.mxu0 0
    %2611 = vmatprep.subr.bf16.mxu0 0
    %2612 = vmatpush1.bf16.msra.mxu0 0
    %2613 = vmatprep.subr.bf16.mxu0 0
    %2614 = vmatpush1.bf16.msra.mxu0 0
    %2615 = vmatprep.subr.bf16.mxu0 0
    %2616 = vmatpush1.bf16.msra.mxu0 0
    %2617 = vmatprep.mubr.bf16.mxu0 0
    %2618 = vmatmul.mubr.bf16.gmra.mrb[0].mxu0 %v2583
    %v2619 = vpop.f32.mrb[0].mxu0
    %v2620 = vadd.f32 0.0, %v2619
    %v2621 = vpop.f32.mrb[0].mxu0
    %v2622 = vpop.f32.mrb[0].mxu0
    %v2623 = vadd.f32 0.0, %v2622
    %v2624 = vpop.f32.mrb[0].mxu0
    %2625 = vdwg.mxu0
    %v2626 = vmul.f32 %v2576, %v2524
    %v2627 = vmul.f32 %v2579, %v2525
    %v2628 = vmul.f32 %v2620, %v2526
    %v2629 = vmul.f32 %v2623, %v2527
    %v2630 = vpack.c.bf16 %v2627, %v2626
    %v2631 = vpack.c.bf16 %v2629, %v2628
    %v2632 = vlaneseq
    %v2633 = vshrl.u32 %v2632, 7
    %v2634 = vsub.s32 0, %v2633
    %v2635 = vrot.slane %v2209, %v2634
    %2636 = vrot.lane.b32.xlu0 %v2077, 32
    %v2637 = vpop.permute.xlu0 %2636
    %2638 = vrot.lane.b32.xlu0 %v2078, 32
    %v2639 = vpop.permute.xlu0 %2638
    %v2643 = vsel %vm304, %v2630, 0
    %v2646 = vsel %vm304, %v2631, 0
    %2648 = vmatprep.subr.bf16.mxu0 0
    %2649 = vmatpush1.bf16.msra.mxu0 %v2637
    %2650 = vmatprep.subr.bf16.mxu0 0
    %2651 = vmatpush1.bf16.msra.mxu0 %v2639
    %2652 = vmatprep.subr.bf16.mxu0 0
    %2653 = vmatpush1.bf16.msra.mxu0 0
    %2654 = vmatprep.subr.bf16.mxu0 0
    %2655 = vmatpush1.bf16.msra.mxu0 0
    %2656 = vmatprep.subr.bf16.mxu0 0
    %2657 = vmatpush1.bf16.msra.mxu0 0
    %2658 = vmatprep.subr.bf16.mxu0 0
    %2659 = vmatpush1.bf16.msra.mxu0 0
    %2660 = vmatprep.subr.bf16.mxu0 0
    %2661 = vmatpush1.bf16.msra.mxu0 0
    %2662 = vmatprep.subr.bf16.mxu0 0
    %2663 = vmatpush1.bf16.msra.mxu0 0
    %2664 = vmatprep.subr.bf16.mxu0 0
    %2665 = vmatpush1.bf16.msra.mxu0 0
    %2666 = vmatprep.subr.bf16.mxu0 0
    %2667 = vmatpush1.bf16.msra.mxu0 0
    %2668 = vmatprep.subr.bf16.mxu0 0
    %2669 = vmatpush1.bf16.msra.mxu0 0
    %2670 = vmatprep.subr.bf16.mxu0 0
    %2671 = vmatpush1.bf16.msra.mxu0 0
    %2672 = vmatprep.subr.bf16.mxu0 0
    %2673 = vmatpush1.bf16.msra.mxu0 0
    %2674 = vmatprep.subr.bf16.mxu0 0
    %2675 = vmatpush1.bf16.msra.mxu0 0
    %2676 = vmatprep.subr.bf16.mxu0 0
    %2677 = vmatpush1.bf16.msra.mxu0 0
    %2678 = vmatprep.subr.bf16.mxu0 0
    %2679 = vmatpush1.bf16.msra.mxu0 0
    %2680 = vmatprep.mubr.bf16.mxu0 0
    %2681 = vmatmul.mubr.bf16.gmra.mrb[0].mxu0 %v2643
    %v2682 = vpop.f32.mrb[0].mxu0
    %v2683 = vadd.f32 %v2635, %v2682
    %v2684 = vpop.f32.mrb[0].mxu0
    %v2685 = vpop.f32.mrb[0].mxu0
    %v2686 = vadd.f32 %v2635, %v2685
    %v2687 = vpop.f32.mrb[0].mxu0
    %2688 = vmatprep.mubr.bf16.mxu0 0
    %2689 = vmatmul.mubr.bf16.gmra.mrb[0].mxu0 %v2646
    %v2690 = vpop.f32.mrb[0].mxu0
    %v2691 = vadd.f32 %v2635, %v2690
    %v2692 = vpop.f32.mrb[0].mxu0
    %v2693 = vpop.f32.mrb[0].mxu0
    %v2694 = vadd.f32 %v2635, %v2693
    %v2695 = vpop.f32.mrb[0].mxu0
    %2696 = vdwg.mxu0
    %v2697 = vadd.f32 %v1993, %v2683
    %v2698 = vadd.f32 %v1994, %v2686
    %v2699 = vadd.f32 %v1995, %v2691
    %v2700 = vadd.f32 %v1996, %v2694
    %v2701 = vld [vmem:[%s4 + $0x2e] sm:$0x1]
    %v2702 = vld [vmem:[%s4 + $0x2f] sm:$0x1]
    %v2703 = vsel %vm304, %v2697, 0.0
    %2704 = vadd.xlane.f32.xlu0 %v2703
    %v2705 = vpop.xlane.xlu0 %2704
    %v2706 = vsel %vm304, %v2698, 0.0
    %2707 = vadd.xlane.f32.xlu0 %v2706
    %v2708 = vpop.xlane.xlu0 %2707
    %v2709 = vsel %vm304, %v2699, 0.0
    %2710 = vadd.xlane.f32.xlu0 %v2709
    %v2711 = vpop.xlane.xlu0 %2710
    %v2712 = vsel %vm304, %v2700, 0.0
    %2713 = vadd.xlane.f32.xlu0 %v2712
    %v2714 = vpop.xlane.xlu0 %2713
    %v2715 = vmul.f32 %v2705, %v317
    %v2716 = vmul.f32 %v2708, %v317
    %v2717 = vmul.f32 %v2711, %v317
    %v2718 = vmul.f32 %v2714, %v317
    %v2719 = vsub.f32 %v2697, %v2715
    %v2720 = vsub.f32 %v2698, %v2716
    %v2721 = vsub.f32 %v2699, %v2717
    %v2722 = vsub.f32 %v2700, %v2718
    %v2723 = vmul.f32 %v2719, %v2719
    %v2724 = vmul.f32 %v2720, %v2720
    %v2725 = vmul.f32 %v2721, %v2721
    %v2726 = vmul.f32 %v2722, %v2722
    %v2727 = vsel %vm304, %v2723, 0.0
    %2728 = vadd.xlane.f32.xlu0 %v2727
    %v2729 = vpop.xlane.xlu0 %2728
    %v2730 = vsel %vm304, %v2724, 0.0
    %2731 = vadd.xlane.f32.xlu0 %v2730
    %v2732 = vpop.xlane.xlu0 %2731
    %v2733 = vsel %vm304, %v2725, 0.0
    %2734 = vadd.xlane.f32.xlu0 %v2733
    %v2735 = vpop.xlane.xlu0 %2734
    %v2736 = vsel %vm304, %v2726, 0.0
    %2737 = vadd.xlane.f32.xlu0 %v2736
    %v2738 = vpop.xlane.xlu0 %2737
    %v2739 = vmul.f32 %v2729, %v317
    %v2740 = vmul.f32 %v2732, %v317
    %v2741 = vmul.f32 %v2735, %v317
    %v2742 = vmul.f32 %v2738, %v317
    %v2743 = vadd.f32 %v2739, 1e-05
    %v2744 = vadd.f32 %v2740, 1e-05
    %v2745 = vadd.f32 %v2741, 1e-05
    %v2746 = vadd.f32 %v2742, 1e-05
    %v2747 = vrsqrt.pop %v2743
    %v2748 = vrsqrt.pop %v2744
    %v2749 = vrsqrt.pop %v2745
    %v2750 = vrsqrt.pop %v2746
    %v2751 = vmul.f32 %v2719, %v2747
    %v2752 = vmul.f32 %v2720, %v2748
    %v2753 = vmul.f32 %v2721, %v2749
    %v2754 = vmul.f32 %v2722, %v2750
    %v2755 = vlaneseq
    %v2756 = vshrl.u32 %v2755, 7
    %v2757 = vsub.s32 0, %v2756
    %v2758 = vrot.slane %v2701, %v2757
    %v2759 = vmul.f32 %v2751, %v2758
    %v2760 = vmul.f32 %v2752, %v2758
    %v2761 = vmul.f32 %v2753, %v2758
    %v2762 = vmul.f32 %v2754, %v2758
    %v2763 = vlaneseq
    %v2764 = vshrl.u32 %v2763, 7
    %v2765 = vsub.s32 0, %v2764
    %v2766 = vrot.slane %v2702, %v2765
    %v2767 = vadd.f32 %v2759, %v2766
    %v2768 = vadd.f32 %v2760, %v2766
    %v2769 = vadd.f32 %v2761, %v2766
    %v2770 = vadd.f32 %v2762, %v2766
    %v2771 = vadd.f32 %v2767, %v298
    %v2772 = vadd.f32 %v2768, %v299
    %v2773 = vadd.f32 %v2769, %v300
    %v2774 = vadd.f32 %v2770, %v301
    %v2775 = vld [vmem:[%s1 + $0x20] sm:$0xff]
    %v2776 = vld [vmem:[%s1 + $0x58] sm:$0xff]
    %v2777 = vld [vmem:[%s1 + $0x90] sm:$0xff]
    %v2778 = vld [vmem:[%s1 + $0xc8] sm:$0xff]
    %v2779 = vpack.c.bf16 %v2772, %v2771
    %v2780 = vpack.c.bf16 %v2774, %v2773
    %v2781 = vpack.c.bf16 %v2776, %v2775
    %v2782 = vpack.c.bf16 %v2778, %v2777
    %v2783 = vld [vmem:[%s4 + $0x27] sm:$0x1]
    %v2784 = vlaneseq
    %v2785 = vshrl.u32 %v2784, 7
    %v2786 = vsub.s32 0, %v2785
    %v2787 = vrot.slane %v2783, %v2786
    %v2789 = vsel %vm304, %v2779, 0
    %v2792 = vsel %vm304, %v2780, 0
    %2794 = vmatprep.subr.bf16.mxu0 0
    %2795 = vmatpush1.bf16.msra.mxu0 %v2781
    %2796 = vmatprep.subr.bf16.mxu0 0
    %2797 = vmatpush1.bf16.msra.mxu0 %v2782
    %2798 = vmatprep.subr.bf16.mxu0 0
    %2799 = vmatpush1.bf16.msra.mxu0 0
    %2800 = vmatprep.subr.bf16.mxu0 0
    %2801 = vmatpush1.bf16.msra.mxu0 0
    %2802 = vmatprep.subr.bf16.mxu0 0
    %2803 = vmatpush1.bf16.msra.mxu0 0
    %2804 = vmatprep.subr.bf16.mxu0 0
    %2805 = vmatpush1.bf16.msra.mxu0 0
    %2806 = vmatprep.subr.bf16.mxu0 0
    %2807 = vmatpush1.bf16.msra.mxu0 0
    %2808 = vmatprep.subr.bf16.mxu0 0
    %2809 = vmatpush1.bf16.msra.mxu0 0
    %2810 = vmatprep.subr.bf16.mxu0 0
    %2811 = vmatpush1.bf16.msra.mxu0 0
    %2812 = vmatprep.subr.bf16.mxu0 0
    %2813 = vmatpush1.bf16.msra.mxu0 0
    %2814 = vmatprep.subr.bf16.mxu0 0
    %2815 = vmatpush1.bf16.msra.mxu0 0
    %2816 = vmatprep.subr.bf16.mxu0 0
    %2817 = vmatpush1.bf16.msra.mxu0 0
    %2818 = vmatprep.subr.bf16.mxu0 0
    %2819 = vmatpush1.bf16.msra.mxu0 0
    %2820 = vmatprep.subr.bf16.mxu0 0
    %2821 = vmatpush1.bf16.msra.mxu0 0
    %2822 = vmatprep.subr.bf16.mxu0 0
    %2823 = vmatpush1.bf16.msra.mxu0 0
    %2824 = vmatprep.subr.bf16.mxu0 0
    %2825 = vmatpush1.bf16.msra.mxu0 0
    %2826 = vmatprep.mubr.bf16.mxu0 0
    %2827 = vmatmul.mubr.bf16.gmra.mrb[0].mxu0 %v2789
    %v2828 = vpop.f32.mrb[0].mxu0
    %v2829 = vadd.f32 %v2787, %v2828
    %v2830 = vpop.f32.mrb[0].mxu0
    %v2831 = vpop.f32.mrb[0].mxu0
    %v2832 = vadd.f32 %v2787, %v2831
    %v2833 = vpop.f32.mrb[0].mxu0
    %2834 = vmatprep.mubr.bf16.mxu0 0
    %2835 = vmatmul.mubr.bf16.gmra.mrb[0].mxu0 %v2792
    %v2836 = vpop.f32.mrb[0].mxu0
    %v2837 = vadd.f32 %v2787, %v2836
    %v2838 = vpop.f32.mrb[0].mxu0
    %v2839 = vpop.f32.mrb[0].mxu0
    %v2840 = vadd.f32 %v2787, %v2839
    %v2841 = vpop.f32.mrb[0].mxu0
    %2842 = vdwg.mxu0
    %v2843 = vld [vmem:[%s4 + $0x28] sm:$0x1]
    %v2844 = vlaneseq
    %v2845 = vshrl.u32 %v2844, 7
    %v2846 = vsub.s32 0, %v2845
    %v2847 = vrot.slane %v2843, %v2846
    %2850 = vrot.lane.b32.xlu0 %v2781, 96
    %v2851 = vpop.permute.xlu0 %2850
    %2852 = vrot.lane.b32.xlu0 %v2782, 96
    %v2853 = vpop.permute.xlu0 %2852
    %2856 = vmatprep.subr.bf16.mxu0 0
    %2857 = vmatpush1.bf16.msra.mxu0 %v2851
    %2858 = vmatprep.subr.bf16.mxu0 0
    %2859 = vmatpush1.bf16.msra.mxu0 %v2853
    %2860 = vmatprep.subr.bf16.mxu0 0
    %2861 = vmatpush1.bf16.msra.mxu0 0
    %2862 = vmatprep.subr.bf16.mxu0 0
    %2863 = vmatpush1.bf16.msra.mxu0 0
    %2864 = vmatprep.subr.bf16.mxu0 0
    %2865 = vmatpush1.bf16.msra.mxu0 0
    %2866 = vmatprep.subr.bf16.mxu0 0
    %2867 = vmatpush1.bf16.msra.mxu0 0
    %2868 = vmatprep.subr.bf16.mxu0 0
    %2869 = vmatpush1.bf16.msra.mxu0 0
    %2870 = vmatprep.subr.bf16.mxu0 0
    %2871 = vmatpush1.bf16.msra.mxu0 0
    %2872 = vmatprep.subr.bf16.mxu0 0
    %2873 = vmatpush1.bf16.msra.mxu0 0
    %2874 = vmatprep.subr.bf16.mxu0 0
    %2875 = vmatpush1.bf16.msra.mxu0 0
    %2876 = vmatprep.subr.bf16.mxu0 0
    %2877 = vmatpush1.bf16.msra.mxu0 0
    %2878 = vmatprep.subr.bf16.mxu0 0
    %2879 = vmatpush1.bf16.msra.mxu0 0
    %2880 = vmatprep.subr.bf16.mxu0 0
    %2881 = vmatpush1.bf16.msra.mxu0 0
    %2882 = vmatprep.subr.bf16.mxu0 0
    %2883 = vmatpush1.bf16.msra.mxu0 0
    %2884 = vmatprep.subr.bf16.mxu0 0
    %2885 = vmatpush1.bf16.msra.mxu0 0
    %2886 = vmatprep.subr.bf16.mxu0 0
    %2887 = vmatpush1.bf16.msra.mxu0 0
    %2888 = vmatprep.mubr.bf16.mxu0 0
    %2889 = vmatmul.mubr.bf16.gmra.mrb[0].mxu0 %v1185
    %v2890 = vpop.f32.mrb[0].mxu0
    %v2891 = vadd.f32 %v2847, %v2890
    %v2892 = vpop.f32.mrb[0].mxu0
    %v2893 = vpop.f32.mrb[0].mxu0
    %v2894 = vadd.f32 %v2847, %v2893
    %v2895 = vpop.f32.mrb[0].mxu0
    %2896 = vmatprep.mubr.bf16.mxu0 0
    %2897 = vmatmul.mubr.bf16.gmra.mrb[0].mxu0 %v1188
    %v2898 = vpop.f32.mrb[0].mxu0
    %v2899 = vadd.f32 %v2847, %v2898
    %v2900 = vpop.f32.mrb[0].mxu0
    %v2901 = vpop.f32.mrb[0].mxu0
    %v2902 = vadd.f32 %v2847, %v2901
    %v2903 = vpop.f32.mrb[0].mxu0
    %2904 = vdwg.mxu0
    %v2905 = vld [vmem:[%s4 + $0x29] sm:$0x1]
    %v2906 = vmul.f32 %v2891, %v41
    %v2907 = vmul.f32 %v2894, %v41
    %v2908 = vmul.f32 %v2899, %v41
    %v2909 = vmul.f32 %v2902, %v41
    %v2910 = vmul.f32 %v2891, %v46
    %v2911 = vmul.f32 %v2894, %v46
    %v2912 = vmul.f32 %v2899, %v46
    %v2913 = vmul.f32 %v2902, %v46
    %v2914 = vmul.f32 %v2891, %v51
    %v2915 = vmul.f32 %v2894, %v51
    %v2916 = vmul.f32 %v2899, %v51
    %v2917 = vmul.f32 %v2902, %v51
    %v2918 = vmul.f32 %v2891, %v56
    %v2919 = vmul.f32 %v2894, %v56
    %v2920 = vmul.f32 %v2899, %v56
    %v2921 = vmul.f32 %v2902, %v56
    %v2922 = vmul.f32 %v2891, %v519
    %v2923 = vmul.f32 %v2894, %v519
    %v2924 = vmul.f32 %v2899, %v519
    %v2925 = vmul.f32 %v2902, %v519
    %v2926 = vmul.f32 %v2891, %v527
    %v2927 = vmul.f32 %v2894, %v527
    %v2928 = vmul.f32 %v2899, %v527
    %v2929 = vmul.f32 %v2902, %v527
    %v2930 = vmul.f32 %v2891, %v535
    %v2931 = vmul.f32 %v2894, %v535
    %v2932 = vmul.f32 %v2899, %v535
    %v2933 = vmul.f32 %v2902, %v535
    %v2934 = vmul.f32 %v2891, %v543
    %v2935 = vmul.f32 %v2894, %v543
    %v2936 = vmul.f32 %v2899, %v543
    %v2937 = vmul.f32 %v2902, %v543
    %v2938 = vpack.c.bf16 %v2832, %v2829
    %v2939 = vpack.c.bf16 %v2840, %v2837
    %v2940 = vpack.c.bf16 %v2907, %v2906
    %v2941 = vpack.c.bf16 %v2911, %v2910
    %v2942 = vpack.c.bf16 %v2915, %v2914
    %v2943 = vpack.c.bf16 %v2919, %v2918
    %v2944 = vpack.c.bf16 %v2909, %v2908
    %v2945 = vpack.c.bf16 %v2913, %v2912
    %v2946 = vpack.c.bf16 %v2917, %v2916
    %v2947 = vpack.c.bf16 %v2921, %v2920
    %v2949 = vsel %vm304, %v2938, 0
    %v2952 = vsel %vm304, %v2940, 0
    %v2955 = vsel %vm304, %v2941, 0
    %v2958 = vsel %vm304, %v2942, 0
    %v2961 = vsel %vm304, %v2943, 0
    %2963 = vmatprep.subr.bf16.mxu0 0
    %2964 = vmatpush1.bf16.xpose.msra.mxu0 %v2952
    %2965 = vmatprep.subr.bf16.mxu0 0
    %2966 = vmatpush1.bf16.xpose.msra.mxu0 %v2955
    %2967 = vmatprep.subr.bf16.mxu0 0
    %2968 = vmatpush1.bf16.xpose.msra.mxu0 %v2958
    %2969 = vmatprep.subr.bf16.mxu0 0
    %2970 = vmatpush1.bf16.xpose.msra.mxu0 %v2961
    %2971 = vmatprep.subr.bf16.mxu0 0
    %2972 = vmatpush1.bf16.xpose.msra.mxu0 0
    %2973 = vmatprep.subr.bf16.mxu0 0
    %2974 = vmatpush1.bf16.xpose.msra.mxu0 0
    %2975 = vmatprep.subr.bf16.mxu0 0
    %2976 = vmatpush1.bf16.xpose.msra.mxu0 0
    %2977 = vmatprep.subr.bf16.mxu0 0
    %2978 = vmatpush1.bf16.xpose.msra.mxu0 0
    %2979 = vmatprep.subr.bf16.mxu0 0
    %2980 = vmatpush1.bf16.xpose.msra.mxu0 0
    %2981 = vmatprep.subr.bf16.mxu0 0
    %2982 = vmatpush1.bf16.xpose.msra.mxu0 0
    %2983 = vmatprep.subr.bf16.mxu0 0
    %2984 = vmatpush1.bf16.xpose.msra.mxu0 0
    %2985 = vmatprep.subr.bf16.mxu0 0
    %2986 = vmatpush1.bf16.xpose.msra.mxu0 0
    %2987 = vmatprep.subr.bf16.mxu0 0
    %2988 = vmatpush1.bf16.xpose.msra.mxu0 0
    %2989 = vmatprep.subr.bf16.mxu0 0
    %2990 = vmatpush1.bf16.xpose.msra.mxu0 0
    %2991 = vmatprep.subr.bf16.mxu0 0
    %2992 = vmatpush1.bf16.xpose.msra.mxu0 0
    %2993 = vmatprep.subr.bf16.mxu0 0
    %2994 = vmatpush1.bf16.xpose.msra.mxu0 0
    %2995 = vmatprep.mubr.bf16.mxu0 0
    %2996 = vmatmul.mubr.bf16.gmra.mrb[0].mxu0 %v2949
    %v2997 = vpop.f32.mrb[0].mxu0
    %v2998 = vadd.f32 0.0, %v2997
    %v2999 = vpop.f32.mrb[0].mxu0
    %v3000 = vpop.f32.mrb[0].mxu0
    %v3001 = vadd.f32 0.0, %v3000
    %v3002 = vpop.f32.mrb[0].mxu0
    %3003 = vdwg.mxu0
    %v3005 = vsel %vm304, %v2939, 0
    %v3008 = vsel %vm304, %v2944, 0
    %v3011 = vsel %vm304, %v2945, 0
    %v3014 = vsel %vm304, %v2946, 0
    %v3017 = vsel %vm304, %v2947, 0
    %3019 = vmatprep.subr.bf16.mxu0 0
    %3020 = vmatpush1.bf16.xpose.msra.mxu0 %v3008
    %3021 = vmatprep.subr.bf16.mxu0 0
    %3022 = vmatpush1.bf16.xpose.msra.mxu0 %v3011
    %3023 = vmatprep.subr.bf16.mxu0 0
    %3024 = vmatpush1.bf16.xpose.msra.mxu0 %v3014
    %3025 = vmatprep.subr.bf16.mxu0 0
    %3026 = vmatpush1.bf16.xpose.msra.mxu0 %v3017
    %3027 = vmatprep.subr.bf16.mxu0 0
    %3028 = vmatpush1.bf16.xpose.msra.mxu0 0
    %3029 = vmatprep.subr.bf16.mxu0 0
    %3030 = vmatpush1.bf16.xpose.msra.mxu0 0
    %3031 = vmatprep.subr.bf16.mxu0 0
    %3032 = vmatpush1.bf16.xpose.msra.mxu0 0
    %3033 = vmatprep.subr.bf16.mxu0 0
    %3034 = vmatpush1.bf16.xpose.msra.mxu0 0
    %3035 = vmatprep.subr.bf16.mxu0 0
    %3036 = vmatpush1.bf16.xpose.msra.mxu0 0
    %3037 = vmatprep.subr.bf16.mxu0 0
    %3038 = vmatpush1.bf16.xpose.msra.mxu0 0
    %3039 = vmatprep.subr.bf16.mxu0 0
    %3040 = vmatpush1.bf16.xpose.msra.mxu0 0
    %3041 = vmatprep.subr.bf16.mxu0 0
    %3042 = vmatpush1.bf16.xpose.msra.mxu0 0
    %3043 = vmatprep.subr.bf16.mxu0 0
    %3044 = vmatpush1.bf16.xpose.msra.mxu0 0
    %3045 = vmatprep.subr.bf16.mxu0 0
    %3046 = vmatpush1.bf16.xpose.msra.mxu0 0
    %3047 = vmatprep.subr.bf16.mxu0 0
    %3048 = vmatpush1.bf16.xpose.msra.mxu0 0
    %3049 = vmatprep.subr.bf16.mxu0 0
    %3050 = vmatpush1.bf16.xpose.msra.mxu0 0
    %3051 = vmatprep.mubr.bf16.mxu0 0
    %3052 = vmatmul.mubr.bf16.gmra.mrb[0].mxu0 %v3005
    %v3053 = vpop.f32.mrb[0].mxu0
    %v3054 = vadd.f32 0.0, %v3053
    %v3055 = vpop.f32.mrb[0].mxu0
    %v3056 = vpop.f32.mrb[0].mxu0
    %v3057 = vadd.f32 0.0, %v3056
    %v3058 = vpop.f32.mrb[0].mxu0
    %3059 = vdwg.mxu0
    %v3060 = vsel %vm156, %v2998, -inf
    %3061 = vmax.xlane.f32.xlu0 %v3060
    %v3062 = vpop.xlane.xlu0 %3061
    %v3063 = vsel %vm156, %v3001, -inf
    %3064 = vmax.xlane.f32.xlu0 %v3063
    %v3065 = vpop.xlane.xlu0 %3064
    %v3066 = vsel %vm156, %v3054, -inf
    %3067 = vmax.xlane.f32.xlu0 %v3066
    %v3068 = vpop.xlane.xlu0 %3067
    %v3069 = vsel %vm156, %v3057, -inf
    %3070 = vmax.xlane.f32.xlu0 %v3069
    %v3071 = vpop.xlane.xlu0 %3070
    %v3072 = vsub.f32 %v2998, %v3062
    %v3073 = vsub.f32 %v3001, %v3065
    %v3074 = vsub.f32 %v3054, %v3068
    %v3075 = vsub.f32 %v3057, %v3071
    %v3076 = vmul.f32 %v3072, 1.442695
    %v3077 = vpow.pop %v3076
    %v3078 = vmul.f32 %v3073, 1.442695
    %v3079 = vpow.pop %v3078
    %v3080 = vmul.f32 %v3074, 1.442695
    %v3081 = vpow.pop %v3080
    %v3082 = vmul.f32 %v3075, 1.442695
    %v3083 = vpow.pop %v3082
    %v3084 = vsel %vm735, %v3077, 0.0
    %3085 = vadd.xlane.f32.xlu0 %v3084
    %v3086 = vpop.xlane.xlu0 %3085
    %v3087 = vsel %vm735, %v3079, 0.0
    %3088 = vadd.xlane.f32.xlu0 %v3087
    %v3089 = vpop.xlane.xlu0 %3088
    %v3090 = vsel %vm735, %v3081, 0.0
    %3091 = vadd.xlane.f32.xlu0 %v3090
    %v3092 = vpop.xlane.xlu0 %3091
    %v3093 = vsel %vm735, %v3083, 0.0
    %3094 = vadd.xlane.f32.xlu0 %v3093
    %v3095 = vpop.xlane.xlu0 %3094
    %v3096 = vrcp.pop %v3086
    %v3097 = vrcp.pop %v3089
    %v3098 = vrcp.pop %v3092
    %v3099 = vrcp.pop %v3095
    %3104 = vrot.lane.b32.xlu0 %v3077, 112
    %v3105 = vpop.permute.xlu0 %3104
    %3106 = vrot.lane.b32.xlu0 %v3079, 112
    %v3107 = vpop.permute.xlu0 %3106
    %3108 = vrot.lane.b32.xlu0 %v3081, 112
    %v3109 = vpop.permute.xlu0 %3108
    %3110 = vrot.lane.b32.xlu0 %v3083, 112
    %v3111 = vpop.permute.xlu0 %3110
    %v3116 = vsel %vm735, %v3105, 0.0
    %3117 = vadd.xlane.f32.xlu0 %v3116
    %v3118 = vpop.xlane.xlu0 %3117
    %v3119 = vsel %vm735, %v3107, 0.0
    %3120 = vadd.xlane.f32.xlu0 %v3119
    %v3121 = vpop.xlane.xlu0 %3120
    %v3122 = vsel %vm735, %v3109, 0.0
    %3123 = vadd.xlane.f32.xlu0 %v3122
    %v3124 = vpop.xlane.xlu0 %3123
    %v3125 = vsel %vm735, %v3111, 0.0
    %3126 = vadd.xlane.f32.xlu0 %v3125
    %v3127 = vpop.xlane.xlu0 %3126
    %v3128 = vrcp.pop %v3118
    %v3129 = vrcp.pop %v3121
    %v3130 = vrcp.pop %v3124
    %v3131 = vrcp.pop %v3127
    %3132 = vrot.lane.b32.xlu0 %v3077, 96
    %v3133 = vpop.permute.xlu0 %3132
    %3134 = vrot.lane.b32.xlu0 %v3079, 96
    %v3135 = vpop.permute.xlu0 %3134
    %3136 = vrot.lane.b32.xlu0 %v3081, 96
    %v3137 = vpop.permute.xlu0 %3136
    %3138 = vrot.lane.b32.xlu0 %v3083, 96
    %v3139 = vpop.permute.xlu0 %3138
    %v3144 = vsel %vm735, %v3133, 0.0
    %3145 = vadd.xlane.f32.xlu0 %v3144
    %v3146 = vpop.xlane.xlu0 %3145
    %v3147 = vsel %vm735, %v3135, 0.0
    %3148 = vadd.xlane.f32.xlu0 %v3147
    %v3149 = vpop.xlane.xlu0 %3148
    %v3150 = vsel %vm735, %v3137, 0.0
    %3151 = vadd.xlane.f32.xlu0 %v3150
    %v3152 = vpop.xlane.xlu0 %3151
    %v3153 = vsel %vm735, %v3139, 0.0
    %3154 = vadd.xlane.f32.xlu0 %v3153
    %v3155 = vpop.xlane.xlu0 %3154
    %v3156 = vrcp.pop %v3146
    %v3157 = vrcp.pop %v3149
    %v3158 = vrcp.pop %v3152
    %v3159 = vrcp.pop %v3155
    %3160 = vrot.lane.b32.xlu0 %v3077, 80
    %v3161 = vpop.permute.xlu0 %3160
    %3162 = vrot.lane.b32.xlu0 %v3079, 80
    %v3163 = vpop.permute.xlu0 %3162
    %3164 = vrot.lane.b32.xlu0 %v3081, 80
    %v3165 = vpop.permute.xlu0 %3164
    %3166 = vrot.lane.b32.xlu0 %v3083, 80
    %v3167 = vpop.permute.xlu0 %3166
    %v3172 = vsel %vm735, %v3161, 0.0
    %3173 = vadd.xlane.f32.xlu0 %v3172
    %v3174 = vpop.xlane.xlu0 %3173
    %v3175 = vsel %vm735, %v3163, 0.0
    %3176 = vadd.xlane.f32.xlu0 %v3175
    %v3177 = vpop.xlane.xlu0 %3176
    %v3178 = vsel %vm735, %v3165, 0.0
    %3179 = vadd.xlane.f32.xlu0 %v3178
    %v3180 = vpop.xlane.xlu0 %3179
    %v3181 = vsel %vm735, %v3167, 0.0
    %3182 = vadd.xlane.f32.xlu0 %v3181
    %v3183 = vpop.xlane.xlu0 %3182
    %v3184 = vrcp.pop %v3174
    %v3185 = vrcp.pop %v3177
    %v3186 = vrcp.pop %v3180
    %v3187 = vrcp.pop %v3183
    %v3188 = vsel %vm840, %v3096, %v3128
    %v3189 = vsel %vm840, %v3097, %v3129
    %v3190 = vsel %vm840, %v3098, %v3130
    %v3191 = vsel %vm840, %v3099, %v3131
    %v3192 = vsel %vm735, %v3188, %v3156
    %v3193 = vsel %vm735, %v3189, %v3157
    %v3194 = vsel %vm735, %v3190, %v3158
    %v3195 = vsel %vm735, %v3191, %v3159
    %v3196 = vsel %vm849, %v3192, %v3184
    %v3197 = vsel %vm849, %v3193, %v3185
    %v3198 = vsel %vm849, %v3194, %v3186
    %v3199 = vsel %vm849, %v3195, %v3187
    %v3200 = vpack.c.bf16 %v3079, %v3077
    %v3201 = vpack.c.bf16 %v3083, %v3081
    %v3202 = vpack.c.bf16 %v2923, %v2922
    %v3203 = vpack.c.bf16 %v2927, %v2926
    %v3204 = vpack.c.bf16 %v2931, %v2930
    %v3205 = vpack.c.bf16 %v2935, %v2934
    %v3206 = vpack.c.bf16 %v2925, %v2924
    %v3207 = vpack.c.bf16 %v2929, %v2928
    %v3208 = vpack.c.bf16 %v2933, %v2932
    %v3209 = vpack.c.bf16 %v2937, %v2936
    %3214 = vrot.lane.b32.xlu0 %v3202, 96
    %v3215 = vpop.permute.xlu0 %3214
    %3216 = vrot.lane.b32.xlu0 %v3203, 96
    %v3217 = vpop.permute.xlu0 %3216
    %3218 = vrot.lane.b32.xlu0 %v3204, 96
    %v3219 = vpop.permute.xlu0 %3218
    %3220 = vrot.lane.b32.xlu0 %v3205, 96
    %v3221 = vpop.permute.xlu0 %3220
    %v3227 = vsel %vm156, %v3200, 0
    %3229 = vmatprep.subr.bf16.mxu0 0
    %3230 = vmatpush1.bf16.msra.mxu0 %v3215
    %3231 = vmatprep.subr.bf16.mxu0 0
    %3232 = vmatpush1.bf16.msra.mxu0 %v3217
    %3233 = vmatprep.subr.bf16.mxu0 0
    %3234 = vmatpush1.bf16.msra.mxu0 %v3219
    %3235 = vmatprep.subr.bf16.mxu0 0
    %3236 = vmatpush1.bf16.msra.mxu0 %v3221
    %3237 = vmatprep.subr.bf16.mxu0 0
    %3238 = vmatpush1.bf16.msra.mxu0 0
    %3239 = vmatprep.subr.bf16.mxu0 0
    %3240 = vmatpush1.bf16.msra.mxu0 0
    %3241 = vmatprep.subr.bf16.mxu0 0
    %3242 = vmatpush1.bf16.msra.mxu0 0
    %3243 = vmatprep.subr.bf16.mxu0 0
    %3244 = vmatpush1.bf16.msra.mxu0 0
    %3245 = vmatprep.subr.bf16.mxu0 0
    %3246 = vmatpush1.bf16.msra.mxu0 0
    %3247 = vmatprep.subr.bf16.mxu0 0
    %3248 = vmatpush1.bf16.msra.mxu0 0
    %3249 = vmatprep.subr.bf16.mxu0 0
    %3250 = vmatpush1.bf16.msra.mxu0 0
    %3251 = vmatprep.subr.bf16.mxu0 0
    %3252 = vmatpush1.bf16.msra.mxu0 0
    %3253 = vmatprep.subr.bf16.mxu0 0
    %3254 = vmatpush1.bf16.msra.mxu0 0
    %3255 = vmatprep.subr.bf16.mxu0 0
    %3256 = vmatpush1.bf16.msra.mxu0 0
    %3257 = vmatprep.subr.bf16.mxu0 0
    %3258 = vmatpush1.bf16.msra.mxu0 0
    %3259 = vmatprep.subr.bf16.mxu0 0
    %3260 = vmatpush1.bf16.msra.mxu0 0
    %3261 = vmatprep.mubr.bf16.mxu0 0
    %3262 = vmatmul.mubr.bf16.gmra.mrb[0].mxu0 %v3227
    %v3263 = vpop.f32.mrb[0].mxu0
    %v3264 = vadd.f32 0.0, %v3263
    %v3265 = vpop.f32.mrb[0].mxu0
    %v3266 = vpop.f32.mrb[0].mxu0
    %v3267 = vadd.f32 0.0, %v3266
    %v3268 = vpop.f32.mrb[0].mxu0
    %3269 = vdwg.mxu0
    %3274 = vrot.lane.b32.xlu0 %v3206, 96
    %v3275 = vpop.permute.xlu0 %3274
    %3276 = vrot.lane.b32.xlu0 %v3207, 96
    %v3277 = vpop.permute.xlu0 %3276
    %3278 = vrot.lane.b32.xlu0 %v3208, 96
    %v3279 = vpop.permute.xlu0 %3278
    %3280 = vrot.lane.b32.xlu0 %v3209, 96
    %v3281 = vpop.permute.xlu0 %3280
    %v3287 = vsel %vm156, %v3201, 0
    %3289 = vmatprep.subr.bf16.mxu0 0
    %3290 = vmatpush1.bf16.msra.mxu0 %v3275
    %3291 = vmatprep.subr.bf16.mxu0 0
    %3292 = vmatpush1.bf16.msra.mxu0 %v3277
    %3293 = vmatprep.subr.bf16.mxu0 0
    %3294 = vmatpush1.bf16.msra.mxu0 %v3279
    %3295 = vmatprep.subr.bf16.mxu0 0
    %3296 = vmatpush1.bf16.msra.mxu0 %v3281
    %3297 = vmatprep.subr.bf16.mxu0 0
    %3298 = vmatpush1.bf16.msra.mxu0 0
    %3299 = vmatprep.subr.bf16.mxu0 0
    %3300 = vmatpush1.bf16.msra.mxu0 0
    %3301 = vmatprep.subr.bf16.mxu0 0
    %3302 = vmatpush1.bf16.msra.mxu0 0
    %3303 = vmatprep.subr.bf16.mxu0 0
    %3304 = vmatpush1.bf16.msra.mxu0 0
    %3305 = vmatprep.subr.bf16.mxu0 0
    %3306 = vmatpush1.bf16.msra.mxu0 0
    %3307 = vmatprep.subr.bf16.mxu0 0
    %3308 = vmatpush1.bf16.msra.mxu0 0
    %3309 = vmatprep.subr.bf16.mxu0 0
    %3310 = vmatpush1.bf16.msra.mxu0 0
    %3311 = vmatprep.subr.bf16.mxu0 0
    %3312 = vmatpush1.bf16.msra.mxu0 0
    %3313 = vmatprep.subr.bf16.mxu0 0
    %3314 = vmatpush1.bf16.msra.mxu0 0
    %3315 = vmatprep.subr.bf16.mxu0 0
    %3316 = vmatpush1.bf16.msra.mxu0 0
    %3317 = vmatprep.subr.bf16.mxu0 0
    %3318 = vmatpush1.bf16.msra.mxu0 0
    %3319 = vmatprep.subr.bf16.mxu0 0
    %3320 = vmatpush1.bf16.msra.mxu0 0
    %3321 = vmatprep.mubr.bf16.mxu0 0
    %3322 = vmatmul.mubr.bf16.gmra.mrb[0].mxu0 %v3287
    %v3323 = vpop.f32.mrb[0].mxu0
    %v3324 = vadd.f32 0.0, %v3323
    %v3325 = vpop.f32.mrb[0].mxu0
    %v3326 = vpop.f32.mrb[0].mxu0
    %v3327 = vadd.f32 0.0, %v3326
    %v3328 = vpop.f32.mrb[0].mxu0
    %3329 = vdwg.mxu0
    %v3330 = vmul.f32 %v3264, %v3196
    %v3331 = vmul.f32 %v3267, %v3197
    %v3332 = vmul.f32 %v3324, %v3198
    %v3333 = vmul.f32 %v3327, %v3199
    %v3334 = vpack.c.bf16 %v3331, %v3330
    %v3335 = vpack.c.bf16 %v3333, %v3332
    %v3336 = vlaneseq
    %v3337 = vshrl.u32 %v3336, 7
    %v3338 = vsub.s32 0, %v3337
    %v3339 = vrot.slane %v2905, %v3338
    %3340 = vrot.lane.b32.xlu0 %v2781, 32
    %v3341 = vpop.permute.xlu0 %3340
    %3342 = vrot.lane.b32.xlu0 %v2782, 32
    %v3343 = vpop.permute.xlu0 %3342
    %v3347 = vsel %vm304, %v3334, 0
    %v3350 = vsel %vm304, %v3335, 0
    %3352 = vmatprep.subr.bf16.mxu0 0
    %3353 = vmatpush1.bf16.msra.mxu0 %v3341
    %3354 = vmatprep.subr.bf16.mxu0 0
    %3355 = vmatpush1.bf16.msra.mxu0 %v3343
    %3356 = vmatprep.subr.bf16.mxu0 0
    %3357 = vmatpush1.bf16.msra.mxu0 0
    %3358 = vmatprep.subr.bf16.mxu0 0
    %3359 = vmatpush1.bf16.msra.mxu0 0
    %3360 = vmatprep.subr.bf16.mxu0 0
    %3361 = vmatpush1.bf16.msra.mxu0 0
    %3362 = vmatprep.subr.bf16.mxu0 0
    %3363 = vmatpush1.bf16.msra.mxu0 0
    %3364 = vmatprep.subr.bf16.mxu0 0
    %3365 = vmatpush1.bf16.msra.mxu0 0
    %3366 = vmatprep.subr.bf16.mxu0 0
    %3367 = vmatpush1.bf16.msra.mxu0 0
    %3368 = vmatprep.subr.bf16.mxu0 0
    %3369 = vmatpush1.bf16.msra.mxu0 0
    %3370 = vmatprep.subr.bf16.mxu0 0
    %3371 = vmatpush1.bf16.msra.mxu0 0
    %3372 = vmatprep.subr.bf16.mxu0 0
    %3373 = vmatpush1.bf16.msra.mxu0 0
    %3374 = vmatprep.subr.bf16.mxu0 0
    %3375 = vmatpush1.bf16.msra.mxu0 0
    %3376 = vmatprep.subr.bf16.mxu0 0
    %3377 = vmatpush1.bf16.msra.mxu0 0
    %3378 = vmatprep.subr.bf16.mxu0 0
    %3379 = vmatpush1.bf16.msra.mxu0 0
    %3380 = vmatprep.subr.bf16.mxu0 0
    %3381 = vmatpush1.bf16.msra.mxu0 0
    %3382 = vmatprep.subr.bf16.mxu0 0
    %3383 = vmatpush1.bf16.msra.mxu0 0
    %3384 = vmatprep.mubr.bf16.mxu0 0
    %3385 = vmatmul.mubr.bf16.gmra.mrb[0].mxu0 %v3347
    %v3386 = vpop.f32.mrb[0].mxu0
    %v3387 = vadd.f32 %v3339, %v3386
    %v3388 = vpop.f32.mrb[0].mxu0
    %v3389 = vpop.f32.mrb[0].mxu0
    %v3390 = vadd.f32 %v3339, %v3389
    %v3391 = vpop.f32.mrb[0].mxu0
    %3392 = vmatprep.mubr.bf16.mxu0 0
    %3393 = vmatmul.mubr.bf16.gmra.mrb[0].mxu0 %v3350
    %v3394 = vpop.f32.mrb[0].mxu0
    %v3395 = vadd.f32 %v3339, %v3394
    %v3396 = vpop.f32.mrb[0].mxu0
    %v3397 = vpop.f32.mrb[0].mxu0
    %v3398 = vadd.f32 %v3339, %v3397
    %v3399 = vpop.f32.mrb[0].mxu0
    %3400 = vdwg.mxu0
    %v3401 = vadd.f32 %v2697, %v3387
    %v3402 = vadd.f32 %v2698, %v3390
    %v3403 = vadd.f32 %v2699, %v3395
    %v3404 = vadd.f32 %v2700, %v3398
    %v3405 = vld [vmem:[%s4 + $0x30] sm:$0x1]
    %v3406 = vld [vmem:[%s4 + $0x31] sm:$0x1]
    %v3407 = vsel %vm304, %v3401, 0.0
    %3408 = vadd.xlane.f32.xlu0 %v3407
    %v3409 = vpop.xlane.xlu0 %3408
    %v3410 = vsel %vm304, %v3402, 0.0
    %3411 = vadd.xlane.f32.xlu0 %v3410
    %v3412 = vpop.xlane.xlu0 %3411
    %v3413 = vsel %vm304, %v3403, 0.0
    %3414 = vadd.xlane.f32.xlu0 %v3413
    %v3415 = vpop.xlane.xlu0 %3414
    %v3416 = vsel %vm304, %v3404, 0.0
    %3417 = vadd.xlane.f32.xlu0 %v3416
    %v3418 = vpop.xlane.xlu0 %3417
    %v3419 = vmul.f32 %v3409, %v317
    %v3420 = vmul.f32 %v3412, %v317
    %v3421 = vmul.f32 %v3415, %v317
    %v3422 = vmul.f32 %v3418, %v317
    %v3423 = vsub.f32 %v3401, %v3419
    %v3424 = vsub.f32 %v3402, %v3420
    %v3425 = vsub.f32 %v3403, %v3421
    %v3426 = vsub.f32 %v3404, %v3422
    %v3427 = vmul.f32 %v3423, %v3423
    %v3428 = vmul.f32 %v3424, %v3424
    %v3429 = vmul.f32 %v3425, %v3425
    %v3430 = vmul.f32 %v3426, %v3426
    %v3431 = vsel %vm304, %v3427, 0.0
    %3432 = vadd.xlane.f32.xlu0 %v3431
    %v3433 = vpop.xlane.xlu0 %3432
    %v3434 = vsel %vm304, %v3428, 0.0
    %3435 = vadd.xlane.f32.xlu0 %v3434
    %v3436 = vpop.xlane.xlu0 %3435
    %v3437 = vsel %vm304, %v3429, 0.0
    %3438 = vadd.xlane.f32.xlu0 %v3437
    %v3439 = vpop.xlane.xlu0 %3438
    %v3440 = vsel %vm304, %v3430, 0.0
    %3441 = vadd.xlane.f32.xlu0 %v3440
    %v3442 = vpop.xlane.xlu0 %3441
    %v3443 = vmul.f32 %v3433, %v317
    %v3444 = vmul.f32 %v3436, %v317
    %v3445 = vmul.f32 %v3439, %v317
    %v3446 = vmul.f32 %v3442, %v317
    %v3447 = vadd.f32 %v3443, 1e-05
    %v3448 = vadd.f32 %v3444, 1e-05
    %v3449 = vadd.f32 %v3445, 1e-05
    %v3450 = vadd.f32 %v3446, 1e-05
    %v3451 = vrsqrt.pop %v3447
    %v3452 = vrsqrt.pop %v3448
    %v3453 = vrsqrt.pop %v3449
    %v3454 = vrsqrt.pop %v3450
    %v3455 = vmul.f32 %v3423, %v3451
    %v3456 = vmul.f32 %v3424, %v3452
    %v3457 = vmul.f32 %v3425, %v3453
    %v3458 = vmul.f32 %v3426, %v3454
    %v3459 = vlaneseq
    %v3460 = vshrl.u32 %v3459, 7
    %v3461 = vsub.s32 0, %v3460
    %v3462 = vrot.slane %v3405, %v3461
    %v3463 = vmul.f32 %v3455, %v3462
    %v3464 = vmul.f32 %v3456, %v3462
    %v3465 = vmul.f32 %v3457, %v3462
    %v3466 = vmul.f32 %v3458, %v3462
    %v3467 = vlaneseq
    %v3468 = vshrl.u32 %v3467, 7
    %v3469 = vsub.s32 0, %v3468
    %v3470 = vrot.slane %v3406, %v3469
    %v3471 = vadd.f32 %v3463, %v3470
    %v3472 = vadd.f32 %v3464, %v3470
    %v3473 = vadd.f32 %v3465, %v3470
    %v3474 = vadd.f32 %v3466, %v3470
    %v3475 = vld [vmem:[%s1 + $0x28] sm:$0xff]
    %v3476 = vld [vmem:[%s1 + $0x60] sm:$0xff]
    %v3477 = vld [vmem:[%s1 + $0x98] sm:$0xff]
    %v3478 = vld [vmem:[%s1 + $0xd0] sm:$0xff]
    %v3479 = vpack.c.bf16 %v3472, %v3471
    %v3480 = vpack.c.bf16 %v3474, %v3473
    %v3481 = vpack.c.bf16 %v3476, %v3475
    %v3482 = vpack.c.bf16 %v3478, %v3477
    %v3483 = vld [vmem:[%s4 + $0x2a] sm:$0x1]
    %v3484 = vlaneseq
    %v3485 = vshrl.u32 %v3484, 7
    %v3486 = vsub.s32 0, %v3485
    %v3487 = vrot.slane %v3483, %v3486
    %v3489 = vsel %vm304, %v3479, 0
    %v3492 = vsel %vm304, %v3480, 0
    %3494 = vmatprep.subr.bf16.mxu0 0
    %3495 = vmatpush1.bf16.msra.mxu0 %v3481
    %3496 = vmatprep.subr.bf16.mxu0 0
    %3497 = vmatpush1.bf16.msra.mxu0 %v3482
    %3498 = vmatprep.subr.bf16.mxu0 0
    %3499 = vmatpush1.bf16.msra.mxu0 0
    %3500 = vmatprep.subr.bf16.mxu0 0
    %3501 = vmatpush1.bf16.msra.mxu0 0
    %3502 = vmatprep.subr.bf16.mxu0 0
    %3503 = vmatpush1.bf16.msra.mxu0 0
    %3504 = vmatprep.subr.bf16.mxu0 0
    %3505 = vmatpush1.bf16.msra.mxu0 0
    %3506 = vmatprep.subr.bf16.mxu0 0
    %3507 = vmatpush1.bf16.msra.mxu0 0
    %3508 = vmatprep.subr.bf16.mxu0 0
    %3509 = vmatpush1.bf16.msra.mxu0 0
    %3510 = vmatprep.subr.bf16.mxu0 0
    %3511 = vmatpush1.bf16.msra.mxu0 0
    %3512 = vmatprep.subr.bf16.mxu0 0
    %3513 = vmatpush1.bf16.msra.mxu0 0
    %3514 = vmatprep.subr.bf16.mxu0 0
    %3515 = vmatpush1.bf16.msra.mxu0 0
    %3516 = vmatprep.subr.bf16.mxu0 0
    %3517 = vmatpush1.bf16.msra.mxu0 0
    %3518 = vmatprep.subr.bf16.mxu0 0
    %3519 = vmatpush1.bf16.msra.mxu0 0
    %3520 = vmatprep.subr.bf16.mxu0 0
    %3521 = vmatpush1.bf16.msra.mxu0 0
    %3522 = vmatprep.subr.bf16.mxu0 0
    %3523 = vmatpush1.bf16.msra.mxu0 0
    %3524 = vmatprep.subr.bf16.mxu0 0
    %3525 = vmatpush1.bf16.msra.mxu0 0
    %3526 = vmatprep.mubr.bf16.mxu0 0
    %3527 = vmatmul.mubr.bf16.gmra.mrb[0].mxu0 %v3489
    %v3528 = vpop.f32.mrb[0].mxu0
    %v3529 = vadd.f32 %v3487, %v3528
    %v3530 = vpop.f32.mrb[0].mxu0
    %v3531 = vpop.f32.mrb[0].mxu0
    %v3532 = vadd.f32 %v3487, %v3531
    %v3533 = vpop.f32.mrb[0].mxu0
    %3534 = vmatprep.mubr.bf16.mxu0 0
    %3535 = vmatmul.mubr.bf16.gmra.mrb[0].mxu0 %v3492
    %v3536 = vpop.f32.mrb[0].mxu0
    %v3537 = vadd.f32 %v3487, %v3536
    %v3538 = vpop.f32.mrb[0].mxu0
    %v3539 = vpop.f32.mrb[0].mxu0
    %v3540 = vadd.f32 %v3487, %v3539
    %v3541 = vpop.f32.mrb[0].mxu0
    %3542 = vdwg.mxu0
    %v3543 = vmax.f32 %v3529, 0.0
    %v3544 = vmax.f32 %v3532, 0.0
    %v3545 = vmax.f32 %v3537, 0.0
    %v3546 = vmax.f32 %v3540, 0.0
    %v3547 = vld [vmem:[%s3] sm:$0xff]
    %v3548 = vld [vmem:[%s3 + $0x8] sm:$0xff]
    %v3549 = vld [vmem:[%s3 + $0x10] sm:$0xff]
    %v3550 = vld [vmem:[%s3 + $0x18] sm:$0xff]
    %v3551 = vld [vmem:[%s3 + $0x20] sm:$0xff]
    %v3552 = vld [vmem:[%s3 + $0x28] sm:$0xff]
    %v3553 = vld [vmem:[%s3 + $0x30] sm:$0xff]
    %v3554 = vld [vmem:[%s3 + $0x38] sm:$0xff]
    %v3555 = vld [vmem:[%s3 + $0x40] sm:$0xff]
    %v3556 = vld [vmem:[%s3 + $0x48] sm:$0xff]
    %v3557 = vld [vmem:[%s3 + $0x50] sm:$0xff]
    %v3558 = vld [vmem:[%s3 + $0x58] sm:$0xff]
    %v3559 = vld [vmem:[%s3 + $0x60] sm:$0xff]
    %v3560 = vld [vmem:[%s3 + $0x68] sm:$0xff]
    %v3561 = vld [vmem:[%s3 + $0x70] sm:$0xff]
    %v3562 = vld [vmem:[%s3 + $0x78] sm:$0xff]
    %v3563 = vpack.c.bf16 %v3544, %v3543
    %v3564 = vpack.c.bf16 %v3546, %v3545
    %v3565 = vpack.c.bf16 %v3548, %v3547
    %v3566 = vpack.c.bf16 %v3550, %v3549
    %v3567 = vpack.c.bf16 %v3552, %v3551
    %v3568 = vpack.c.bf16 %v3554, %v3553
    %v3569 = vpack.c.bf16 %v3556, %v3555
    %v3570 = vpack.c.bf16 %v3558, %v3557
    %v3571 = vpack.c.bf16 %v3560, %v3559
    %v3572 = vpack.c.bf16 %v3562, %v3561
    %v3573 = vld [vmem:[%s4 + $0x2b] sm:$0x1]
    %v3574 = vlaneseq
    %v3575 = vshrl.u32 %v3574, 7
    %v3576 = vsub.s32 0, %v3575
    %v3577 = vrot.slane %v3573, %v3576
    %3586 = vrot.lane.b32.xlu0 %v3565, 64
    %v3587 = vpop.permute.xlu0 %3586
    %3588 = vrot.lane.b32.xlu0 %v3566, 64
    %v3589 = vpop.permute.xlu0 %3588
    %3590 = vrot.lane.b32.xlu0 %v3567, 64
    %v3591 = vpop.permute.xlu0 %3590
    %3592 = vrot.lane.b32.xlu0 %v3568, 64
    %v3593 = vpop.permute.xlu0 %3592
    %3594 = vrot.lane.b32.xlu0 %v3569, 64
    %v3595 = vpop.permute.xlu0 %3594
    %3596 = vrot.lane.b32.xlu0 %v3570, 64
    %v3597 = vpop.permute.xlu0 %3596
    %3598 = vrot.lane.b32.xlu0 %v3571, 64
    %v3599 = vpop.permute.xlu0 %3598
    %3600 = vrot.lane.b32.xlu0 %v3572, 64
    %v3601 = vpop.permute.xlu0 %3600
    %3610 = vmatprep.subr.bf16.mxu0 0
    %3611 = vmatpush1.bf16.msra.mxu0 %v3587
    %3612 = vmatprep.subr.bf16.mxu0 0
    %3613 = vmatpush1.bf16.msra.mxu0 %v3589
    %3614 = vmatprep.subr.bf16.mxu0 0
    %3615 = vmatpush1.bf16.msra.mxu0 %v3591
    %3616 = vmatprep.subr.bf16.mxu0 0
    %3617 = vmatpush1.bf16.msra.mxu0 %v3593
    %3618 = vmatprep.subr.bf16.mxu0 0
    %3619 = vmatpush1.bf16.msra.mxu0 %v3595
    %3620 = vmatprep.subr.bf16.mxu0 0
    %3621 = vmatpush1.bf16.msra.mxu0 %v3597
    %3622 = vmatprep.subr.bf16.mxu0 0
    %3623 = vmatpush1.bf16.msra.mxu0 %v3599
    %3624 = vmatprep.subr.bf16.mxu0 0
    %3625 = vmatpush1.bf16.msra.mxu0 %v3601
    %3626 = vmatprep.subr.bf16.mxu0 0
    %3627 = vmatpush1.bf16.msra.mxu0 0
    %3628 = vmatprep.subr.bf16.mxu0 0
    %3629 = vmatpush1.bf16.msra.mxu0 0
    %3630 = vmatprep.subr.bf16.mxu0 0
    %3631 = vmatpush1.bf16.msra.mxu0 0
    %3632 = vmatprep.subr.bf16.mxu0 0
    %3633 = vmatpush1.bf16.msra.mxu0 0
    %3634 = vmatprep.subr.bf16.mxu0 0
    %3635 = vmatpush1.bf16.msra.mxu0 0
    %3636 = vmatprep.subr.bf16.mxu0 0
    %3637 = vmatpush1.bf16.msra.mxu0 0
    %3638 = vmatprep.subr.bf16.mxu0 0
    %3639 = vmatpush1.bf16.msra.mxu0 0
    %3640 = vmatprep.subr.bf16.mxu0 0
    %3641 = vmatpush1.bf16.msra.mxu0 0
    %3642 = vmatprep.mubr.bf16.mxu0 0
    %3643 = vmatmul.mubr.bf16.gmra.mrb[0].mxu0 %v3563
    %v3644 = vpop.f32.mrb[0].mxu0
    %v3645 = vadd.f32 %v3577, %v3644
    %v3646 = vpop.f32.mrb[0].mxu0
    %v3647 = vpop.f32.mrb[0].mxu0
    %v3648 = vadd.f32 %v3577, %v3647
    %v3649 = vpop.f32.mrb[0].mxu0
    %3650 = vmatprep.mubr.bf16.mxu0 0
    %3651 = vmatmul.mubr.bf16.gmra.mrb[0].mxu0 %v3564
    %v3652 = vpop.f32.mrb[0].mxu0
    %v3653 = vadd.f32 %v3577, %v3652
    %v3654 = vpop.f32.mrb[0].mxu0
    %v3655 = vpop.f32.mrb[0].mxu0
    %v3656 = vadd.f32 %v3577, %v3655
    %v3657 = vpop.f32.mrb[0].mxu0
    %3658 = vdwg.mxu0
    %v3659 = vadd.f32 %v3401, %v3645
    %v3660 = vadd.f32 %v3402, %v3648
    %v3661 = vadd.f32 %v3403, %v3653
    %v3662 = vadd.f32 %v3404, %v3656
    %v3663 = vld [vmem:[%s4 + $0x32] sm:$0x1]
    %v3664 = vld [vmem:[%s4 + $0x33] sm:$0x1]
    %v3665 = vsel %vm304, %v3659, 0.0
    %3666 = vadd.xlane.f32.xlu0 %v3665
    %v3667 = vpop.xlane.xlu0 %3666
    %v3668 = vsel %vm304, %v3660, 0.0
    %3669 = vadd.xlane.f32.xlu0 %v3668
    %v3670 = vpop.xlane.xlu0 %3669
    %v3671 = vsel %vm304, %v3661, 0.0
    %3672 = vadd.xlane.f32.xlu0 %v3671
    %v3673 = vpop.xlane.xlu0 %3672
    %v3674 = vsel %vm304, %v3662, 0.0
    %3675 = vadd.xlane.f32.xlu0 %v3674
    %v3676 = vpop.xlane.xlu0 %3675
    %v3677 = vmul.f32 %v3667, %v317
    %v3678 = vmul.f32 %v3670, %v317
    %v3679 = vmul.f32 %v3673, %v317
    %v3680 = vmul.f32 %v3676, %v317
    %v3681 = vsub.f32 %v3659, %v3677
    %v3682 = vsub.f32 %v3660, %v3678
    %v3683 = vsub.f32 %v3661, %v3679
    %v3684 = vsub.f32 %v3662, %v3680
    %v3685 = vmul.f32 %v3681, %v3681
    %v3686 = vmul.f32 %v3682, %v3682
    %v3687 = vmul.f32 %v3683, %v3683
    %v3688 = vmul.f32 %v3684, %v3684
    %v3689 = vsel %vm304, %v3685, 0.0
    %3690 = vadd.xlane.f32.xlu0 %v3689
    %v3691 = vpop.xlane.xlu0 %3690
    %v3692 = vsel %vm304, %v3686, 0.0
    %3693 = vadd.xlane.f32.xlu0 %v3692
    %v3694 = vpop.xlane.xlu0 %3693
    %v3695 = vsel %vm304, %v3687, 0.0
    %3696 = vadd.xlane.f32.xlu0 %v3695
    %v3697 = vpop.xlane.xlu0 %3696
    %v3698 = vsel %vm304, %v3688, 0.0
    %3699 = vadd.xlane.f32.xlu0 %v3698
    %v3700 = vpop.xlane.xlu0 %3699
    %v3701 = vmul.f32 %v3691, %v317
    %v3702 = vmul.f32 %v3694, %v317
    %v3703 = vmul.f32 %v3697, %v317
    %v3704 = vmul.f32 %v3700, %v317
    %v3705 = vadd.f32 %v3701, 1e-05
    %v3706 = vadd.f32 %v3702, 1e-05
    %v3707 = vadd.f32 %v3703, 1e-05
    %v3708 = vadd.f32 %v3704, 1e-05
    %v3709 = vrsqrt.pop %v3705
    %v3710 = vrsqrt.pop %v3706
    %v3711 = vrsqrt.pop %v3707
    %v3712 = vrsqrt.pop %v3708
    %v3713 = vmul.f32 %v3681, %v3709
    %v3714 = vmul.f32 %v3682, %v3710
    %v3715 = vmul.f32 %v3683, %v3711
    %v3716 = vmul.f32 %v3684, %v3712
    %v3717 = vlaneseq
    %v3718 = vshrl.u32 %v3717, 7
    %v3719 = vsub.s32 0, %v3718
    %v3720 = vrot.slane %v3663, %v3719
    %v3721 = vmul.f32 %v3713, %v3720
    %v3722 = vmul.f32 %v3714, %v3720
    %v3723 = vmul.f32 %v3715, %v3720
    %v3724 = vmul.f32 %v3716, %v3720
    %v3725 = vlaneseq
    %v3726 = vshrl.u32 %v3725, 7
    %v3727 = vsub.s32 0, %v3726
    %v3728 = vrot.slane %v3664, %v3727
    %v3729 = vadd.f32 %v3721, %v3728
    %v3730 = vadd.f32 %v3722, %v3728
    %v3731 = vadd.f32 %v3723, %v3728
    %v3732 = vadd.f32 %v3724, %v3728
    %v3733 = vld [vmem:[%s1 + $0x30] sm:$0xff]
    %v3734 = vld [vmem:[%s1 + $0x68] sm:$0xff]
    %v3735 = vld [vmem:[%s1 + $0xa0] sm:$0xff]
    %v3736 = vld [vmem:[%s1 + $0xd8] sm:$0xff]
    %v3737 = vpack.c.bf16 %v3730, %v3729
    %v3738 = vpack.c.bf16 %v3732, %v3731
    %v3739 = vpack.c.bf16 %v3734, %v3733
    %v3740 = vpack.c.bf16 %v3736, %v3735
    %v3741 = vld [vmem:[%s4 + $0x34] sm:$0x1]
    %v3742 = vlaneseq
    %v3743 = vshrl.u32 %v3742, 7
    %v3744 = vsub.s32 0, %v3743
    %v3745 = vrot.slane %v3741, %v3744
    %v3747 = vsel %vm304, %v3737, 0
    %v3750 = vsel %vm304, %v3738, 0
    %3752 = vmatprep.subr.bf16.mxu0 0
    %3753 = vmatpush1.bf16.msra.mxu0 %v3739
    %3754 = vmatprep.subr.bf16.mxu0 0
    %3755 = vmatpush1.bf16.msra.mxu0 %v3740
    %3756 = vmatprep.subr.bf16.mxu0 0
    %3757 = vmatpush1.bf16.msra.mxu0 0
    %3758 = vmatprep.subr.bf16.mxu0 0
    %3759 = vmatpush1.bf16.msra.mxu0 0
    %3760 = vmatprep.subr.bf16.mxu0 0
    %3761 = vmatpush1.bf16.msra.mxu0 0
    %3762 = vmatprep.subr.bf16.mxu0 0
    %3763 = vmatpush1.bf16.msra.mxu0 0
    %3764 = vmatprep.subr.bf16.mxu0 0
    %3765 = vmatpush1.bf16.msra.mxu0 0
    %3766 = vmatprep.subr.bf16.mxu0 0
    %3767 = vmatpush1.bf16.msra.mxu0 0
    %3768 = vmatprep.subr.bf16.mxu0 0
    %3769 = vmatpush1.bf16.msra.mxu0 0
    %3770 = vmatprep.subr.bf16.mxu0 0
    %3771 = vmatpush1.bf16.msra.mxu0 0
    %3772 = vmatprep.subr.bf16.mxu0 0
    %3773 = vmatpush1.bf16.msra.mxu0 0
    %3774 = vmatprep.subr.bf16.mxu0 0
    %3775 = vmatpush1.bf16.msra.mxu0 0
    %3776 = vmatprep.subr.bf16.mxu0 0
    %3777 = vmatpush1.bf16.msra.mxu0 0
    %3778 = vmatprep.subr.bf16.mxu0 0
    %3779 = vmatpush1.bf16.msra.mxu0 0
    %3780 = vmatprep.subr.bf16.mxu0 0
    %3781 = vmatpush1.bf16.msra.mxu0 0
    %3782 = vmatprep.subr.bf16.mxu0 0
    %3783 = vmatpush1.bf16.msra.mxu0 0
    %3784 = vmatprep.mubr.bf16.mxu0 0
    %3785 = vmatmul.mubr.bf16.gmra.mrb[0].mxu0 %v3747
    %v3786 = vpop.f32.mrb[0].mxu0
    %v3787 = vadd.f32 %v3745, %v3786
    %v3788 = vpop.f32.mrb[0].mxu0
    %v3789 = vpop.f32.mrb[0].mxu0
    %v3790 = vadd.f32 %v3745, %v3789
    %v3791 = vpop.f32.mrb[0].mxu0
    %3792 = vmatprep.mubr.bf16.mxu0 0
    %3793 = vmatmul.mubr.bf16.gmra.mrb[0].mxu0 %v3750
    %v3794 = vpop.f32.mrb[0].mxu0
    %v3795 = vadd.f32 %v3745, %v3794
    %v3796 = vpop.f32.mrb[0].mxu0
    %v3797 = vpop.f32.mrb[0].mxu0
    %v3798 = vadd.f32 %v3745, %v3797
    %v3799 = vpop.f32.mrb[0].mxu0
    %3800 = vdwg.mxu0
    %v3801 = vmax.f32 %v3787, 0.0
    %v3802 = vmax.f32 %v3790, 0.0
    %v3803 = vmax.f32 %v3795, 0.0
    %v3804 = vmax.f32 %v3798, 0.0
    %v3805 = vld [vmem:[#allocation2 + $0x8] sm:$0xff]
    %v3806 = vld [vmem:[#allocation2 + $0x18] sm:$0xff]
    %v3807 = vld [vmem:[#allocation2 + $0x28] sm:$0xff]
    %v3808 = vld [vmem:[#allocation2 + $0x38] sm:$0xff]
    %v3809 = vld [vmem:[#allocation2 + $0x48] sm:$0xff]
    %v3810 = vld [vmem:[#allocation2 + $0x58] sm:$0xff]
    %v3811 = vld [vmem:[#allocation2 + $0x68] sm:$0xff]
    %v3812 = vld [vmem:[#allocation2 + $0x78] sm:$0xff]
    %v3813 = vpack.c.bf16 %v3802, %v3801
    %v3814 = vpack.c.bf16 %v3804, %v3803
    %v3815 = vpack.c.bf16 %v3806, %v3805
    %v3816 = vpack.c.bf16 %v3808, %v3807
    %v3817 = vpack.c.bf16 %v3810, %v3809
    %v3818 = vpack.c.bf16 %v3812, %v3811
    %v3819 = vld [vmem:[%s4 + $0x35] sm:$0x1]
    %v3820 = vlaneseq
    %v3821 = vshrl.u32 %v3820, 7
    %v3822 = vsub.s32 0, %v3821
    %v3823 = vrot.slane %v3819, %v3822
    %v3825 = vsel %vm156, %v3813, 0
    %v3828 = vsel %vm156, %v3814, 0
    %3830 = vmatprep.subr.bf16.mxu0 0
    %3831 = vmatpush1.bf16.msra.mxu0 %v3815
    %3832 = vmatprep.subr.bf16.mxu0 0
    %3833 = vmatpush1.bf16.msra.mxu0 %v3816
    %3834 = vmatprep.subr.bf16.mxu0 0
    %3835 = vmatpush1.bf16.msra.mxu0 %v3817
    %3836 = vmatprep.subr.bf16.mxu0 0
    %3837 = vmatpush1.bf16.msra.mxu0 %v3818
    %3838 = vmatprep.subr.bf16.mxu0 0
    %3839 = vmatpush1.bf16.msra.mxu0 0
    %3840 = vmatprep.subr.bf16.mxu0 0
    %3841 = vmatpush1.bf16.msra.mxu0 0
    %3842 = vmatprep.subr.bf16.mxu0 0
    %3843 = vmatpush1.bf16.msra.mxu0 0
    %3844 = vmatprep.subr.bf16.mxu0 0
    %3845 = vmatpush1.bf16.msra.mxu0 0
    %3846 = vmatprep.subr.bf16.mxu0 0
    %3847 = vmatpush1.bf16.msra.mxu0 0
    %3848 = vmatprep.subr.bf16.mxu0 0
    %3849 = vmatpush1.bf16.msra.mxu0 0
    %3850 = vmatprep.subr.bf16.mxu0 0
    %3851 = vmatpush1.bf16.msra.mxu0 0
    %3852 = vmatprep.subr.bf16.mxu0 0
    %3853 = vmatpush1.bf16.msra.mxu0 0
    %3854 = vmatprep.subr.bf16.mxu0 0
    %3855 = vmatpush1.bf16.msra.mxu0 0
    %3856 = vmatprep.subr.bf16.mxu0 0
    %3857 = vmatpush1.bf16.msra.mxu0 0
    %3858 = vmatprep.subr.bf16.mxu0 0
    %3859 = vmatpush1.bf16.msra.mxu0 0
    %3860 = vmatprep.subr.bf16.mxu0 0
    %3861 = vmatpush1.bf16.msra.mxu0 0
    %3862 = vmatprep.mubr.bf16.mxu0 0
    %3863 = vmatmul.mubr.bf16.gmra.mrb[0].mxu0 %v3825
    %v3864 = vpop.f32.mrb[0].mxu0
    %v3865 = vadd.f32 %v3823, %v3864
    %v3866 = vpop.f32.mrb[0].mxu0
    %v3867 = vpop.f32.mrb[0].mxu0
    %v3868 = vadd.f32 %v3823, %v3867
    %v3869 = vpop.f32.mrb[0].mxu0
    %3870 = vmatprep.mubr.bf16.mxu0 0
    %3871 = vmatmul.mubr.bf16.gmra.mrb[0].mxu0 %v3828
    %v3872 = vpop.f32.mrb[0].mxu0
    %v3873 = vadd.f32 %v3823, %v3872
    %v3874 = vpop.f32.mrb[0].mxu0
    %v3875 = vpop.f32.mrb[0].mxu0
    %v3876 = vadd.f32 %v3823, %v3875
    %v3877 = vpop.f32.mrb[0].mxu0
    %3878 = vdwg.mxu0
    %3879 = vst.msk [vmem:[%s5] sm:$0xff] %vm70, %v3865
    %3880 = vst.msk [vmem:[%s5 + $0x8] sm:$0xff] %vm70, %v3868
    %3881 = vst.msk [vmem:[%s5 + $0x10] sm:$0xff] %vm70, %v3873
    %3882 = vst.msk [vmem:[%s5 + $0x18] sm:$0xff] %vm70, %v3876
    // Predicated region
    $region26: #{point_denoising_forward.1} parent=1 // pred_check
      _
    $region27: #{point_denoising_forward.1} parent=1 // pred_check_branch
      %3884 = sbr.rel (0) target = $region29
    $region28: #{point_denoising_forward.1} parent=1 // pred_region
      _
    $region29: #{point_denoising_forward.1} parent=1 // pred_fallthru
      _
    // Predicated region
    $region30: #{point_denoising_forward.1} parent=1 // pred_check
      _
    $region31: #{point_denoising_forward.1} parent=1 // pred_check_branch
      %3886 = sbr.rel (0) target = $region33
    $region32: #{point_denoising_forward.1} parent=1 // pred_region
      _
    $region33: #{point_denoising_forward.1} parent=1 // pred_fallthru
      _
    %3887 = vsyncpa [#allocation3], 1

</llo_original>
